<compile_context>
chip_gen: v7x
topology: tpu7x:2x2x1
jax: 0.10.0
libtpu: 0.0.40
codegen_flags: <defaults>
</compile_context>

<pallas_src>
import jax
import jax.numpy as jnp
from jax.experimental import pallas as pl


# ----------------------------- config -------------------------------------
BATCH = 2
SEQ = 8
HIDDEN = 32
NUM_HEADS = 2
HEAD_DIM = HIDDEN // NUM_HEADS
INTERMEDIATE = 64
NUM_LAYERS = 2
VOCAB = 100
TYPE_VOCAB = 2
MAX_POS = 16
PREDICTED_SIZE = 4
LN_EPS = 1e-12            # BERT default

VOCAB_PAD = 128           # lane-width one-hot for word ids
TYPE_PAD = 8              # sublane-padded token-type table
OUT_LANES = 128           # lane-padded classifier output columns

F32 = jnp.float32
BF16 = jnp.bfloat16


# ----------------------------- in-kernel helpers ---------------------------
def _layernorm(x, g, b):
    mu = jnp.mean(x, axis=-1, keepdims=True)
    var = jnp.mean((x - mu) * (x - mu), axis=-1, keepdims=True)
    return (x - mu) * jax.lax.rsqrt(var + LN_EPS) * g + b


def _gelu_tanh(x):
    # TODO(synk): HF BERT uses exact erf GELU; tanh approximation differs slightly.
    c = jnp.float32(0.7978845608028654)  # sqrt(2/pi)
    return 0.5 * x * (1.0 + jnp.tanh(c * (x + 0.044715 * x * x * x)))


def _mm(a, w):
    """bf16 MXU matmul with fp32 accumulation."""
    return jnp.dot(a.astype(BF16), w.astype(BF16), preferred_element_type=F32)


def _dot_nt(a, b):
    """a @ b.T without an explicit transpose (contract on last dims)."""
    return jax.lax.dot_general(a.astype(BF16), b.astype(BF16),
                               dimension_numbers=(((1,), (1,)), ((), ())),
                               preferred_element_type=F32)


# ----------------------------- fused kernel --------------------------------
def _bert_fused_kernel(ids_ref, tids_ref, mask_ref,
                       word_emb_ref, type_emb_ref, pos_emb_ref,
                       emb_g_ref, emb_b_ref,
                       wq_ref, bq_ref, wk_ref, bk_ref, wv_ref, bv_ref,
                       wo_ref, bo_ref,
                       ln1_g_ref, ln1_b_ref,
                       wff1_ref, bff1_ref, wff2_ref, bff2_ref,
                       ln2_g_ref, ln2_b_ref,
                       cls_w_ref, cls_b_ref, out_ref):
    rows = BATCH * SEQ

    # --- embeddings, fully in-kernel (one-hot gathers on the MXU) ---
    ids = ids_ref[...]                                          # (B*S, 1) int32
    tids = tids_ref[...]                                        # (B*S, 1) int32
    word_oh = (jax.lax.broadcasted_iota(jnp.int32, (rows, VOCAB_PAD), 1)
               == ids).astype(F32)                              # (B*S, 128)
    type_oh = (jax.lax.broadcasted_iota(jnp.int32, (rows, TYPE_PAD), 1)
               == tids).astype(F32)                             # (B*S, 8)
    emb = (jnp.dot(word_oh, word_emb_ref[...], preferred_element_type=F32)
           + jnp.dot(type_oh, type_emb_ref[...], preferred_element_type=F32)
           + pos_emb_ref[...])                                  # (B*S, H) f32
    h = _layernorm(emb, emb_g_ref[...], emb_b_ref[...])

    # HF-style additive attention-mask bias, computed once.
    mask_bias = (1.0 - mask_ref[...].astype(F32)) * -10000.0    # (B, S)

    # --- encoder layers (statically unrolled; weights are VMEM-resident) ---
    for l in range(NUM_LAYERS):
        # three separate (H,H) projections: each output starts at lane 0.
        # 1/sqrt(HEAD_DIM) is already folded into Wq/bq at init.
        q = _mm(h, wq_ref[l]) + bq_ref[l]                       # (B*S, H)
        k = _mm(h, wk_ref[l]) + bk_ref[l]
        v = _mm(h, wv_ref[l]) + bv_ref[l]
        wo_l = wo_ref[l]                                        # (H, H) bf16

        # attention with the output projection fused into the per-head loop
        attn_batches = []
        for b in range(BATCH):
            r0, r1 = b * SEQ, (b + 1) * SEQ
            bias_b = mask_bias[b:b + 1, :]                      # (1, S)
            acc_b = None
            for hd in range(NUM_HEADS):
                c0, c1 = hd * HEAD_DIM, (hd + 1) * HEAD_DIM
                q_bh = q[r0:r1, c0:c1]                          # (S, D)
                k_bh = k[r0:r1, c0:c1]
                v_bh = v[r0:r1, c0:c1]
                s = _dot_nt(q_bh, k_bh) + bias_b                # (S, S)
                s = s - jnp.max(s, axis=-1, keepdims=True)
                p = jnp.exp(s)
                p = p * pl.reciprocal(jnp.sum(p, axis=-1, keepdims=True),
                                      approx=True)
                ctx_h = _mm(p, v_bh)                            # (S, D)
                # Wo row slice is a clean sublane slice (multiple of 8).
                o_h = _mm(ctx_h, wo_l[c0:c1, :])                # (S, H)
                acc_b = o_h if acc_b is None else acc_b + o_h
            attn_batches.append(acc_b)                          # (S, H)
        attn_out = jnp.concatenate(attn_batches, axis=0) + bo_ref[l]  # (B*S, H)
        h = _layernorm(h + attn_out, ln1_g_ref[l], ln1_b_ref[l])

        # fused FF1 -> GELU -> FF2
        ff = _gelu_tanh(_mm(h, wff1_ref[l]) + bff1_ref[l])
        ff = _mm(ff, wff2_ref[l]) + bff2_ref[l]
        h = _layernorm(h + ff, ln2_g_ref[l], ln2_b_ref[l])

    # --- classifier head on the full hidden slab (lane-dense output) ---
    # One MXU pass over all rows; the wrapper strided-slices out the CLS rows.
    logits = _mm(h, cls_w_ref[...]) + cls_b_ref[...]            # (B*S, 128)

    # Dropout(p=0.2) is identity at inference (module eval mode).
    # TODO(synk): add pltpu.prng_random_bits-based inverted dropout for training.
    out_ref[...] = logits.astype(out_ref.dtype)


# ----------------------------- parameters ----------------------------------
def init_params(key):
    def normal(k, shape, std=0.02):
        return std * jax.random.normal(k, shape, dtype=F32)

    keys = iter(jax.random.split(key, 4 + NUM_LAYERS * 6))

    word_emb = normal(next(keys), (VOCAB, HIDDEN))
    pos_emb = normal(next(keys), (MAX_POS, HIDDEN))
    type_emb = normal(next(keys), (TYPE_VOCAB, HIDDEN))

    word_emb_pad = jnp.zeros((VOCAB_PAD, HIDDEN), F32).at[:VOCAB].set(word_emb)
    type_emb_pad = jnp.zeros((TYPE_PAD, HIDDEN), F32).at[:TYPE_VOCAB].set(type_emb)
    pos_emb_bs = jnp.tile(pos_emb[:SEQ], (BATCH, 1))            # (B*S, H), static

    p = {
        "word_emb_pad": word_emb_pad,
        "type_emb_pad": type_emb_pad,
        "pos_emb_bs": pos_emb_bs,
        "emb_ln_g": jnp.ones((1, HIDDEN), F32),
        "emb_ln_b": jnp.zeros((1, HIDDEN), F32),
    }

    scale = 1.0 / (HEAD_DIM ** 0.5)
    wq, bq, wk, bk, wv, bv = [], [], [], [], [], []
    wo, bo, ln1g, ln1b = [], [], [], []
    wff1, bff1, wff2, bff2, ln2g, ln2b = [], [], [], [], [], []
    for _ in range(NUM_LAYERS):
        # fold the attention scale into Wq (and bq) once at init.
        wq.append(normal(next(keys), (HIDDEN, HIDDEN)) * scale)
        bq.append(jnp.zeros((1, HIDDEN), F32) * scale)
        wk.append(normal(next(keys), (HIDDEN, HIDDEN)))
        bk.append(jnp.zeros((1, HIDDEN), F32))
        wv.append(normal(next(keys), (HIDDEN, HIDDEN)))
        bv.append(jnp.zeros((1, HIDDEN), F32))
        wo.append(normal(next(keys), (HIDDEN, HIDDEN)))
        bo.append(jnp.zeros((1, HIDDEN), F32))
        ln1g.append(jnp.ones((1, HIDDEN), F32))
        ln1b.append(jnp.zeros((1, HIDDEN), F32))
        wff1.append(normal(next(keys), (HIDDEN, INTERMEDIATE)))
        bff1.append(jnp.zeros((1, INTERMEDIATE), F32))
        wff2.append(normal(next(keys), (INTERMEDIATE, HIDDEN)))
        bff2.append(jnp.zeros((1, HIDDEN), F32))
        ln2g.append(jnp.ones((1, HIDDEN), F32))
        ln2b.append(jnp.zeros((1, HIDDEN), F32))

    cls_w = normal(next(keys), (HIDDEN, PREDICTED_SIZE))
    cls_b = jnp.zeros((PREDICTED_SIZE,), F32)
    cls_w_pad = jnp.zeros((HIDDEN, OUT_LANES), F32).at[:, :PREDICTED_SIZE].set(cls_w)
    cls_b_pad = jnp.zeros((1, OUT_LANES), F32).at[0, :PREDICTED_SIZE].set(cls_b)

    p.update({
        "wq": jnp.stack(wq).astype(BF16), "bq": jnp.stack(bq),
        "wk": jnp.stack(wk).astype(BF16), "bk": jnp.stack(bk),
        "wv": jnp.stack(wv).astype(BF16), "bv": jnp.stack(bv),
        "wo": jnp.stack(wo).astype(BF16), "bo": jnp.stack(bo),
        "ln1_g": jnp.stack(ln1g), "ln1_b": jnp.stack(ln1b),
        "w_ff1": jnp.stack(wff1).astype(BF16), "b_ff1": jnp.stack(bff1),
        "w_ff2": jnp.stack(wff2).astype(BF16), "b_ff2": jnp.stack(bff2),
        "ln2_g": jnp.stack(ln2g), "ln2_b": jnp.stack(ln2b),
        "cls_w_pad": cls_w_pad.astype(BF16), "cls_b_pad": cls_b_pad,
    })
    return p


# ----------------------------- forward pass ---------------------------------
def bert_classifier_forward(params, input_ids, token_type_ids, attention_mask):
    # Only trivial int32 reshapes remain outside the kernel; all gathers,
    # the encoder and the classifier run inside one pallas_call.
    ids = input_ids.astype(jnp.int32).reshape(BATCH * SEQ, 1)
    tids = token_type_ids.astype(jnp.int32).reshape(BATCH * SEQ, 1)
    mask = attention_mask.astype(jnp.int32)

    out_padded = pl.pallas_call(
        _bert_fused_kernel,
        out_shape=jax.ShapeDtypeStruct((BATCH * SEQ, OUT_LANES), F32),
    )(ids, tids, mask,
      params["word_emb_pad"], params["type_emb_pad"], params["pos_emb_bs"],
      params["emb_ln_g"], params["emb_ln_b"],
      params["wq"], params["bq"], params["wk"], params["bk"],
      params["wv"], params["bv"], params["wo"], params["bo"],
      params["ln1_g"], params["ln1_b"],
      params["w_ff1"], params["b_ff1"], params["w_ff2"], params["b_ff2"],
      params["ln2_g"], params["ln2_b"],
      params["cls_w_pad"], params["cls_b_pad"])

    # CLS rows are rows 0, SEQ, 2*SEQ, ... of the lane-dense output slab.
    return out_padded[::SEQ][:BATCH, :PREDICTED_SIZE]


# ----------------------------- main -----------------------------------------
if __name__ == "__main__":
    root = jax.random.PRNGKey(0)
    k_params, k_ids, _ = jax.random.split(root, 3)

    params = init_params(k_params)

    input_ids = jax.random.randint(k_ids, (BATCH, SEQ), 0, VOCAB, dtype=jnp.int32)
    input_ids = input_ids.at[:, 0].set(1)  # synthetic [CLS] token id
    token_type_ids = jnp.concatenate(
        [jnp.zeros((BATCH, SEQ // 2), jnp.int32),
         jnp.ones((BATCH, SEQ // 2), jnp.int32)], axis=1)
    attention_mask = jnp.ones((BATCH, SEQ), jnp.int32)

    fwd = jax.jit(bert_classifier_forward)
    out = fwd(params, input_ids, token_type_ids, attention_mask)
    jax.block_until_ready(out)

    assert out.shape == (BATCH, PREDICTED_SIZE), out.shape
    print("KERNEL_OK")
</pallas_src>

<mosaic_0001>
module attributes {stable_mosaic.version = 11 : i64} {
  func.func @_bert_fused_kernel(%arg0: memref<16x1xi32, #tpu.memory_space<vmem>>, %arg1: memref<16x1xi32, #tpu.memory_space<vmem>>, %arg2: memref<2x8xi32, #tpu.memory_space<vmem>>, %arg3: memref<128x32xf32, #tpu.memory_space<vmem>>, %arg4: memref<8x32xf32, #tpu.memory_space<vmem>>, %arg5: memref<16x32xf32, #tpu.memory_space<vmem>>, %arg6: memref<1x32xf32, #tpu.memory_space<vmem>>, %arg7: memref<1x32xf32, #tpu.memory_space<vmem>>, %arg8: memref<2x32x32xbf16, #tpu.memory_space<vmem>>, %arg9: memref<2x1x32xf32, #tpu.memory_space<vmem>>, %arg10: memref<2x32x32xbf16, #tpu.memory_space<vmem>>, %arg11: memref<2x1x32xf32, #tpu.memory_space<vmem>>, %arg12: memref<2x32x32xbf16, #tpu.memory_space<vmem>>, %arg13: memref<2x1x32xf32, #tpu.memory_space<vmem>>, %arg14: memref<2x32x32xbf16, #tpu.memory_space<vmem>>, %arg15: memref<2x1x32xf32, #tpu.memory_space<vmem>>, %arg16: memref<2x1x32xf32, #tpu.memory_space<vmem>>, %arg17: memref<2x1x32xf32, #tpu.memory_space<vmem>>, %arg18: memref<2x32x64xbf16, #tpu.memory_space<vmem>>, %arg19: memref<2x1x64xf32, #tpu.memory_space<vmem>>, %arg20: memref<2x64x32xbf16, #tpu.memory_space<vmem>>, %arg21: memref<2x1x32xf32, #tpu.memory_space<vmem>>, %arg22: memref<2x1x32xf32, #tpu.memory_space<vmem>>, %arg23: memref<2x1x32xf32, #tpu.memory_space<vmem>>, %arg24: memref<32x128xbf16, #tpu.memory_space<vmem>>, %arg25: memref<1x128xf32, #tpu.memory_space<vmem>>, %arg26: memref<16x128xf32, #tpu.memory_space<vmem>>) attributes {dimension_semantics = [], scalar_prefetch = 0 : i64, scratch_operands = 0 : i64, tpu.core_type = #tpu.core_type<tc>} {
    %c0 = arith.constant 0 : index
    %c0_0 = arith.constant 0 : index
    %0 = vector.load %arg0[%c0, %c0_0] : memref<16x1xi32, #tpu.memory_space<vmem>>, vector<16x1xi32>
    %c0_1 = arith.constant 0 : index
    %c0_2 = arith.constant 0 : index
    %1 = vector.load %arg1[%c0_1, %c0_2] : memref<16x1xi32, #tpu.memory_space<vmem>>, vector<16x1xi32>
    %2 = tpu.iota {dimensions = array<i32: 1>} : vector<16x128xi32>
    %3 = vector.broadcast %0 : vector<16x1xi32> to vector<16x128xi32>
    %4 = arith.cmpi eq, %2, %3 : vector<16x128xi32>
    %5 = arith.extui %4 : vector<16x128xi1> to vector<16x128xi32>
    %6 = arith.sitofp %5 : vector<16x128xi32> to vector<16x128xf32>
    %7 = tpu.iota {dimensions = array<i32: 1>} : vector<16x8xi32>
    %8 = vector.broadcast %1 : vector<16x1xi32> to vector<16x8xi32>
    %9 = arith.cmpi eq, %7, %8 : vector<16x8xi32>
    %10 = arith.extui %9 : vector<16x8xi1> to vector<16x8xi32>
    %11 = arith.sitofp %10 : vector<16x8xi32> to vector<16x8xf32>
    %c0_3 = arith.constant 0 : index
    %c0_4 = arith.constant 0 : index
    %12 = vector.load %arg3[%c0_3, %c0_4] : memref<128x32xf32, #tpu.memory_space<vmem>>, vector<128x32xf32>
    %cst = arith.constant dense<0.000000e+00> : vector<16x32xf32>
    %13 = tpu.matmul %6, %12, %cst {dimension_numbers = #tpu.dot_dimension_numbers<[1], [0], [0], [1], [0, 0, 1, 1], [], []>} : vector<16x128xf32>, vector<128x32xf32>, vector<16x32xf32> -> vector<16x32xf32>
    %c0_5 = arith.constant 0 : index
    %c0_6 = arith.constant 0 : index
    %14 = vector.load %arg4[%c0_5, %c0_6] : memref<8x32xf32, #tpu.memory_space<vmem>>, vector<8x32xf32>
    %cst_7 = arith.constant dense<0.000000e+00> : vector<16x32xf32>
    %15 = tpu.matmul %11, %14, %cst_7 {dimension_numbers = #tpu.dot_dimension_numbers<[1], [0], [0], [1], [0, 0, 1, 1], [], []>} : vector<16x8xf32>, vector<8x32xf32>, vector<16x32xf32> -> vector<16x32xf32>
    %16 = arith.addf %13, %15 : vector<16x32xf32>
    %c0_8 = arith.constant 0 : index
    %c0_9 = arith.constant 0 : index
    %17 = vector.load %arg5[%c0_8, %c0_9] : memref<16x32xf32, #tpu.memory_space<vmem>>, vector<16x32xf32>
    %18 = arith.addf %16, %17 : vector<16x32xf32>
    %c0_10 = arith.constant 0 : index
    %c0_11 = arith.constant 0 : index
    %19 = vector.load %arg6[%c0_10, %c0_11] : memref<1x32xf32, #tpu.memory_space<vmem>>, vector<1x32xf32>
    %c0_12 = arith.constant 0 : index
    %c0_13 = arith.constant 0 : index
    %20 = vector.load %arg7[%c0_12, %c0_13] : memref<1x32xf32, #tpu.memory_space<vmem>>, vector<1x32xf32>
    %cst_14 = arith.constant dense<0.000000e+00> : vector<16xf32>
    %21 = vector.multi_reduction <add>, %18, %cst_14 [1] : vector<16x32xf32> to vector<16xf32>
    %22 = vector.shape_cast %21 : vector<16xf32> to vector<16x1xf32>
    %cst_15 = arith.constant 3.200000e+01 : f32
    %23 = vector.broadcast %cst_15 : f32 to vector<16x1xf32>
    %24 = arith.divf %22, %23 : vector<16x1xf32>
    %25 = vector.broadcast %24 : vector<16x1xf32> to vector<16x32xf32>
    %26 = arith.subf %18, %25 : vector<16x32xf32>
    %27 = vector.broadcast %24 : vector<16x1xf32> to vector<16x32xf32>
    %28 = arith.subf %18, %27 : vector<16x32xf32>
    %29 = arith.mulf %26, %28 : vector<16x32xf32>
    %cst_16 = arith.constant dense<0.000000e+00> : vector<16xf32>
    %30 = vector.multi_reduction <add>, %29, %cst_16 [1] : vector<16x32xf32> to vector<16xf32>
    %31 = vector.shape_cast %30 : vector<16xf32> to vector<16x1xf32>
    %cst_17 = arith.constant 3.200000e+01 : f32
    %32 = vector.broadcast %cst_17 : f32 to vector<16x1xf32>
    %33 = arith.divf %31, %32 : vector<16x1xf32>
    %34 = vector.broadcast %24 : vector<16x1xf32> to vector<16x32xf32>
    %35 = arith.subf %18, %34 : vector<16x32xf32>
    %cst_18 = arith.constant 9.99999996E-13 : f32
    %36 = vector.broadcast %cst_18 : f32 to vector<16x1xf32>
    %37 = arith.addf %33, %36 : vector<16x1xf32>
    %38 = math.rsqrt %37 : vector<16x1xf32>
    %39 = vector.broadcast %38 : vector<16x1xf32> to vector<16x32xf32>
    %40 = arith.mulf %35, %39 : vector<16x32xf32>
    %41 = vector.broadcast %19 : vector<1x32xf32> to vector<16x32xf32>
    %42 = arith.mulf %40, %41 : vector<16x32xf32>
    %43 = vector.broadcast %20 : vector<1x32xf32> to vector<16x32xf32>
    %44 = arith.addf %42, %43 : vector<16x32xf32>
    %c0_19 = arith.constant 0 : index
    %c0_20 = arith.constant 0 : index
    %45 = vector.load %arg2[%c0_19, %c0_20] : memref<2x8xi32, #tpu.memory_space<vmem>>, vector<2x8xi32>
    %46 = arith.sitofp %45 : vector<2x8xi32> to vector<2x8xf32>
    %cst_21 = arith.constant 1.000000e+00 : f32
    %47 = vector.broadcast %cst_21 : f32 to vector<2x8xf32>
    %48 = arith.subf %47, %46 : vector<2x8xf32>
    %cst_22 = arith.constant -1.000000e+04 : f32
    %49 = vector.broadcast %cst_22 : f32 to vector<2x8xf32>
    %50 = arith.mulf %48, %49 : vector<2x8xf32>
    %c0_23 = arith.constant 0 : index
    %c0_24 = arith.constant 0 : index
    %c0_25 = arith.constant 0 : index
    %51 = vector.load %arg8[%c0_23, %c0_24, %c0_25] : memref<2x32x32xbf16, #tpu.memory_space<vmem>>, vector<1x32x32xbf16>
    %52 = vector.shape_cast %51 : vector<1x32x32xbf16> to vector<32x32xbf16>
    %53 = arith.truncf %44 : vector<16x32xf32> to vector<16x32xbf16>
    %cst_26 = arith.constant dense<0.000000e+00> : vector<16x32xf32>
    %54 = tpu.matmul %53, %52, %cst_26 {dimension_numbers = #tpu.dot_dimension_numbers<[1], [0], [0], [1], [0, 0, 1, 1], [], []>} : vector<16x32xbf16>, vector<32x32xbf16>, vector<16x32xf32> -> vector<16x32xf32>
    %c0_27 = arith.constant 0 : index
    %c0_28 = arith.constant 0 : index
    %c0_29 = arith.constant 0 : index
    %55 = vector.load %arg9[%c0_27, %c0_28, %c0_29] : memref<2x1x32xf32, #tpu.memory_space<vmem>>, vector<1x1x32xf32>
    %56 = vector.shape_cast %55 : vector<1x1x32xf32> to vector<1x32xf32>
    %57 = vector.broadcast %56 : vector<1x32xf32> to vector<16x32xf32>
    %58 = arith.addf %54, %57 : vector<16x32xf32>
    %c0_30 = arith.constant 0 : index
    %c0_31 = arith.constant 0 : index
    %c0_32 = arith.constant 0 : index
    %59 = vector.load %arg10[%c0_30, %c0_31, %c0_32] : memref<2x32x32xbf16, #tpu.memory_space<vmem>>, vector<1x32x32xbf16>
    %60 = vector.shape_cast %59 : vector<1x32x32xbf16> to vector<32x32xbf16>
    %61 = arith.truncf %44 : vector<16x32xf32> to vector<16x32xbf16>
    %cst_33 = arith.constant dense<0.000000e+00> : vector<16x32xf32>
    %62 = tpu.matmul %61, %60, %cst_33 {dimension_numbers = #tpu.dot_dimension_numbers<[1], [0], [0], [1], [0, 0, 1, 1], [], []>} : vector<16x32xbf16>, vector<32x32xbf16>, vector<16x32xf32> -> vector<16x32xf32>
    %c0_34 = arith.constant 0 : index
    %c0_35 = arith.constant 0 : index
    %c0_36 = arith.constant 0 : index
    %63 = vector.load %arg11[%c0_34, %c0_35, %c0_36] : memref<2x1x32xf32, #tpu.memory_space<vmem>>, vector<1x1x32xf32>
    %64 = vector.shape_cast %63 : vector<1x1x32xf32> to vector<1x32xf32>
    %65 = vector.broadcast %64 : vector<1x32xf32> to vector<16x32xf32>
    %66 = arith.addf %62, %65 : vector<16x32xf32>
    %c0_37 = arith.constant 0 : index
    %c0_38 = arith.constant 0 : index
    %c0_39 = arith.constant 0 : index
    %67 = vector.load %arg12[%c0_37, %c0_38, %c0_39] : memref<2x32x32xbf16, #tpu.memory_space<vmem>>, vector<1x32x32xbf16>
    %68 = vector.shape_cast %67 : vector<1x32x32xbf16> to vector<32x32xbf16>
    %69 = arith.truncf %44 : vector<16x32xf32> to vector<16x32xbf16>
    %cst_40 = arith.constant dense<0.000000e+00> : vector<16x32xf32>
    %70 = tpu.matmul %69, %68, %cst_40 {dimension_numbers = #tpu.dot_dimension_numbers<[1], [0], [0], [1], [0, 0, 1, 1], [], []>} : vector<16x32xbf16>, vector<32x32xbf16>, vector<16x32xf32> -> vector<16x32xf32>
    %c0_41 = arith.constant 0 : index
    %c0_42 = arith.constant 0 : index
    %c0_43 = arith.constant 0 : index
    %71 = vector.load %arg13[%c0_41, %c0_42, %c0_43] : memref<2x1x32xf32, #tpu.memory_space<vmem>>, vector<1x1x32xf32>
    %72 = vector.shape_cast %71 : vector<1x1x32xf32> to vector<1x32xf32>
    %73 = vector.broadcast %72 : vector<1x32xf32> to vector<16x32xf32>
    %74 = arith.addf %70, %73 : vector<16x32xf32>
    %c0_44 = arith.constant 0 : index
    %c0_45 = arith.constant 0 : index
    %c0_46 = arith.constant 0 : index
    %75 = vector.load %arg14[%c0_44, %c0_45, %c0_46] : memref<2x32x32xbf16, #tpu.memory_space<vmem>>, vector<1x32x32xbf16>
    %76 = vector.shape_cast %75 : vector<1x32x32xbf16> to vector<32x32xbf16>
    %77 = vector.extract_strided_slice %50 {offsets = [0, 0], sizes = [1, 8], strides = [1, 1]} : vector<2x8xf32> to vector<1x8xf32>
    %78 = vector.extract_strided_slice %58 {offsets = [0, 0], sizes = [8, 16], strides = [1, 1]} : vector<16x32xf32> to vector<8x16xf32>
    %79 = vector.extract_strided_slice %66 {offsets = [0, 0], sizes = [8, 16], strides = [1, 1]} : vector<16x32xf32> to vector<8x16xf32>
    %80 = vector.extract_strided_slice %74 {offsets = [0, 0], sizes = [8, 16], strides = [1, 1]} : vector<16x32xf32> to vector<8x16xf32>
    %81 = arith.truncf %78 : vector<8x16xf32> to vector<8x16xbf16>
    %82 = arith.truncf %79 : vector<8x16xf32> to vector<8x16xbf16>
    %cst_47 = arith.constant dense<0.000000e+00> : vector<8x8xf32>
    %83 = tpu.matmul %81, %82, %cst_47 {dimension_numbers = #tpu.dot_dimension_numbers<[1], [1], [0], [0], [0, 0, 1, 0], [], []>} : vector<8x16xbf16>, vector<8x16xbf16>, vector<8x8xf32> -> vector<8x8xf32>
    %84 = vector.broadcast %77 : vector<1x8xf32> to vector<8x8xf32>
    %85 = arith.addf %83, %84 : vector<8x8xf32>
    %cst_48 = arith.constant dense<0xFF800000> : vector<8xf32>
    %86 = vector.multi_reduction <maximumf>, %85, %cst_48 [1] : vector<8x8xf32> to vector<8xf32>
    %87 = vector.shape_cast %86 : vector<8xf32> to vector<8x1xf32>
    %88 = vector.broadcast %87 : vector<8x1xf32> to vector<8x8xf32>
    %89 = arith.subf %85, %88 : vector<8x8xf32>
    %90 = math.exp %89 : vector<8x8xf32>
    %cst_49 = arith.constant dense<0.000000e+00> : vector<8xf32>
    %91 = vector.multi_reduction <add>, %90, %cst_49 [1] : vector<8x8xf32> to vector<8xf32>
    %92 = vector.shape_cast %91 : vector<8xf32> to vector<8x1xf32>
    %93 = tpu.reciprocal %92 {approx = true} : vector<8x1xf32> -> vector<8x1xf32>
    %94 = vector.broadcast %93 : vector<8x1xf32> to vector<8x8xf32>
    %95 = arith.mulf %90, %94 : vector<8x8xf32>
    %96 = arith.truncf %95 : vector<8x8xf32> to vector<8x8xbf16>
    %97 = arith.truncf %80 : vector<8x16xf32> to vector<8x16xbf16>
    %cst_50 = arith.constant dense<0.000000e+00> : vector<8x16xf32>
    %98 = tpu.matmul %96, %97, %cst_50 {dimension_numbers = #tpu.dot_dimension_numbers<[1], [0], [0], [1], [0, 0, 1, 1], [], []>} : vector<8x8xbf16>, vector<8x16xbf16>, vector<8x16xf32> -> vector<8x16xf32>
    %99 = vector.extract_strided_slice %76 {offsets = [0, 0], sizes = [16, 32], strides = [1, 1]} : vector<32x32xbf16> to vector<16x32xbf16>
    %100 = arith.truncf %98 : vector<8x16xf32> to vector<8x16xbf16>
    %cst_51 = arith.constant dense<0.000000e+00> : vector<8x32xf32>
    %101 = tpu.matmul %100, %99, %cst_51 {dimension_numbers = #tpu.dot_dimension_numbers<[1], [0], [0], [1], [0, 0, 1, 1], [], []>} : vector<8x16xbf16>, vector<16x32xbf16>, vector<8x32xf32> -> vector<8x32xf32>
    %102 = vector.extract_strided_slice %58 {offsets = [0, 16], sizes = [8, 16], strides = [1, 1]} : vector<16x32xf32> to vector<8x16xf32>
    %103 = vector.extract_strided_slice %66 {offsets = [0, 16], sizes = [8, 16], strides = [1, 1]} : vector<16x32xf32> to vector<8x16xf32>
    %104 = vector.extract_strided_slice %74 {offsets = [0, 16], sizes = [8, 16], strides = [1, 1]} : vector<16x32xf32> to vector<8x16xf32>
    %105 = arith.truncf %102 : vector<8x16xf32> to vector<8x16xbf16>
    %106 = arith.truncf %103 : vector<8x16xf32> to vector<8x16xbf16>
    %cst_52 = arith.constant dense<0.000000e+00> : vector<8x8xf32>
    %107 = tpu.matmul %105, %106, %cst_52 {dimension_numbers = #tpu.dot_dimension_numbers<[1], [1], [0], [0], [0, 0, 1, 0], [], []>} : vector<8x16xbf16>, vector<8x16xbf16>, vector<8x8xf32> -> vector<8x8xf32>
    %108 = vector.broadcast %77 : vector<1x8xf32> to vector<8x8xf32>
    %109 = arith.addf %107, %108 : vector<8x8xf32>
    %cst_53 = arith.constant dense<0xFF800000> : vector<8xf32>
    %110 = vector.multi_reduction <maximumf>, %109, %cst_53 [1] : vector<8x8xf32> to vector<8xf32>
    %111 = vector.shape_cast %110 : vector<8xf32> to vector<8x1xf32>
    %112 = vector.broadcast %111 : vector<8x1xf32> to vector<8x8xf32>
    %113 = arith.subf %109, %112 : vector<8x8xf32>
    %114 = math.exp %113 : vector<8x8xf32>
    %cst_54 = arith.constant dense<0.000000e+00> : vector<8xf32>
    %115 = vector.multi_reduction <add>, %114, %cst_54 [1] : vector<8x8xf32> to vector<8xf32>
    %116 = vector.shape_cast %115 : vector<8xf32> to vector<8x1xf32>
    %117 = tpu.reciprocal %116 {approx = true} : vector<8x1xf32> -> vector<8x1xf32>
    %118 = vector.broadcast %117 : vector<8x1xf32> to vector<8x8xf32>
    %119 = arith.mulf %114, %118 : vector<8x8xf32>
    %120 = arith.truncf %119 : vector<8x8xf32> to vector<8x8xbf16>
    %121 = arith.truncf %104 : vector<8x16xf32> to vector<8x16xbf16>
    %cst_55 = arith.constant dense<0.000000e+00> : vector<8x16xf32>
    %122 = tpu.matmul %120, %121, %cst_55 {dimension_numbers = #tpu.dot_dimension_numbers<[1], [0], [0], [1], [0, 0, 1, 1], [], []>} : vector<8x8xbf16>, vector<8x16xbf16>, vector<8x16xf32> -> vector<8x16xf32>
    %123 = vector.extract_strided_slice %76 {offsets = [16, 0], sizes = [16, 32], strides = [1, 1]} : vector<32x32xbf16> to vector<16x32xbf16>
    %124 = arith.truncf %122 : vector<8x16xf32> to vector<8x16xbf16>
    %cst_56 = arith.constant dense<0.000000e+00> : vector<8x32xf32>
    %125 = tpu.matmul %124, %123, %cst_56 {dimension_numbers = #tpu.dot_dimension_numbers<[1], [0], [0], [1], [0, 0, 1, 1], [], []>} : vector<8x16xbf16>, vector<16x32xbf16>, vector<8x32xf32> -> vector<8x32xf32>
    %126 = arith.addf %101, %125 : vector<8x32xf32>
    %127 = vector.extract_strided_slice %50 {offsets = [1, 0], sizes = [1, 8], strides = [1, 1]} : vector<2x8xf32> to vector<1x8xf32>
    %128 = vector.extract_strided_slice %58 {offsets = [8, 0], sizes = [8, 16], strides = [1, 1]} : vector<16x32xf32> to vector<8x16xf32>
    %129 = vector.extract_strided_slice %66 {offsets = [8, 0], sizes = [8, 16], strides = [1, 1]} : vector<16x32xf32> to vector<8x16xf32>
    %130 = vector.extract_strided_slice %74 {offsets = [8, 0], sizes = [8, 16], strides = [1, 1]} : vector<16x32xf32> to vector<8x16xf32>
    %131 = arith.truncf %128 : vector<8x16xf32> to vector<8x16xbf16>
    %132 = arith.truncf %129 : vector<8x16xf32> to vector<8x16xbf16>
    %cst_57 = arith.constant dense<0.000000e+00> : vector<8x8xf32>
    %133 = tpu.matmul %131, %132, %cst_57 {dimension_numbers = #tpu.dot_dimension_numbers<[1], [1], [0], [0], [0, 0, 1, 0], [], []>} : vector<8x16xbf16>, vector<8x16xbf16>, vector<8x8xf32> -> vector<8x8xf32>
    %134 = vector.broadcast %127 : vector<1x8xf32> to vector<8x8xf32>
    %135 = arith.addf %133, %134 : vector<8x8xf32>
    %cst_58 = arith.constant dense<0xFF800000> : vector<8xf32>
    %136 = vector.multi_reduction <maximumf>, %135, %cst_58 [1] : vector<8x8xf32> to vector<8xf32>
    %137 = vector.shape_cast %136 : vector<8xf32> to vector<8x1xf32>
    %138 = vector.broadcast %137 : vector<8x1xf32> to vector<8x8xf32>
    %139 = arith.subf %135, %138 : vector<8x8xf32>
    %140 = math.exp %139 : vector<8x8xf32>
    %cst_59 = arith.constant dense<0.000000e+00> : vector<8xf32>
    %141 = vector.multi_reduction <add>, %140, %cst_59 [1] : vector<8x8xf32> to vector<8xf32>
    %142 = vector.shape_cast %141 : vector<8xf32> to vector<8x1xf32>
    %143 = tpu.reciprocal %142 {approx = true} : vector<8x1xf32> -> vector<8x1xf32>
    %144 = vector.broadcast %143 : vector<8x1xf32> to vector<8x8xf32>
    %145 = arith.mulf %140, %144 : vector<8x8xf32>
    %146 = arith.truncf %145 : vector<8x8xf32> to vector<8x8xbf16>
    %147 = arith.truncf %130 : vector<8x16xf32> to vector<8x16xbf16>
    %cst_60 = arith.constant dense<0.000000e+00> : vector<8x16xf32>
    %148 = tpu.matmul %146, %147, %cst_60 {dimension_numbers = #tpu.dot_dimension_numbers<[1], [0], [0], [1], [0, 0, 1, 1], [], []>} : vector<8x8xbf16>, vector<8x16xbf16>, vector<8x16xf32> -> vector<8x16xf32>
    %149 = vector.extract_strided_slice %76 {offsets = [0, 0], sizes = [16, 32], strides = [1, 1]} : vector<32x32xbf16> to vector<16x32xbf16>
    %150 = arith.truncf %148 : vector<8x16xf32> to vector<8x16xbf16>
    %cst_61 = arith.constant dense<0.000000e+00> : vector<8x32xf32>
    %151 = tpu.matmul %150, %149, %cst_61 {dimension_numbers = #tpu.dot_dimension_numbers<[1], [0], [0], [1], [0, 0, 1, 1], [], []>} : vector<8x16xbf16>, vector<16x32xbf16>, vector<8x32xf32> -> vector<8x32xf32>
    %152 = vector.extract_strided_slice %58 {offsets = [8, 16], sizes = [8, 16], strides = [1, 1]} : vector<16x32xf32> to vector<8x16xf32>
    %153 = vector.extract_strided_slice %66 {offsets = [8, 16], sizes = [8, 16], strides = [1, 1]} : vector<16x32xf32> to vector<8x16xf32>
    %154 = vector.extract_strided_slice %74 {offsets = [8, 16], sizes = [8, 16], strides = [1, 1]} : vector<16x32xf32> to vector<8x16xf32>
    %155 = arith.truncf %152 : vector<8x16xf32> to vector<8x16xbf16>
    %156 = arith.truncf %153 : vector<8x16xf32> to vector<8x16xbf16>
    %cst_62 = arith.constant dense<0.000000e+00> : vector<8x8xf32>
    %157 = tpu.matmul %155, %156, %cst_62 {dimension_numbers = #tpu.dot_dimension_numbers<[1], [1], [0], [0], [0, 0, 1, 0], [], []>} : vector<8x16xbf16>, vector<8x16xbf16>, vector<8x8xf32> -> vector<8x8xf32>
    %158 = vector.broadcast %127 : vector<1x8xf32> to vector<8x8xf32>
    %159 = arith.addf %157, %158 : vector<8x8xf32>
    %cst_63 = arith.constant dense<0xFF800000> : vector<8xf32>
    %160 = vector.multi_reduction <maximumf>, %159, %cst_63 [1] : vector<8x8xf32> to vector<8xf32>
    %161 = vector.shape_cast %160 : vector<8xf32> to vector<8x1xf32>
    %162 = vector.broadcast %161 : vector<8x1xf32> to vector<8x8xf32>
    %163 = arith.subf %159, %162 : vector<8x8xf32>
    %164 = math.exp %163 : vector<8x8xf32>
    %cst_64 = arith.constant dense<0.000000e+00> : vector<8xf32>
    %165 = vector.multi_reduction <add>, %164, %cst_64 [1] : vector<8x8xf32> to vector<8xf32>
    %166 = vector.shape_cast %165 : vector<8xf32> to vector<8x1xf32>
    %167 = tpu.reciprocal %166 {approx = true} : vector<8x1xf32> -> vector<8x1xf32>
    %168 = vector.broadcast %167 : vector<8x1xf32> to vector<8x8xf32>
    %169 = arith.mulf %164, %168 : vector<8x8xf32>
    %170 = arith.truncf %169 : vector<8x8xf32> to vector<8x8xbf16>
    %171 = arith.truncf %154 : vector<8x16xf32> to vector<8x16xbf16>
    %cst_65 = arith.constant dense<0.000000e+00> : vector<8x16xf32>
    %172 = tpu.matmul %170, %171, %cst_65 {dimension_numbers = #tpu.dot_dimension_numbers<[1], [0], [0], [1], [0, 0, 1, 1], [], []>} : vector<8x8xbf16>, vector<8x16xbf16>, vector<8x16xf32> -> vector<8x16xf32>
    %173 = vector.extract_strided_slice %76 {offsets = [16, 0], sizes = [16, 32], strides = [1, 1]} : vector<32x32xbf16> to vector<16x32xbf16>
    %174 = arith.truncf %172 : vector<8x16xf32> to vector<8x16xbf16>
    %cst_66 = arith.constant dense<0.000000e+00> : vector<8x32xf32>
    %175 = tpu.matmul %174, %173, %cst_66 {dimension_numbers = #tpu.dot_dimension_numbers<[1], [0], [0], [1], [0, 0, 1, 1], [], []>} : vector<8x16xbf16>, vector<16x32xbf16>, vector<8x32xf32> -> vector<8x32xf32>
    %176 = arith.addf %151, %175 : vector<8x32xf32>
    %177 = tpu.concatenate %126, %176 in 0 : vector<8x32xf32>, vector<8x32xf32> -> vector<16x32xf32>
    %c0_67 = arith.constant 0 : index
    %c0_68 = arith.constant 0 : index
    %c0_69 = arith.constant 0 : index
    %178 = vector.load %arg15[%c0_67, %c0_68, %c0_69] : memref<2x1x32xf32, #tpu.memory_space<vmem>>, vector<1x1x32xf32>
    %179 = vector.shape_cast %178 : vector<1x1x32xf32> to vector<1x32xf32>
    %180 = vector.broadcast %179 : vector<1x32xf32> to vector<16x32xf32>
    %181 = arith.addf %177, %180 : vector<16x32xf32>
    %182 = arith.addf %44, %181 : vector<16x32xf32>
    %c0_70 = arith.constant 0 : index
    %c0_71 = arith.constant 0 : index
    %c0_72 = arith.constant 0 : index
    %183 = vector.load %arg16[%c0_70, %c0_71, %c0_72] : memref<2x1x32xf32, #tpu.memory_space<vmem>>, vector<1x1x32xf32>
    %184 = vector.shape_cast %183 : vector<1x1x32xf32> to vector<1x32xf32>
    %c0_73 = arith.constant 0 : index
    %c0_74 = arith.constant 0 : index
    %c0_75 = arith.constant 0 : index
    %185 = vector.load %arg17[%c0_73, %c0_74, %c0_75] : memref<2x1x32xf32, #tpu.memory_space<vmem>>, vector<1x1x32xf32>
    %186 = vector.shape_cast %185 : vector<1x1x32xf32> to vector<1x32xf32>
    %cst_76 = arith.constant dense<0.000000e+00> : vector<16xf32>
    %187 = vector.multi_reduction <add>, %182, %cst_76 [1] : vector<16x32xf32> to vector<16xf32>
    %188 = vector.shape_cast %187 : vector<16xf32> to vector<16x1xf32>
    %cst_77 = arith.constant 3.200000e+01 : f32
    %189 = vector.broadcast %cst_77 : f32 to vector<16x1xf32>
    %190 = arith.divf %188, %189 : vector<16x1xf32>
    %191 = vector.broadcast %190 : vector<16x1xf32> to vector<16x32xf32>
    %192 = arith.subf %182, %191 : vector<16x32xf32>
    %193 = vector.broadcast %190 : vector<16x1xf32> to vector<16x32xf32>
    %194 = arith.subf %182, %193 : vector<16x32xf32>
    %195 = arith.mulf %192, %194 : vector<16x32xf32>
    %cst_78 = arith.constant dense<0.000000e+00> : vector<16xf32>
    %196 = vector.multi_reduction <add>, %195, %cst_78 [1] : vector<16x32xf32> to vector<16xf32>
    %197 = vector.shape_cast %196 : vector<16xf32> to vector<16x1xf32>
    %cst_79 = arith.constant 3.200000e+01 : f32
    %198 = vector.broadcast %cst_79 : f32 to vector<16x1xf32>
    %199 = arith.divf %197, %198 : vector<16x1xf32>
    %200 = vector.broadcast %190 : vector<16x1xf32> to vector<16x32xf32>
    %201 = arith.subf %182, %200 : vector<16x32xf32>
    %cst_80 = arith.constant 9.99999996E-13 : f32
    %202 = vector.broadcast %cst_80 : f32 to vector<16x1xf32>
    %203 = arith.addf %199, %202 : vector<16x1xf32>
    %204 = math.rsqrt %203 : vector<16x1xf32>
    %205 = vector.broadcast %204 : vector<16x1xf32> to vector<16x32xf32>
    %206 = arith.mulf %201, %205 : vector<16x32xf32>
    %207 = vector.broadcast %184 : vector<1x32xf32> to vector<16x32xf32>
    %208 = arith.mulf %206, %207 : vector<16x32xf32>
    %209 = vector.broadcast %186 : vector<1x32xf32> to vector<16x32xf32>
    %210 = arith.addf %208, %209 : vector<16x32xf32>
    %c0_81 = arith.constant 0 : index
    %c0_82 = arith.constant 0 : index
    %c0_83 = arith.constant 0 : index
    %211 = vector.load %arg18[%c0_81, %c0_82, %c0_83] : memref<2x32x64xbf16, #tpu.memory_space<vmem>>, vector<1x32x64xbf16>
    %212 = vector.shape_cast %211 : vector<1x32x64xbf16> to vector<32x64xbf16>
    %213 = arith.truncf %210 : vector<16x32xf32> to vector<16x32xbf16>
    %cst_84 = arith.constant dense<0.000000e+00> : vector<16x64xf32>
    %214 = tpu.matmul %213, %212, %cst_84 {dimension_numbers = #tpu.dot_dimension_numbers<[1], [0], [0], [1], [0, 0, 1, 1], [], []>} : vector<16x32xbf16>, vector<32x64xbf16>, vector<16x64xf32> -> vector<16x64xf32>
    %c0_85 = arith.constant 0 : index
    %c0_86 = arith.constant 0 : index
    %c0_87 = arith.constant 0 : index
    %215 = vector.load %arg19[%c0_85, %c0_86, %c0_87] : memref<2x1x64xf32, #tpu.memory_space<vmem>>, vector<1x1x64xf32>
    %216 = vector.shape_cast %215 : vector<1x1x64xf32> to vector<1x64xf32>
    %217 = vector.broadcast %216 : vector<1x64xf32> to vector<16x64xf32>
    %218 = arith.addf %214, %217 : vector<16x64xf32>
    %cst_88 = arith.constant 5.000000e-01 : f32
    %219 = vector.broadcast %cst_88 : f32 to vector<16x64xf32>
    %220 = arith.mulf %219, %218 : vector<16x64xf32>
    %cst_89 = arith.constant 4.471500e-02 : f32
    %221 = vector.broadcast %cst_89 : f32 to vector<16x64xf32>
    %222 = arith.mulf %221, %218 : vector<16x64xf32>
    %223 = arith.mulf %222, %218 : vector<16x64xf32>
    %224 = arith.mulf %223, %218 : vector<16x64xf32>
    %225 = arith.addf %218, %224 : vector<16x64xf32>
    %cst_90 = arith.constant 0.797884583 : f32
    %226 = vector.broadcast %cst_90 : f32 to vector<16x64xf32>
    %227 = arith.mulf %226, %225 : vector<16x64xf32>
    %228 = math.tanh %227 : vector<16x64xf32>
    %cst_91 = arith.constant 1.000000e+00 : f32
    %229 = vector.broadcast %cst_91 : f32 to vector<16x64xf32>
    %230 = arith.addf %229, %228 : vector<16x64xf32>
    %231 = arith.mulf %220, %230 : vector<16x64xf32>
    %c0_92 = arith.constant 0 : index
    %c0_93 = arith.constant 0 : index
    %c0_94 = arith.constant 0 : index
    %232 = vector.load %arg20[%c0_92, %c0_93, %c0_94] : memref<2x64x32xbf16, #tpu.memory_space<vmem>>, vector<1x64x32xbf16>
    %233 = vector.shape_cast %232 : vector<1x64x32xbf16> to vector<64x32xbf16>
    %234 = arith.truncf %231 : vector<16x64xf32> to vector<16x64xbf16>
    %cst_95 = arith.constant dense<0.000000e+00> : vector<16x32xf32>
    %235 = tpu.matmul %234, %233, %cst_95 {dimension_numbers = #tpu.dot_dimension_numbers<[1], [0], [0], [1], [0, 0, 1, 1], [], []>} : vector<16x64xbf16>, vector<64x32xbf16>, vector<16x32xf32> -> vector<16x32xf32>
    %c0_96 = arith.constant 0 : index
    %c0_97 = arith.constant 0 : index
    %c0_98 = arith.constant 0 : index
    %236 = vector.load %arg21[%c0_96, %c0_97, %c0_98] : memref<2x1x32xf32, #tpu.memory_space<vmem>>, vector<1x1x32xf32>
    %237 = vector.shape_cast %236 : vector<1x1x32xf32> to vector<1x32xf32>
    %238 = vector.broadcast %237 : vector<1x32xf32> to vector<16x32xf32>
    %239 = arith.addf %235, %238 : vector<16x32xf32>
    %240 = arith.addf %210, %239 : vector<16x32xf32>
    %c0_99 = arith.constant 0 : index
    %c0_100 = arith.constant 0 : index
    %c0_101 = arith.constant 0 : index
    %241 = vector.load %arg22[%c0_99, %c0_100, %c0_101] : memref<2x1x32xf32, #tpu.memory_space<vmem>>, vector<1x1x32xf32>
    %242 = vector.shape_cast %241 : vector<1x1x32xf32> to vector<1x32xf32>
    %c0_102 = arith.constant 0 : index
    %c0_103 = arith.constant 0 : index
    %c0_104 = arith.constant 0 : index
    %243 = vector.load %arg23[%c0_102, %c0_103, %c0_104] : memref<2x1x32xf32, #tpu.memory_space<vmem>>, vector<1x1x32xf32>
    %244 = vector.shape_cast %243 : vector<1x1x32xf32> to vector<1x32xf32>
    %cst_105 = arith.constant dense<0.000000e+00> : vector<16xf32>
    %245 = vector.multi_reduction <add>, %240, %cst_105 [1] : vector<16x32xf32> to vector<16xf32>
    %246 = vector.shape_cast %245 : vector<16xf32> to vector<16x1xf32>
    %cst_106 = arith.constant 3.200000e+01 : f32
    %247 = vector.broadcast %cst_106 : f32 to vector<16x1xf32>
    %248 = arith.divf %246, %247 : vector<16x1xf32>
    %249 = vector.broadcast %248 : vector<16x1xf32> to vector<16x32xf32>
    %250 = arith.subf %240, %249 : vector<16x32xf32>
    %251 = vector.broadcast %248 : vector<16x1xf32> to vector<16x32xf32>
    %252 = arith.subf %240, %251 : vector<16x32xf32>
    %253 = arith.mulf %250, %252 : vector<16x32xf32>
    %cst_107 = arith.constant dense<0.000000e+00> : vector<16xf32>
    %254 = vector.multi_reduction <add>, %253, %cst_107 [1] : vector<16x32xf32> to vector<16xf32>
    %255 = vector.shape_cast %254 : vector<16xf32> to vector<16x1xf32>
    %cst_108 = arith.constant 3.200000e+01 : f32
    %256 = vector.broadcast %cst_108 : f32 to vector<16x1xf32>
    %257 = arith.divf %255, %256 : vector<16x1xf32>
    %258 = vector.broadcast %248 : vector<16x1xf32> to vector<16x32xf32>
    %259 = arith.subf %240, %258 : vector<16x32xf32>
    %cst_109 = arith.constant 9.99999996E-13 : f32
    %260 = vector.broadcast %cst_109 : f32 to vector<16x1xf32>
    %261 = arith.addf %257, %260 : vector<16x1xf32>
    %262 = math.rsqrt %261 : vector<16x1xf32>
    %263 = vector.broadcast %262 : vector<16x1xf32> to vector<16x32xf32>
    %264 = arith.mulf %259, %263 : vector<16x32xf32>
    %265 = vector.broadcast %242 : vector<1x32xf32> to vector<16x32xf32>
    %266 = arith.mulf %264, %265 : vector<16x32xf32>
    %267 = vector.broadcast %244 : vector<1x32xf32> to vector<16x32xf32>
    %268 = arith.addf %266, %267 : vector<16x32xf32>
    %c1 = arith.constant 1 : index
    %c0_110 = arith.constant 0 : index
    %c0_111 = arith.constant 0 : index
    %269 = vector.load %arg8[%c1, %c0_110, %c0_111] : memref<2x32x32xbf16, #tpu.memory_space<vmem>>, vector<1x32x32xbf16>
    %270 = vector.shape_cast %269 : vector<1x32x32xbf16> to vector<32x32xbf16>
    %271 = arith.truncf %268 : vector<16x32xf32> to vector<16x32xbf16>
    %cst_112 = arith.constant dense<0.000000e+00> : vector<16x32xf32>
    %272 = tpu.matmul %271, %270, %cst_112 {dimension_numbers = #tpu.dot_dimension_numbers<[1], [0], [0], [1], [0, 0, 1, 1], [], []>} : vector<16x32xbf16>, vector<32x32xbf16>, vector<16x32xf32> -> vector<16x32xf32>
    %c1_113 = arith.constant 1 : index
    %c0_114 = arith.constant 0 : index
    %c0_115 = arith.constant 0 : index
    %273 = vector.load %arg9[%c1_113, %c0_114, %c0_115] : memref<2x1x32xf32, #tpu.memory_space<vmem>>, vector<1x1x32xf32>
    %274 = vector.shape_cast %273 : vector<1x1x32xf32> to vector<1x32xf32>
    %275 = vector.broadcast %274 : vector<1x32xf32> to vector<16x32xf32>
    %276 = arith.addf %272, %275 : vector<16x32xf32>
    %c1_116 = arith.constant 1 : index
    %c0_117 = arith.constant 0 : index
    %c0_118 = arith.constant 0 : index
    %277 = vector.load %arg10[%c1_116, %c0_117, %c0_118] : memref<2x32x32xbf16, #tpu.memory_space<vmem>>, vector<1x32x32xbf16>
    %278 = vector.shape_cast %277 : vector<1x32x32xbf16> to vector<32x32xbf16>
    %279 = arith.truncf %268 : vector<16x32xf32> to vector<16x32xbf16>
    %cst_119 = arith.constant dense<0.000000e+00> : vector<16x32xf32>
    %280 = tpu.matmul %279, %278, %cst_119 {dimension_numbers = #tpu.dot_dimension_numbers<[1], [0], [0], [1], [0, 0, 1, 1], [], []>} : vector<16x32xbf16>, vector<32x32xbf16>, vector<16x32xf32> -> vector<16x32xf32>
    %c1_120 = arith.constant 1 : index
    %c0_121 = arith.constant 0 : index
    %c0_122 = arith.constant 0 : index
    %281 = vector.load %arg11[%c1_120, %c0_121, %c0_122] : memref<2x1x32xf32, #tpu.memory_space<vmem>>, vector<1x1x32xf32>
    %282 = vector.shape_cast %281 : vector<1x1x32xf32> to vector<1x32xf32>
    %283 = vector.broadcast %282 : vector<1x32xf32> to vector<16x32xf32>
    %284 = arith.addf %280, %283 : vector<16x32xf32>
    %c1_123 = arith.constant 1 : index
    %c0_124 = arith.constant 0 : index
    %c0_125 = arith.constant 0 : index
    %285 = vector.load %arg12[%c1_123, %c0_124, %c0_125] : memref<2x32x32xbf16, #tpu.memory_space<vmem>>, vector<1x32x32xbf16>
    %286 = vector.shape_cast %285 : vector<1x32x32xbf16> to vector<32x32xbf16>
    %287 = arith.truncf %268 : vector<16x32xf32> to vector<16x32xbf16>
    %cst_126 = arith.constant dense<0.000000e+00> : vector<16x32xf32>
    %288 = tpu.matmul %287, %286, %cst_126 {dimension_numbers = #tpu.dot_dimension_numbers<[1], [0], [0], [1], [0, 0, 1, 1], [], []>} : vector<16x32xbf16>, vector<32x32xbf16>, vector<16x32xf32> -> vector<16x32xf32>
    %c1_127 = arith.constant 1 : index
    %c0_128 = arith.constant 0 : index
    %c0_129 = arith.constant 0 : index
    %289 = vector.load %arg13[%c1_127, %c0_128, %c0_129] : memref<2x1x32xf32, #tpu.memory_space<vmem>>, vector<1x1x32xf32>
    %290 = vector.shape_cast %289 : vector<1x1x32xf32> to vector<1x32xf32>
    %291 = vector.broadcast %290 : vector<1x32xf32> to vector<16x32xf32>
    %292 = arith.addf %288, %291 : vector<16x32xf32>
    %c1_130 = arith.constant 1 : index
    %c0_131 = arith.constant 0 : index
    %c0_132 = arith.constant 0 : index
    %293 = vector.load %arg14[%c1_130, %c0_131, %c0_132] : memref<2x32x32xbf16, #tpu.memory_space<vmem>>, vector<1x32x32xbf16>
    %294 = vector.shape_cast %293 : vector<1x32x32xbf16> to vector<32x32xbf16>
    %295 = vector.extract_strided_slice %50 {offsets = [0, 0], sizes = [1, 8], strides = [1, 1]} : vector<2x8xf32> to vector<1x8xf32>
    %296 = vector.extract_strided_slice %276 {offsets = [0, 0], sizes = [8, 16], strides = [1, 1]} : vector<16x32xf32> to vector<8x16xf32>
    %297 = vector.extract_strided_slice %284 {offsets = [0, 0], sizes = [8, 16], strides = [1, 1]} : vector<16x32xf32> to vector<8x16xf32>
    %298 = vector.extract_strided_slice %292 {offsets = [0, 0], sizes = [8, 16], strides = [1, 1]} : vector<16x32xf32> to vector<8x16xf32>
    %299 = arith.truncf %296 : vector<8x16xf32> to vector<8x16xbf16>
    %300 = arith.truncf %297 : vector<8x16xf32> to vector<8x16xbf16>
    %cst_133 = arith.constant dense<0.000000e+00> : vector<8x8xf32>
    %301 = tpu.matmul %299, %300, %cst_133 {dimension_numbers = #tpu.dot_dimension_numbers<[1], [1], [0], [0], [0, 0, 1, 0], [], []>} : vector<8x16xbf16>, vector<8x16xbf16>, vector<8x8xf32> -> vector<8x8xf32>
    %302 = vector.broadcast %295 : vector<1x8xf32> to vector<8x8xf32>
    %303 = arith.addf %301, %302 : vector<8x8xf32>
    %cst_134 = arith.constant dense<0xFF800000> : vector<8xf32>
    %304 = vector.multi_reduction <maximumf>, %303, %cst_134 [1] : vector<8x8xf32> to vector<8xf32>
    %305 = vector.shape_cast %304 : vector<8xf32> to vector<8x1xf32>
    %306 = vector.broadcast %305 : vector<8x1xf32> to vector<8x8xf32>
    %307 = arith.subf %303, %306 : vector<8x8xf32>
    %308 = math.exp %307 : vector<8x8xf32>
    %cst_135 = arith.constant dense<0.000000e+00> : vector<8xf32>
    %309 = vector.multi_reduction <add>, %308, %cst_135 [1] : vector<8x8xf32> to vector<8xf32>
    %310 = vector.shape_cast %309 : vector<8xf32> to vector<8x1xf32>
    %311 = tpu.reciprocal %310 {approx = true} : vector<8x1xf32> -> vector<8x1xf32>
    %312 = vector.broadcast %311 : vector<8x1xf32> to vector<8x8xf32>
    %313 = arith.mulf %308, %312 : vector<8x8xf32>
    %314 = arith.truncf %313 : vector<8x8xf32> to vector<8x8xbf16>
    %315 = arith.truncf %298 : vector<8x16xf32> to vector<8x16xbf16>
    %cst_136 = arith.constant dense<0.000000e+00> : vector<8x16xf32>
    %316 = tpu.matmul %314, %315, %cst_136 {dimension_numbers = #tpu.dot_dimension_numbers<[1], [0], [0], [1], [0, 0, 1, 1], [], []>} : vector<8x8xbf16>, vector<8x16xbf16>, vector<8x16xf32> -> vector<8x16xf32>
    %317 = vector.extract_strided_slice %294 {offsets = [0, 0], sizes = [16, 32], strides = [1, 1]} : vector<32x32xbf16> to vector<16x32xbf16>
    %318 = arith.truncf %316 : vector<8x16xf32> to vector<8x16xbf16>
    %cst_137 = arith.constant dense<0.000000e+00> : vector<8x32xf32>
    %319 = tpu.matmul %318, %317, %cst_137 {dimension_numbers = #tpu.dot_dimension_numbers<[1], [0], [0], [1], [0, 0, 1, 1], [], []>} : vector<8x16xbf16>, vector<16x32xbf16>, vector<8x32xf32> -> vector<8x32xf32>
    %320 = vector.extract_strided_slice %276 {offsets = [0, 16], sizes = [8, 16], strides = [1, 1]} : vector<16x32xf32> to vector<8x16xf32>
    %321 = vector.extract_strided_slice %284 {offsets = [0, 16], sizes = [8, 16], strides = [1, 1]} : vector<16x32xf32> to vector<8x16xf32>
    %322 = vector.extract_strided_slice %292 {offsets = [0, 16], sizes = [8, 16], strides = [1, 1]} : vector<16x32xf32> to vector<8x16xf32>
    %323 = arith.truncf %320 : vector<8x16xf32> to vector<8x16xbf16>
    %324 = arith.truncf %321 : vector<8x16xf32> to vector<8x16xbf16>
    %cst_138 = arith.constant dense<0.000000e+00> : vector<8x8xf32>
    %325 = tpu.matmul %323, %324, %cst_138 {dimension_numbers = #tpu.dot_dimension_numbers<[1], [1], [0], [0], [0, 0, 1, 0], [], []>} : vector<8x16xbf16>, vector<8x16xbf16>, vector<8x8xf32> -> vector<8x8xf32>
    %326 = vector.broadcast %295 : vector<1x8xf32> to vector<8x8xf32>
    %327 = arith.addf %325, %326 : vector<8x8xf32>
    %cst_139 = arith.constant dense<0xFF800000> : vector<8xf32>
    %328 = vector.multi_reduction <maximumf>, %327, %cst_139 [1] : vector<8x8xf32> to vector<8xf32>
    %329 = vector.shape_cast %328 : vector<8xf32> to vector<8x1xf32>
    %330 = vector.broadcast %329 : vector<8x1xf32> to vector<8x8xf32>
    %331 = arith.subf %327, %330 : vector<8x8xf32>
    %332 = math.exp %331 : vector<8x8xf32>
    %cst_140 = arith.constant dense<0.000000e+00> : vector<8xf32>
    %333 = vector.multi_reduction <add>, %332, %cst_140 [1] : vector<8x8xf32> to vector<8xf32>
    %334 = vector.shape_cast %333 : vector<8xf32> to vector<8x1xf32>
    %335 = tpu.reciprocal %334 {approx = true} : vector<8x1xf32> -> vector<8x1xf32>
    %336 = vector.broadcast %335 : vector<8x1xf32> to vector<8x8xf32>
    %337 = arith.mulf %332, %336 : vector<8x8xf32>
    %338 = arith.truncf %337 : vector<8x8xf32> to vector<8x8xbf16>
    %339 = arith.truncf %322 : vector<8x16xf32> to vector<8x16xbf16>
    %cst_141 = arith.constant dense<0.000000e+00> : vector<8x16xf32>
    %340 = tpu.matmul %338, %339, %cst_141 {dimension_numbers = #tpu.dot_dimension_numbers<[1], [0], [0], [1], [0, 0, 1, 1], [], []>} : vector<8x8xbf16>, vector<8x16xbf16>, vector<8x16xf32> -> vector<8x16xf32>
    %341 = vector.extract_strided_slice %294 {offsets = [16, 0], sizes = [16, 32], strides = [1, 1]} : vector<32x32xbf16> to vector<16x32xbf16>
    %342 = arith.truncf %340 : vector<8x16xf32> to vector<8x16xbf16>
    %cst_142 = arith.constant dense<0.000000e+00> : vector<8x32xf32>
    %343 = tpu.matmul %342, %341, %cst_142 {dimension_numbers = #tpu.dot_dimension_numbers<[1], [0], [0], [1], [0, 0, 1, 1], [], []>} : vector<8x16xbf16>, vector<16x32xbf16>, vector<8x32xf32> -> vector<8x32xf32>
    %344 = arith.addf %319, %343 : vector<8x32xf32>
    %345 = vector.extract_strided_slice %50 {offsets = [1, 0], sizes = [1, 8], strides = [1, 1]} : vector<2x8xf32> to vector<1x8xf32>
    %346 = vector.extract_strided_slice %276 {offsets = [8, 0], sizes = [8, 16], strides = [1, 1]} : vector<16x32xf32> to vector<8x16xf32>
    %347 = vector.extract_strided_slice %284 {offsets = [8, 0], sizes = [8, 16], strides = [1, 1]} : vector<16x32xf32> to vector<8x16xf32>
    %348 = vector.extract_strided_slice %292 {offsets = [8, 0], sizes = [8, 16], strides = [1, 1]} : vector<16x32xf32> to vector<8x16xf32>
    %349 = arith.truncf %346 : vector<8x16xf32> to vector<8x16xbf16>
    %350 = arith.truncf %347 : vector<8x16xf32> to vector<8x16xbf16>
    %cst_143 = arith.constant dense<0.000000e+00> : vector<8x8xf32>
    %351 = tpu.matmul %349, %350, %cst_143 {dimension_numbers = #tpu.dot_dimension_numbers<[1], [1], [0], [0], [0, 0, 1, 0], [], []>} : vector<8x16xbf16>, vector<8x16xbf16>, vector<8x8xf32> -> vector<8x8xf32>
    %352 = vector.broadcast %345 : vector<1x8xf32> to vector<8x8xf32>
    %353 = arith.addf %351, %352 : vector<8x8xf32>
    %cst_144 = arith.constant dense<0xFF800000> : vector<8xf32>
    %354 = vector.multi_reduction <maximumf>, %353, %cst_144 [1] : vector<8x8xf32> to vector<8xf32>
    %355 = vector.shape_cast %354 : vector<8xf32> to vector<8x1xf32>
    %356 = vector.broadcast %355 : vector<8x1xf32> to vector<8x8xf32>
    %357 = arith.subf %353, %356 : vector<8x8xf32>
    %358 = math.exp %357 : vector<8x8xf32>
    %cst_145 = arith.constant dense<0.000000e+00> : vector<8xf32>
    %359 = vector.multi_reduction <add>, %358, %cst_145 [1] : vector<8x8xf32> to vector<8xf32>
    %360 = vector.shape_cast %359 : vector<8xf32> to vector<8x1xf32>
    %361 = tpu.reciprocal %360 {approx = true} : vector<8x1xf32> -> vector<8x1xf32>
    %362 = vector.broadcast %361 : vector<8x1xf32> to vector<8x8xf32>
    %363 = arith.mulf %358, %362 : vector<8x8xf32>
    %364 = arith.truncf %363 : vector<8x8xf32> to vector<8x8xbf16>
    %365 = arith.truncf %348 : vector<8x16xf32> to vector<8x16xbf16>
    %cst_146 = arith.constant dense<0.000000e+00> : vector<8x16xf32>
    %366 = tpu.matmul %364, %365, %cst_146 {dimension_numbers = #tpu.dot_dimension_numbers<[1], [0], [0], [1], [0, 0, 1, 1], [], []>} : vector<8x8xbf16>, vector<8x16xbf16>, vector<8x16xf32> -> vector<8x16xf32>
    %367 = vector.extract_strided_slice %294 {offsets = [0, 0], sizes = [16, 32], strides = [1, 1]} : vector<32x32xbf16> to vector<16x32xbf16>
    %368 = arith.truncf %366 : vector<8x16xf32> to vector<8x16xbf16>
    %cst_147 = arith.constant dense<0.000000e+00> : vector<8x32xf32>
    %369 = tpu.matmul %368, %367, %cst_147 {dimension_numbers = #tpu.dot_dimension_numbers<[1], [0], [0], [1], [0, 0, 1, 1], [], []>} : vector<8x16xbf16>, vector<16x32xbf16>, vector<8x32xf32> -> vector<8x32xf32>
    %370 = vector.extract_strided_slice %276 {offsets = [8, 16], sizes = [8, 16], strides = [1, 1]} : vector<16x32xf32> to vector<8x16xf32>
    %371 = vector.extract_strided_slice %284 {offsets = [8, 16], sizes = [8, 16], strides = [1, 1]} : vector<16x32xf32> to vector<8x16xf32>
    %372 = vector.extract_strided_slice %292 {offsets = [8, 16], sizes = [8, 16], strides = [1, 1]} : vector<16x32xf32> to vector<8x16xf32>
    %373 = arith.truncf %370 : vector<8x16xf32> to vector<8x16xbf16>
    %374 = arith.truncf %371 : vector<8x16xf32> to vector<8x16xbf16>
    %cst_148 = arith.constant dense<0.000000e+00> : vector<8x8xf32>
    %375 = tpu.matmul %373, %374, %cst_148 {dimension_numbers = #tpu.dot_dimension_numbers<[1], [1], [0], [0], [0, 0, 1, 0], [], []>} : vector<8x16xbf16>, vector<8x16xbf16>, vector<8x8xf32> -> vector<8x8xf32>
    %376 = vector.broadcast %345 : vector<1x8xf32> to vector<8x8xf32>
    %377 = arith.addf %375, %376 : vector<8x8xf32>
    %cst_149 = arith.constant dense<0xFF800000> : vector<8xf32>
    %378 = vector.multi_reduction <maximumf>, %377, %cst_149 [1] : vector<8x8xf32> to vector<8xf32>
    %379 = vector.shape_cast %378 : vector<8xf32> to vector<8x1xf32>
    %380 = vector.broadcast %379 : vector<8x1xf32> to vector<8x8xf32>
    %381 = arith.subf %377, %380 : vector<8x8xf32>
    %382 = math.exp %381 : vector<8x8xf32>
    %cst_150 = arith.constant dense<0.000000e+00> : vector<8xf32>
    %383 = vector.multi_reduction <add>, %382, %cst_150 [1] : vector<8x8xf32> to vector<8xf32>
    %384 = vector.shape_cast %383 : vector<8xf32> to vector<8x1xf32>
    %385 = tpu.reciprocal %384 {approx = true} : vector<8x1xf32> -> vector<8x1xf32>
    %386 = vector.broadcast %385 : vector<8x1xf32> to vector<8x8xf32>
    %387 = arith.mulf %382, %386 : vector<8x8xf32>
    %388 = arith.truncf %387 : vector<8x8xf32> to vector<8x8xbf16>
    %389 = arith.truncf %372 : vector<8x16xf32> to vector<8x16xbf16>
    %cst_151 = arith.constant dense<0.000000e+00> : vector<8x16xf32>
    %390 = tpu.matmul %388, %389, %cst_151 {dimension_numbers = #tpu.dot_dimension_numbers<[1], [0], [0], [1], [0, 0, 1, 1], [], []>} : vector<8x8xbf16>, vector<8x16xbf16>, vector<8x16xf32> -> vector<8x16xf32>
    %391 = vector.extract_strided_slice %294 {offsets = [16, 0], sizes = [16, 32], strides = [1, 1]} : vector<32x32xbf16> to vector<16x32xbf16>
    %392 = arith.truncf %390 : vector<8x16xf32> to vector<8x16xbf16>
    %cst_152 = arith.constant dense<0.000000e+00> : vector<8x32xf32>
    %393 = tpu.matmul %392, %391, %cst_152 {dimension_numbers = #tpu.dot_dimension_numbers<[1], [0], [0], [1], [0, 0, 1, 1], [], []>} : vector<8x16xbf16>, vector<16x32xbf16>, vector<8x32xf32> -> vector<8x32xf32>
    %394 = arith.addf %369, %393 : vector<8x32xf32>
    %395 = tpu.concatenate %344, %394 in 0 : vector<8x32xf32>, vector<8x32xf32> -> vector<16x32xf32>
    %c1_153 = arith.constant 1 : index
    %c0_154 = arith.constant 0 : index
    %c0_155 = arith.constant 0 : index
    %396 = vector.load %arg15[%c1_153, %c0_154, %c0_155] : memref<2x1x32xf32, #tpu.memory_space<vmem>>, vector<1x1x32xf32>
    %397 = vector.shape_cast %396 : vector<1x1x32xf32> to vector<1x32xf32>
    %398 = vector.broadcast %397 : vector<1x32xf32> to vector<16x32xf32>
    %399 = arith.addf %395, %398 : vector<16x32xf32>
    %400 = arith.addf %268, %399 : vector<16x32xf32>
    %c1_156 = arith.constant 1 : index
    %c0_157 = arith.constant 0 : index
    %c0_158 = arith.constant 0 : index
    %401 = vector.load %arg16[%c1_156, %c0_157, %c0_158] : memref<2x1x32xf32, #tpu.memory_space<vmem>>, vector<1x1x32xf32>
    %402 = vector.shape_cast %401 : vector<1x1x32xf32> to vector<1x32xf32>
    %c1_159 = arith.constant 1 : index
    %c0_160 = arith.constant 0 : index
    %c0_161 = arith.constant 0 : index
    %403 = vector.load %arg17[%c1_159, %c0_160, %c0_161] : memref<2x1x32xf32, #tpu.memory_space<vmem>>, vector<1x1x32xf32>
    %404 = vector.shape_cast %403 : vector<1x1x32xf32> to vector<1x32xf32>
    %cst_162 = arith.constant dense<0.000000e+00> : vector<16xf32>
    %405 = vector.multi_reduction <add>, %400, %cst_162 [1] : vector<16x32xf32> to vector<16xf32>
    %406 = vector.shape_cast %405 : vector<16xf32> to vector<16x1xf32>
    %cst_163 = arith.constant 3.200000e+01 : f32
    %407 = vector.broadcast %cst_163 : f32 to vector<16x1xf32>
    %408 = arith.divf %406, %407 : vector<16x1xf32>
    %409 = vector.broadcast %408 : vector<16x1xf32> to vector<16x32xf32>
    %410 = arith.subf %400, %409 : vector<16x32xf32>
    %411 = vector.broadcast %408 : vector<16x1xf32> to vector<16x32xf32>
    %412 = arith.subf %400, %411 : vector<16x32xf32>
    %413 = arith.mulf %410, %412 : vector<16x32xf32>
    %cst_164 = arith.constant dense<0.000000e+00> : vector<16xf32>
    %414 = vector.multi_reduction <add>, %413, %cst_164 [1] : vector<16x32xf32> to vector<16xf32>
    %415 = vector.shape_cast %414 : vector<16xf32> to vector<16x1xf32>
    %cst_165 = arith.constant 3.200000e+01 : f32
    %416 = vector.broadcast %cst_165 : f32 to vector<16x1xf32>
    %417 = arith.divf %415, %416 : vector<16x1xf32>
    %418 = vector.broadcast %408 : vector<16x1xf32> to vector<16x32xf32>
    %419 = arith.subf %400, %418 : vector<16x32xf32>
    %cst_166 = arith.constant 9.99999996E-13 : f32
    %420 = vector.broadcast %cst_166 : f32 to vector<16x1xf32>
    %421 = arith.addf %417, %420 : vector<16x1xf32>
    %422 = math.rsqrt %421 : vector<16x1xf32>
    %423 = vector.broadcast %422 : vector<16x1xf32> to vector<16x32xf32>
    %424 = arith.mulf %419, %423 : vector<16x32xf32>
    %425 = vector.broadcast %402 : vector<1x32xf32> to vector<16x32xf32>
    %426 = arith.mulf %424, %425 : vector<16x32xf32>
    %427 = vector.broadcast %404 : vector<1x32xf32> to vector<16x32xf32>
    %428 = arith.addf %426, %427 : vector<16x32xf32>
    %c1_167 = arith.constant 1 : index
    %c0_168 = arith.constant 0 : index
    %c0_169 = arith.constant 0 : index
    %429 = vector.load %arg18[%c1_167, %c0_168, %c0_169] : memref<2x32x64xbf16, #tpu.memory_space<vmem>>, vector<1x32x64xbf16>
    %430 = vector.shape_cast %429 : vector<1x32x64xbf16> to vector<32x64xbf16>
    %431 = arith.truncf %428 : vector<16x32xf32> to vector<16x32xbf16>
    %cst_170 = arith.constant dense<0.000000e+00> : vector<16x64xf32>
    %432 = tpu.matmul %431, %430, %cst_170 {dimension_numbers = #tpu.dot_dimension_numbers<[1], [0], [0], [1], [0, 0, 1, 1], [], []>} : vector<16x32xbf16>, vector<32x64xbf16>, vector<16x64xf32> -> vector<16x64xf32>
    %c1_171 = arith.constant 1 : index
    %c0_172 = arith.constant 0 : index
    %c0_173 = arith.constant 0 : index
    %433 = vector.load %arg19[%c1_171, %c0_172, %c0_173] : memref<2x1x64xf32, #tpu.memory_space<vmem>>, vector<1x1x64xf32>
    %434 = vector.shape_cast %433 : vector<1x1x64xf32> to vector<1x64xf32>
    %435 = vector.broadcast %434 : vector<1x64xf32> to vector<16x64xf32>
    %436 = arith.addf %432, %435 : vector<16x64xf32>
    %cst_174 = arith.constant 5.000000e-01 : f32
    %437 = vector.broadcast %cst_174 : f32 to vector<16x64xf32>
    %438 = arith.mulf %437, %436 : vector<16x64xf32>
    %cst_175 = arith.constant 4.471500e-02 : f32
    %439 = vector.broadcast %cst_175 : f32 to vector<16x64xf32>
    %440 = arith.mulf %439, %436 : vector<16x64xf32>
    %441 = arith.mulf %440, %436 : vector<16x64xf32>
    %442 = arith.mulf %441, %436 : vector<16x64xf32>
    %443 = arith.addf %436, %442 : vector<16x64xf32>
    %cst_176 = arith.constant 0.797884583 : f32
    %444 = vector.broadcast %cst_176 : f32 to vector<16x64xf32>
    %445 = arith.mulf %444, %443 : vector<16x64xf32>
    %446 = math.tanh %445 : vector<16x64xf32>
    %cst_177 = arith.constant 1.000000e+00 : f32
    %447 = vector.broadcast %cst_177 : f32 to vector<16x64xf32>
    %448 = arith.addf %447, %446 : vector<16x64xf32>
    %449 = arith.mulf %438, %448 : vector<16x64xf32>
    %c1_178 = arith.constant 1 : index
    %c0_179 = arith.constant 0 : index
    %c0_180 = arith.constant 0 : index
    %450 = vector.load %arg20[%c1_178, %c0_179, %c0_180] : memref<2x64x32xbf16, #tpu.memory_space<vmem>>, vector<1x64x32xbf16>
    %451 = vector.shape_cast %450 : vector<1x64x32xbf16> to vector<64x32xbf16>
    %452 = arith.truncf %449 : vector<16x64xf32> to vector<16x64xbf16>
    %cst_181 = arith.constant dense<0.000000e+00> : vector<16x32xf32>
    %453 = tpu.matmul %452, %451, %cst_181 {dimension_numbers = #tpu.dot_dimension_numbers<[1], [0], [0], [1], [0, 0, 1, 1], [], []>} : vector<16x64xbf16>, vector<64x32xbf16>, vector<16x32xf32> -> vector<16x32xf32>
    %c1_182 = arith.constant 1 : index
    %c0_183 = arith.constant 0 : index
    %c0_184 = arith.constant 0 : index
    %454 = vector.load %arg21[%c1_182, %c0_183, %c0_184] : memref<2x1x32xf32, #tpu.memory_space<vmem>>, vector<1x1x32xf32>
    %455 = vector.shape_cast %454 : vector<1x1x32xf32> to vector<1x32xf32>
    %456 = vector.broadcast %455 : vector<1x32xf32> to vector<16x32xf32>
    %457 = arith.addf %453, %456 : vector<16x32xf32>
    %458 = arith.addf %428, %457 : vector<16x32xf32>
    %c1_185 = arith.constant 1 : index
    %c0_186 = arith.constant 0 : index
    %c0_187 = arith.constant 0 : index
    %459 = vector.load %arg22[%c1_185, %c0_186, %c0_187] : memref<2x1x32xf32, #tpu.memory_space<vmem>>, vector<1x1x32xf32>
    %460 = vector.shape_cast %459 : vector<1x1x32xf32> to vector<1x32xf32>
    %c1_188 = arith.constant 1 : index
    %c0_189 = arith.constant 0 : index
    %c0_190 = arith.constant 0 : index
    %461 = vector.load %arg23[%c1_188, %c0_189, %c0_190] : memref<2x1x32xf32, #tpu.memory_space<vmem>>, vector<1x1x32xf32>
    %462 = vector.shape_cast %461 : vector<1x1x32xf32> to vector<1x32xf32>
    %cst_191 = arith.constant dense<0.000000e+00> : vector<16xf32>
    %463 = vector.multi_reduction <add>, %458, %cst_191 [1] : vector<16x32xf32> to vector<16xf32>
    %464 = vector.shape_cast %463 : vector<16xf32> to vector<16x1xf32>
    %cst_192 = arith.constant 3.200000e+01 : f32
    %465 = vector.broadcast %cst_192 : f32 to vector<16x1xf32>
    %466 = arith.divf %464, %465 : vector<16x1xf32>
    %467 = vector.broadcast %466 : vector<16x1xf32> to vector<16x32xf32>
    %468 = arith.subf %458, %467 : vector<16x32xf32>
    %469 = vector.broadcast %466 : vector<16x1xf32> to vector<16x32xf32>
    %470 = arith.subf %458, %469 : vector<16x32xf32>
    %471 = arith.mulf %468, %470 : vector<16x32xf32>
    %cst_193 = arith.constant dense<0.000000e+00> : vector<16xf32>
    %472 = vector.multi_reduction <add>, %471, %cst_193 [1] : vector<16x32xf32> to vector<16xf32>
    %473 = vector.shape_cast %472 : vector<16xf32> to vector<16x1xf32>
    %cst_194 = arith.constant 3.200000e+01 : f32
    %474 = vector.broadcast %cst_194 : f32 to vector<16x1xf32>
    %475 = arith.divf %473, %474 : vector<16x1xf32>
    %476 = vector.broadcast %466 : vector<16x1xf32> to vector<16x32xf32>
    %477 = arith.subf %458, %476 : vector<16x32xf32>
    %cst_195 = arith.constant 9.99999996E-13 : f32
    %478 = vector.broadcast %cst_195 : f32 to vector<16x1xf32>
    %479 = arith.addf %475, %478 : vector<16x1xf32>
    %480 = math.rsqrt %479 : vector<16x1xf32>
    %481 = vector.broadcast %480 : vector<16x1xf32> to vector<16x32xf32>
    %482 = arith.mulf %477, %481 : vector<16x32xf32>
    %483 = vector.broadcast %460 : vector<1x32xf32> to vector<16x32xf32>
    %484 = arith.mulf %482, %483 : vector<16x32xf32>
    %485 = vector.broadcast %462 : vector<1x32xf32> to vector<16x32xf32>
    %486 = arith.addf %484, %485 : vector<16x32xf32>
    %c0_196 = arith.constant 0 : index
    %c0_197 = arith.constant 0 : index
    %487 = vector.load %arg24[%c0_196, %c0_197] : memref<32x128xbf16, #tpu.memory_space<vmem>>, vector<32x128xbf16>
    %488 = arith.truncf %486 : vector<16x32xf32> to vector<16x32xbf16>
    %cst_198 = arith.constant dense<0.000000e+00> : vector<16x128xf32>
    %489 = tpu.matmul %488, %487, %cst_198 {dimension_numbers = #tpu.dot_dimension_numbers<[1], [0], [0], [1], [0, 0, 1, 1], [], []>} : vector<16x32xbf16>, vector<32x128xbf16>, vector<16x128xf32> -> vector<16x128xf32>
    %c0_199 = arith.constant 0 : index
    %c0_200 = arith.constant 0 : index
    %490 = vector.load %arg25[%c0_199, %c0_200] : memref<1x128xf32, #tpu.memory_space<vmem>>, vector<1x128xf32>
    %491 = vector.broadcast %490 : vector<1x128xf32> to vector<16x128xf32>
    %492 = arith.addf %489, %491 : vector<16x128xf32>
    %c0_201 = arith.constant 0 : index
    %c0_202 = arith.constant 0 : index
    %493 = vector.load %arg26[%c0_201, %c0_202] : memref<16x128xf32, #tpu.memory_space<vmem>>, vector<16x128xf32>
    tpu.vector_store %arg26[%c0_201, %c0_202], %492 {strides = array<i32>} : memref<16x128xf32, #tpu.memory_space<vmem>>, vector<16x128xf32>,
    return
  }
}

</mosaic_0001>

<llo_original>
// kernel: bert_classifier_forward.1
$region0: #{bert_classifier_forward.1}
  #allocation0 [shape = 'u32[]', space=smem, size = 0x4, offset = 0x4, fixed_abs, tag = 'smem constant byte address 0x4 - core index']
  #allocation1 [shape = 'u32[144,128]{1,0:T(1,128)}', space=vmem, size = 0x12000, scoped, tag = 'internal scratch']
  %s0 = inlined_call_operand.vmem [shape: s32[16,1], index: 0, kind: input, shape index: {}]
  %s1 = inlined_call_operand.vmem [shape: s32[16,1], index: 1, kind: input, shape index: {}]
  %s2 = inlined_call_operand.vmem [shape: s32[2,8], index: 2, kind: input, shape index: {}]
  %s3 = inlined_call_operand.vmem [shape: f32[128,32], index: 3, kind: input, shape index: {}]
  %s4 = inlined_call_operand.vmem [shape: f32[8,32], index: 4, kind: input, shape index: {}]
  %s5 = inlined_call_operand.vmem [shape: f32[16,32], index: 5, kind: input, shape index: {}]
  %s6 = inlined_call_operand.vmem [shape: f32[1,32], index: 6, kind: input, shape index: {}]
  %s7 = inlined_call_operand.vmem [shape: f32[1,32], index: 7, kind: input, shape index: {}]
  %s8 = inlined_call_operand.vmem [shape: bf16[2,32,32], index: 8, kind: input, shape index: {}]
  %s9 = inlined_call_operand.vmem [shape: f32[2,1,32], index: 9, kind: input, shape index: {}]
  %s10 = inlined_call_operand.vmem [shape: bf16[2,32,32], index: 10, kind: input, shape index: {}]
  %s11 = inlined_call_operand.vmem [shape: f32[2,1,32], index: 11, kind: input, shape index: {}]
  %s12 = inlined_call_operand.vmem [shape: bf16[2,32,32], index: 12, kind: input, shape index: {}]
  %s13 = inlined_call_operand.vmem [shape: f32[2,1,32], index: 13, kind: input, shape index: {}]
  %s14 = inlined_call_operand.vmem [shape: bf16[2,32,32], index: 14, kind: input, shape index: {}]
  %s15 = inlined_call_operand.vmem [shape: f32[2,1,32], index: 15, kind: input, shape index: {}]
  %s16 = inlined_call_operand.vmem [shape: f32[2,1,32], index: 16, kind: input, shape index: {}]
  %s17 = inlined_call_operand.vmem [shape: f32[2,1,32], index: 17, kind: input, shape index: {}]
  %s18 = inlined_call_operand.vmem [shape: bf16[2,32,64], index: 18, kind: input, shape index: {}]
  %s19 = inlined_call_operand.vmem [shape: f32[2,1,64], index: 19, kind: input, shape index: {}]
  %s20 = inlined_call_operand.vmem [shape: bf16[2,64,32], index: 20, kind: input, shape index: {}]
  %s21 = inlined_call_operand.vmem [shape: f32[2,1,32], index: 21, kind: input, shape index: {}]
  %s22 = inlined_call_operand.vmem [shape: f32[2,1,32], index: 22, kind: input, shape index: {}]
  %s23 = inlined_call_operand.vmem [shape: f32[2,1,32], index: 23, kind: input, shape index: {}]
  %s24 = inlined_call_operand.vmem [shape: bf16[32,128], index: 24, kind: input, shape index: {}]
  %s25 = inlined_call_operand.vmem [shape: f32[1,128], index: 25, kind: input, shape index: {}]
  %s26 = inlined_call_operand.vmem [shape: f32[16,128], index: 26, kind: output, shape index: {}]
  %s27 = sld [smem:[#allocation0]]
  $region114: #{bert_classifier_forward.1} parent=0
    _
  %s29 = ssub.s32 1, %s27
  %s30 = scalar_select 0, %s29, %s27
  // Predicated region
  $region2: #{bert_classifier_forward.1} parent=0 // pred_check
    _
  $region3: #{bert_classifier_forward.1} parent=0 // pred_check_branch
    %32 = sbr.rel (0) target = $region5
  $region4: #{bert_classifier_forward.1} parent=0 // pred_region
    _
  $region5: #{bert_classifier_forward.1} parent=0 // pred_fallthru
    _
  // Predicated region
  $region6: #{bert_classifier_forward.1} parent=0 // pred_check
    _
  $region7: #{bert_classifier_forward.1} parent=0 // pred_check_branch
    %34 = sbr.rel (0) target = $region9
  $region8: #{bert_classifier_forward.1} parent=0 // pred_region
    _
  $region9: #{bert_classifier_forward.1} parent=0 // pred_fallthru
    _
  // Predicated region
  $region10: #{bert_classifier_forward.1} parent=0 // pred_check
    _
  $region11: #{bert_classifier_forward.1} parent=0 // pred_check_branch
    %36 = sbr.rel (0) target = $region13
  $region12: #{bert_classifier_forward.1} parent=0 // pred_region
    _
  $region13: #{bert_classifier_forward.1} parent=0 // pred_fallthru
    _
  // Predicated region
  $region14: #{bert_classifier_forward.1} parent=0 // pred_check
    _
  $region15: #{bert_classifier_forward.1} parent=0 // pred_check_branch
    %38 = sbr.rel (0) target = $region17
  $region16: #{bert_classifier_forward.1} parent=0 // pred_region
    _
  $region17: #{bert_classifier_forward.1} parent=0 // pred_fallthru
    _
  // Predicated region
  $region18: #{bert_classifier_forward.1} parent=0 // pred_check
    _
  $region19: #{bert_classifier_forward.1} parent=0 // pred_check_branch
    %40 = sbr.rel (0) target = $region21
  $region20: #{bert_classifier_forward.1} parent=0 // pred_region
    _
  $region21: #{bert_classifier_forward.1} parent=0 // pred_fallthru
    _
  // Predicated region
  $region22: #{bert_classifier_forward.1} parent=0 // pred_check
    _
  $region23: #{bert_classifier_forward.1} parent=0 // pred_check_branch
    %42 = sbr.rel (0) target = $region25
  $region24: #{bert_classifier_forward.1} parent=0 // pred_region
    _
  $region25: #{bert_classifier_forward.1} parent=0 // pred_fallthru
    _
  // Predicated region
  $region26: #{bert_classifier_forward.1} parent=0 // pred_check
    _
  $region27: #{bert_classifier_forward.1} parent=0 // pred_check_branch
    %44 = sbr.rel (0) target = $region29
  $region28: #{bert_classifier_forward.1} parent=0 // pred_region
    _
  $region29: #{bert_classifier_forward.1} parent=0 // pred_fallthru
    _
  // Predicated region
  $region30: #{bert_classifier_forward.1} parent=0 // pred_check
    _
  $region31: #{bert_classifier_forward.1} parent=0 // pred_check_branch
    %46 = sbr.rel (0) target = $region33
  $region32: #{bert_classifier_forward.1} parent=0 // pred_region
    _
  $region33: #{bert_classifier_forward.1} parent=0 // pred_fallthru
    _
  // Predicated region
  $region34: #{bert_classifier_forward.1} parent=0 // pred_check
    _
  $region35: #{bert_classifier_forward.1} parent=0 // pred_check_branch
    %48 = sbr.rel (0) target = $region37
  $region36: #{bert_classifier_forward.1} parent=0 // pred_region
    _
  $region37: #{bert_classifier_forward.1} parent=0 // pred_fallthru
    _
  // Predicated region
  $region38: #{bert_classifier_forward.1} parent=0 // pred_check
    _
  $region39: #{bert_classifier_forward.1} parent=0 // pred_check_branch
    %50 = sbr.rel (0) target = $region41
  $region40: #{bert_classifier_forward.1} parent=0 // pred_region
    _
  $region41: #{bert_classifier_forward.1} parent=0 // pred_fallthru
    _
  // Predicated region
  $region42: #{bert_classifier_forward.1} parent=0 // pred_check
    _
  $region43: #{bert_classifier_forward.1} parent=0 // pred_check_branch
    %52 = sbr.rel (0) target = $region45
  $region44: #{bert_classifier_forward.1} parent=0 // pred_region
    _
  $region45: #{bert_classifier_forward.1} parent=0 // pred_fallthru
    _
  // Predicated region
  $region46: #{bert_classifier_forward.1} parent=0 // pred_check
    _
  $region47: #{bert_classifier_forward.1} parent=0 // pred_check_branch
    %54 = sbr.rel (0) target = $region49
  $region48: #{bert_classifier_forward.1} parent=0 // pred_region
    _
  $region49: #{bert_classifier_forward.1} parent=0 // pred_fallthru
    _
  // Predicated region
  $region50: #{bert_classifier_forward.1} parent=0 // pred_check
    _
  $region51: #{bert_classifier_forward.1} parent=0 // pred_check_branch
    %56 = sbr.rel (0) target = $region53
  $region52: #{bert_classifier_forward.1} parent=0 // pred_region
    _
  $region53: #{bert_classifier_forward.1} parent=0 // pred_fallthru
    _
  // Predicated region
  $region54: #{bert_classifier_forward.1} parent=0 // pred_check
    _
  $region55: #{bert_classifier_forward.1} parent=0 // pred_check_branch
    %58 = sbr.rel (0) target = $region57
  $region56: #{bert_classifier_forward.1} parent=0 // pred_region
    _
  $region57: #{bert_classifier_forward.1} parent=0 // pred_fallthru
    _
  // Predicated region
  $region58: #{bert_classifier_forward.1} parent=0 // pred_check
    _
  $region59: #{bert_classifier_forward.1} parent=0 // pred_check_branch
    %60 = sbr.rel (0) target = $region61
  $region60: #{bert_classifier_forward.1} parent=0 // pred_region
    _
  $region61: #{bert_classifier_forward.1} parent=0 // pred_fallthru
    _
  // Predicated region
  $region62: #{bert_classifier_forward.1} parent=0 // pred_check
    _
  $region63: #{bert_classifier_forward.1} parent=0 // pred_check_branch
    %62 = sbr.rel (0) target = $region65
  $region64: #{bert_classifier_forward.1} parent=0 // pred_region
    _
  $region65: #{bert_classifier_forward.1} parent=0 // pred_fallthru
    _
  // Predicated region
  $region66: #{bert_classifier_forward.1} parent=0 // pred_check
    _
  $region67: #{bert_classifier_forward.1} parent=0 // pred_check_branch
    %64 = sbr.rel (0) target = $region69
  $region68: #{bert_classifier_forward.1} parent=0 // pred_region
    _
  $region69: #{bert_classifier_forward.1} parent=0 // pred_fallthru
    _
  // Predicated region
  $region70: #{bert_classifier_forward.1} parent=0 // pred_check
    _
  $region71: #{bert_classifier_forward.1} parent=0 // pred_check_branch
    %66 = sbr.rel (0) target = $region73
  $region72: #{bert_classifier_forward.1} parent=0 // pred_region
    _
  $region73: #{bert_classifier_forward.1} parent=0 // pred_fallthru
    _
  // Predicated region
  $region74: #{bert_classifier_forward.1} parent=0 // pred_check
    _
  $region75: #{bert_classifier_forward.1} parent=0 // pred_check_branch
    %68 = sbr.rel (0) target = $region77
  $region76: #{bert_classifier_forward.1} parent=0 // pred_region
    _
  $region77: #{bert_classifier_forward.1} parent=0 // pred_fallthru
    _
  // Predicated region
  $region78: #{bert_classifier_forward.1} parent=0 // pred_check
    _
  $region79: #{bert_classifier_forward.1} parent=0 // pred_check_branch
    %70 = sbr.rel (0) target = $region81
  $region80: #{bert_classifier_forward.1} parent=0 // pred_region
    _
  $region81: #{bert_classifier_forward.1} parent=0 // pred_fallthru
    _
  // Predicated region
  $region82: #{bert_classifier_forward.1} parent=0 // pred_check
    _
  $region83: #{bert_classifier_forward.1} parent=0 // pred_check_branch
    %72 = sbr.rel (0) target = $region85
  $region84: #{bert_classifier_forward.1} parent=0 // pred_region
    _
  $region85: #{bert_classifier_forward.1} parent=0 // pred_fallthru
    _
  // Predicated region
  $region86: #{bert_classifier_forward.1} parent=0 // pred_check
    _
  $region87: #{bert_classifier_forward.1} parent=0 // pred_check_branch
    %74 = sbr.rel (0) target = $region89
  $region88: #{bert_classifier_forward.1} parent=0 // pred_region
    _
  $region89: #{bert_classifier_forward.1} parent=0 // pred_fallthru
    _
  // Predicated region
  $region90: #{bert_classifier_forward.1} parent=0 // pred_check
    _
  $region91: #{bert_classifier_forward.1} parent=0 // pred_check_branch
    %76 = sbr.rel (0) target = $region93
  $region92: #{bert_classifier_forward.1} parent=0 // pred_region
    _
  $region93: #{bert_classifier_forward.1} parent=0 // pred_fallthru
    _
  // Predicated region
  $region94: #{bert_classifier_forward.1} parent=0 // pred_check
    _
  $region95: #{bert_classifier_forward.1} parent=0 // pred_check_branch
    %78 = sbr.rel (0) target = $region97
  $region96: #{bert_classifier_forward.1} parent=0 // pred_region
    _
  $region97: #{bert_classifier_forward.1} parent=0 // pred_fallthru
    _
  // Predicated region
  $region98: #{bert_classifier_forward.1} parent=0 // pred_check
    _
  $region99: #{bert_classifier_forward.1} parent=0 // pred_check_branch
    %80 = sbr.rel (0) target = $region101
  $region100: #{bert_classifier_forward.1} parent=0 // pred_region
    _
  $region101: #{bert_classifier_forward.1} parent=0 // pred_fallthru
    _
  // Predicated region
  $region102: #{bert_classifier_forward.1} parent=0 // pred_check
    _
  $region103: #{bert_classifier_forward.1} parent=0 // pred_check_branch
    %82 = sbr.rel (0) target = $region105
  $region104: #{bert_classifier_forward.1} parent=0 // pred_region
    _
  $region105: #{bert_classifier_forward.1} parent=0 // pred_fallthru
    _
  %v84 = vld [vmem:[%s0] sm:$0xff]
  %v85 = vld [vmem:[%s0 + $0x8] sm:$0xff]
  %v86 = vld [vmem:[%s1] sm:$0xff]
  %v87 = vld [vmem:[%s1 + $0x8] sm:$0xff]
  %v88 = vlaneseq
  %v89 = vand.u32 %v88, 127
  %90 = vset.pattern.permute.xlu0 0
  %91 = vperm.xlu0 %90, %v84
  %v92 = vpop.permute.xlu0 %91
  %93 = vset.pattern.permute.xlu0 0
  %94 = vperm.xlu0 %93, %v85
  %v95 = vpop.permute.xlu0 %94
  %vm96 = vcmp.eq.s32.totalorder %v89, %v92
  %vm97 = vcmp.eq.s32.totalorder %v89, %v95
  %v98 = vsel %vm96, 1, 0
  %v99 = vsel %vm97, 1, 0
  %v100 = vcvt.s32.f32 %v98
  %v101 = vcvt.s32.f32 %v99
  %102 = vset.pattern.permute.xlu0 0
  %103 = vperm.xlu0 %102, %v86
  %v104 = vpop.permute.xlu0 %103
  %105 = vset.pattern.permute.xlu0 0
  %106 = vperm.xlu0 %105, %v87
  %v107 = vpop.permute.xlu0 %106
  %vm108 = vcmp.eq.s32.totalorder %v89, %v104
  %vm109 = vcmp.eq.s32.totalorder %v89, %v107
  %v110 = vsel %vm108, 1, 0
  %v111 = vsel %vm109, 1, 0
  %v112 = vcvt.s32.f32 %v110
  %v113 = vcvt.s32.f32 %v111
  %v114 = vld [vmem:[%s3] sm:$0xff]
  %v115 = vld [vmem:[%s3 + $0x8] sm:$0xff]
  %v116 = vld [vmem:[%s3 + $0x10] sm:$0xff]
  %v117 = vld [vmem:[%s3 + $0x18] sm:$0xff]
  %v118 = vld [vmem:[%s3 + $0x20] sm:$0xff]
  %v119 = vld [vmem:[%s3 + $0x28] sm:$0xff]
  %v120 = vld [vmem:[%s3 + $0x30] sm:$0xff]
  %v121 = vld [vmem:[%s3 + $0x38] sm:$0xff]
  %v122 = vld [vmem:[%s3 + $0x40] sm:$0xff]
  %v123 = vld [vmem:[%s3 + $0x48] sm:$0xff]
  %v124 = vld [vmem:[%s3 + $0x50] sm:$0xff]
  %v125 = vld [vmem:[%s3 + $0x58] sm:$0xff]
  %v126 = vld [vmem:[%s3 + $0x60] sm:$0xff]
  %v127 = vld [vmem:[%s3 + $0x68] sm:$0xff]
  %v128 = vld [vmem:[%s3 + $0x70] sm:$0xff]
  %v129 = vld [vmem:[%s3 + $0x78] sm:$0xff]
  %v130 = vld [vmem:[%s4] sm:$0xff]
  %vm131 = vcmask 64512
  %v133 = vsel %vm131, %v112, 0
  %v136 = vsel %vm131, %v113, 0
  %138 = vmatprep.subr.mxu0 0.0
  %139 = vmatpush1.msra.mxu0 %v130
  %140 = vmatprep.subr.mxu0 0.0
  %141 = vmatpush1.msra.mxu0 0.0
  %142 = vmatprep.subr.mxu0 0.0
  %143 = vmatpush1.msra.mxu0 0.0
  %144 = vmatprep.subr.mxu0 0.0
  %145 = vmatpush1.msra.mxu0 0.0
  %146 = vmatprep.subr.mxu0 0.0
  %147 = vmatpush1.msra.mxu0 0.0
  %148 = vmatprep.subr.mxu0 0.0
  %149 = vmatpush1.msra.mxu0 0.0
  %150 = vmatprep.subr.mxu0 0.0
  %151 = vmatpush1.msra.mxu0 0.0
  %152 = vmatprep.subr.mxu0 0.0
  %153 = vmatpush1.msra.mxu0 0.0
  %154 = vmatprep.subr.mxu0 0.0
  %155 = vmatpush1.msra.mxu0 0.0
  %156 = vmatprep.subr.mxu0 0.0
  %157 = vmatpush1.msra.mxu0 0.0
  %158 = vmatprep.subr.mxu0 0.0
  %159 = vmatpush1.msra.mxu0 0.0
  %160 = vmatprep.subr.mxu0 0.0
  %161 = vmatpush1.msra.mxu0 0.0
  %162 = vmatprep.subr.mxu0 0.0
  %163 = vmatpush1.msra.mxu0 0.0
  %164 = vmatprep.subr.mxu0 0.0
  %165 = vmatpush1.msra.mxu0 0.0
  %166 = vmatprep.subr.mxu0 0.0
  %167 = vmatpush1.msra.mxu0 0.0
  %168 = vmatprep.subr.mxu0 0.0
  %169 = vmatpush1.msra.mxu0 0.0
  %170 = vmatprep.subr.mxu0 0.0
  %171 = vmatpush1.msra.mxu0 0.0
  %172 = vmatprep.subr.mxu0 0.0
  %173 = vmatpush1.msra.mxu0 0.0
  %174 = vmatprep.subr.mxu0 0.0
  %175 = vmatpush1.msra.mxu0 0.0
  %176 = vmatprep.subr.mxu0 0.0
  %177 = vmatpush1.msra.mxu0 0.0
  %178 = vmatprep.subr.mxu0 0.0
  %179 = vmatpush1.msra.mxu0 0.0
  %180 = vmatprep.subr.mxu0 0.0
  %181 = vmatpush1.msra.mxu0 0.0
  %182 = vmatprep.subr.mxu0 0.0
  %183 = vmatpush1.msra.mxu0 0.0
  %184 = vmatprep.subr.mxu0 0.0
  %185 = vmatpush1.msra.mxu0 0.0
  %186 = vmatprep.subr.mxu0 0.0
  %187 = vmatpush1.msra.mxu0 0.0
  %188 = vmatprep.subr.mxu0 0.0
  %189 = vmatpush1.msra.mxu0 0.0
  %190 = vmatprep.subr.mxu0 0.0
  %191 = vmatpush1.msra.mxu0 0.0
  %192 = vmatprep.subr.mxu0 0.0
  %193 = vmatpush1.msra.mxu0 0.0
  %194 = vmatprep.subr.mxu0 0.0
  %195 = vmatpush1.msra.mxu0 0.0
  %196 = vmatprep.subr.mxu0 0.0
  %197 = vmatpush1.msra.mxu0 0.0
  %198 = vmatprep.subr.mxu0 0.0
  %199 = vmatpush1.msra.mxu0 0.0
  %200 = vmatprep.subr.mxu0 0.0
  %201 = vmatpush1.msra.mxu0 0.0
  %202 = vmatprep.mubr.f32.mxu0 0.0
  %203 = vmatmul.mubr.f32.gmra.mrb[0].mxu0 %v133
  %v204 = vpop.f32.mrb[0].mxu0
  %v205 = vadd.f32 0.0, %v204
  %v206 = vpop.f32.mrb[0].mxu0
  %207 = vmatprep.mubr.f32.mxu0 0.0
  %208 = vmatmul.mubr.f32.gmra.mrb[0].mxu0 %v136
  %v209 = vpop.f32.mrb[0].mxu0
  %v210 = vadd.f32 0.0, %v209
  %v211 = vpop.f32.mrb[0].mxu0
  %212 = vdwg.mxu0
  %213 = vmatprep.subr.mxu0 0.0
  %214 = vmatpush1.msra.mxu0 %v114
  %215 = vmatprep.subr.mxu0 0.0
  %216 = vmatpush1.msra.mxu0 %v115
  %217 = vmatprep.subr.mxu0 0.0
  %218 = vmatpush1.msra.mxu0 %v116
  %219 = vmatprep.subr.mxu0 0.0
  %220 = vmatpush1.msra.mxu0 %v117
  %221 = vmatprep.subr.mxu0 0.0
  %222 = vmatpush1.msra.mxu0 %v118
  %223 = vmatprep.subr.mxu0 0.0
  %224 = vmatpush1.msra.mxu0 %v119
  %225 = vmatprep.subr.mxu0 0.0
  %226 = vmatpush1.msra.mxu0 %v120
  %227 = vmatprep.subr.mxu0 0.0
  %228 = vmatpush1.msra.mxu0 %v121
  %229 = vmatprep.subr.mxu0 0.0
  %230 = vmatpush1.msra.mxu0 %v122
  %231 = vmatprep.subr.mxu0 0.0
  %232 = vmatpush1.msra.mxu0 %v123
  %233 = vmatprep.subr.mxu0 0.0
  %234 = vmatpush1.msra.mxu0 %v124
  %235 = vmatprep.subr.mxu0 0.0
  %236 = vmatpush1.msra.mxu0 %v125
  %237 = vmatprep.subr.mxu0 0.0
  %238 = vmatpush1.msra.mxu0 %v126
  %239 = vmatprep.subr.mxu0 0.0
  %240 = vmatpush1.msra.mxu0 %v127
  %241 = vmatprep.subr.mxu0 0.0
  %242 = vmatpush1.msra.mxu0 %v128
  %243 = vmatprep.subr.mxu0 0.0
  %244 = vmatpush1.msra.mxu0 %v129
  %245 = vmatprep.subr.mxu0 0.0
  %246 = vmatpush1.msra.mxu0 0.0
  %247 = vmatprep.subr.mxu0 0.0
  %248 = vmatpush1.msra.mxu0 0.0
  %249 = vmatprep.subr.mxu0 0.0
  %250 = vmatpush1.msra.mxu0 0.0
  %251 = vmatprep.subr.mxu0 0.0
  %252 = vmatpush1.msra.mxu0 0.0
  %253 = vmatprep.subr.mxu0 0.0
  %254 = vmatpush1.msra.mxu0 0.0
  %255 = vmatprep.subr.mxu0 0.0
  %256 = vmatpush1.msra.mxu0 0.0
  %257 = vmatprep.subr.mxu0 0.0
  %258 = vmatpush1.msra.mxu0 0.0
  %259 = vmatprep.subr.mxu0 0.0
  %260 = vmatpush1.msra.mxu0 0.0
  %261 = vmatprep.subr.mxu0 0.0
  %262 = vmatpush1.msra.mxu0 0.0
  %263 = vmatprep.subr.mxu0 0.0
  %264 = vmatpush1.msra.mxu0 0.0
  %265 = vmatprep.subr.mxu0 0.0
  %266 = vmatpush1.msra.mxu0 0.0
  %267 = vmatprep.subr.mxu0 0.0
  %268 = vmatpush1.msra.mxu0 0.0
  %269 = vmatprep.subr.mxu0 0.0
  %270 = vmatpush1.msra.mxu0 0.0
  %271 = vmatprep.subr.mxu0 0.0
  %272 = vmatpush1.msra.mxu0 0.0
  %273 = vmatprep.subr.mxu0 0.0
  %274 = vmatpush1.msra.mxu0 0.0
  %275 = vmatprep.subr.mxu0 0.0
  %276 = vmatpush1.msra.mxu0 0.0
  %277 = vmatprep.mubr.f32.mxu0 0.0
  %278 = vmatmul.mubr.f32.gmra.mrb[0].mxu0 %v100
  %v279 = vpop.f32.mrb[0].mxu0
  %v280 = vadd.f32 %v205, %v279
  %v281 = vpop.f32.mrb[0].mxu0
  %282 = vmatprep.mubr.f32.mxu0 0.0
  %283 = vmatmul.mubr.f32.gmra.mrb[0].mxu0 %v101
  %v284 = vpop.f32.mrb[0].mxu0
  %v285 = vadd.f32 %v210, %v284
  %v286 = vpop.f32.mrb[0].mxu0
  %287 = vdwg.mxu0
  %v288 = vld [vmem:[%s5] sm:$0xff]
  %v289 = vld [vmem:[%s5 + $0x8] sm:$0xff]
  %v290 = vadd.f32 %v280, %v288
  %v291 = vadd.f32 %v285, %v289
  %v292 = vld [vmem:[%s6] sm:$0x1]
  %v293 = vld [vmem:[%s7] sm:$0x1]
  %vm294 = vcmask 261120
  %v295 = vsel %vm294, %v290, 0.0
  %296 = vadd.xlane.f32.xlu0 %v295
  %v297 = vpop.xlane.xlu0 %296
  %v298 = vsel %vm294, %v291, 0.0
  %299 = vadd.xlane.f32.xlu0 %v298
  %v300 = vpop.xlane.xlu0 %299
  %v301 = vrcp.pop 32.0
  %v302 = vmul.f32 %v297, %v301
  %v303 = vmul.f32 %v300, %v301
  %v304 = vsub.f32 %v290, %v302
  %v305 = vsub.f32 %v291, %v303
  %v306 = vmul.f32 %v304, %v304
  %v307 = vmul.f32 %v305, %v305
  %v308 = vsel %vm294, %v306, 0.0
  %309 = vadd.xlane.f32.xlu0 %v308
  %v310 = vpop.xlane.xlu0 %309
  %v311 = vsel %vm294, %v307, 0.0
  %312 = vadd.xlane.f32.xlu0 %v311
  %v313 = vpop.xlane.xlu0 %312
  %v314 = vmul.f32 %v310, %v301
  %v315 = vmul.f32 %v313, %v301
  %v316 = vadd.f32 %v314, 1e-12
  %v317 = vadd.f32 %v315, 1e-12
  %v318 = vrsqrt.pop %v316
  %v319 = vrsqrt.pop %v317
  %v320 = vmul.f32 %v304, %v318
  %v321 = vmul.f32 %v305, %v319
  %v323 = vlaneseq
  %v324 = vshrl.u32 %v323, 7
  %v325 = vsub.s32 0, %v324
  %v326 = vrot.slane %v292, %v325
  %v328 = vmul.f32 %v320, %v326
  %v329 = vmul.f32 %v321, %v326
  %v331 = vlaneseq
  %v332 = vshrl.u32 %v331, 7
  %v333 = vsub.s32 0, %v332
  %v334 = vrot.slane %v293, %v333
  %v336 = vadd.f32 %v328, %v334
  %v337 = vadd.f32 %v329, %v334
  %v338 = vld [vmem:[%s2] sm:$0x3]
  %v339 = vcvt.s32.f32 %v338
  %v340 = vsub.f32 1.0, %v339
  %v341 = vmul.f32 %v340, -10000.0
  %v342 = vld [vmem:[%s8] sm:$0xf]
  %v343 = vld [vmem:[%s8 + $0x4] sm:$0xf]
  %v344 = vld [vmem:[%s8 + $0x8] sm:$0xf]
  %v345 = vld [vmem:[%s8 + $0xc] sm:$0xf]
  %v346 = vpack.c.bf16 %v337, %v336
  %v347 = vld [vmem:[%s9] sm:$0x1]
  %v349 = vlaneseq
  %v350 = vshrl.u32 %v349, 7
  %v351 = vsub.s32 0, %v350
  %v352 = vrot.slane %v347, %v351
  %v358 = vunpack.c.l.b16 %v342
  %v359 = vunpack.c.l.b16 %v343
  %v360 = vunpack.c.l.b16 %v344
  %v361 = vunpack.c.l.b16 %v345
  %v362 = vpack.c.b16 %v359, %v358
  %v363 = vpack.c.b16 %v361, %v360
  %v367 = vsel %vm294, %v346, 0
  %369 = vmatprep.subr.bf16.mxu0 0
  %370 = vmatpush1.bf16.msra.mxu0 %v362
  %371 = vmatprep.subr.bf16.mxu0 0
  %372 = vmatpush1.bf16.msra.mxu0 %v363
  %373 = vmatprep.subr.bf16.mxu0 0
  %374 = vmatpush1.bf16.msra.mxu0 0
  %375 = vmatprep.subr.bf16.mxu0 0
  %376 = vmatpush1.bf16.msra.mxu0 0
  %377 = vmatprep.subr.bf16.mxu0 0
  %378 = vmatpush1.bf16.msra.mxu0 0
  %379 = vmatprep.subr.bf16.mxu0 0
  %380 = vmatpush1.bf16.msra.mxu0 0
  %381 = vmatprep.subr.bf16.mxu0 0
  %382 = vmatpush1.bf16.msra.mxu0 0
  %383 = vmatprep.subr.bf16.mxu0 0
  %384 = vmatpush1.bf16.msra.mxu0 0
  %385 = vmatprep.subr.bf16.mxu0 0
  %386 = vmatpush1.bf16.msra.mxu0 0
  %387 = vmatprep.subr.bf16.mxu0 0
  %388 = vmatpush1.bf16.msra.mxu0 0
  %389 = vmatprep.subr.bf16.mxu0 0
  %390 = vmatpush1.bf16.msra.mxu0 0
  %391 = vmatprep.subr.bf16.mxu0 0
  %392 = vmatpush1.bf16.msra.mxu0 0
  %393 = vmatprep.subr.bf16.mxu0 0
  %394 = vmatpush1.bf16.msra.mxu0 0
  %395 = vmatprep.subr.bf16.mxu0 0
  %396 = vmatpush1.bf16.msra.mxu0 0
  %397 = vmatprep.subr.bf16.mxu0 0
  %398 = vmatpush1.bf16.msra.mxu0 0
  %399 = vmatprep.subr.bf16.mxu0 0
  %400 = vmatpush1.bf16.msra.mxu0 0
  %401 = vmatprep.mubr.bf16.mxu0 0
  %402 = vmatmul.mubr.bf16.gmra.mrb[0].mxu0 %v367
  %v403 = vpop.f32.mrb[0].mxu0
  %v404 = vadd.f32 %v352, %v403
  %v405 = vpop.f32.mrb[0].mxu0
  %v406 = vpop.f32.mrb[0].mxu0
  %v407 = vadd.f32 %v352, %v406
  %v408 = vpop.f32.mrb[0].mxu0
  %409 = vdwg.mxu0
  %v410 = vld [vmem:[%s10] sm:$0xf]
  %v411 = vld [vmem:[%s10 + $0x4] sm:$0xf]
  %v412 = vld [vmem:[%s10 + $0x8] sm:$0xf]
  %v413 = vld [vmem:[%s10 + $0xc] sm:$0xf]
  %v414 = vld [vmem:[%s11] sm:$0x1]
  %v416 = vlaneseq
  %v417 = vshrl.u32 %v416, 7
  %v418 = vsub.s32 0, %v417
  %v419 = vrot.slane %v414, %v418
  %v425 = vunpack.c.l.b16 %v410
  %v426 = vunpack.c.l.b16 %v411
  %v427 = vunpack.c.l.b16 %v412
  %v428 = vunpack.c.l.b16 %v413
  %v429 = vpack.c.b16 %v426, %v425
  %v430 = vpack.c.b16 %v428, %v427
  %433 = vmatprep.subr.bf16.mxu0 0
  %434 = vmatpush1.bf16.msra.mxu0 %v429
  %435 = vmatprep.subr.bf16.mxu0 0
  %436 = vmatpush1.bf16.msra.mxu0 %v430
  %437 = vmatprep.subr.bf16.mxu0 0
  %438 = vmatpush1.bf16.msra.mxu0 0
  %439 = vmatprep.subr.bf16.mxu0 0
  %440 = vmatpush1.bf16.msra.mxu0 0
  %441 = vmatprep.subr.bf16.mxu0 0
  %442 = vmatpush1.bf16.msra.mxu0 0
  %443 = vmatprep.subr.bf16.mxu0 0
  %444 = vmatpush1.bf16.msra.mxu0 0
  %445 = vmatprep.subr.bf16.mxu0 0
  %446 = vmatpush1.bf16.msra.mxu0 0
  %447 = vmatprep.subr.bf16.mxu0 0
  %448 = vmatpush1.bf16.msra.mxu0 0
  %449 = vmatprep.subr.bf16.mxu0 0
  %450 = vmatpush1.bf16.msra.mxu0 0
  %451 = vmatprep.subr.bf16.mxu0 0
  %452 = vmatpush1.bf16.msra.mxu0 0
  %453 = vmatprep.subr.bf16.mxu0 0
  %454 = vmatpush1.bf16.msra.mxu0 0
  %455 = vmatprep.subr.bf16.mxu0 0
  %456 = vmatpush1.bf16.msra.mxu0 0
  %457 = vmatprep.subr.bf16.mxu0 0
  %458 = vmatpush1.bf16.msra.mxu0 0
  %459 = vmatprep.subr.bf16.mxu0 0
  %460 = vmatpush1.bf16.msra.mxu0 0
  %461 = vmatprep.subr.bf16.mxu0 0
  %462 = vmatpush1.bf16.msra.mxu0 0
  %463 = vmatprep.subr.bf16.mxu0 0
  %464 = vmatpush1.bf16.msra.mxu0 0
  %465 = vmatprep.mubr.bf16.mxu0 0
  %466 = vmatmul.mubr.bf16.gmra.mrb[0].mxu0 %v367
  %v467 = vpop.f32.mrb[0].mxu0
  %v468 = vadd.f32 %v419, %v467
  %v469 = vpop.f32.mrb[0].mxu0
  %v470 = vpop.f32.mrb[0].mxu0
  %v471 = vadd.f32 %v419, %v470
  %v472 = vpop.f32.mrb[0].mxu0
  %473 = vdwg.mxu0
  %v474 = vld [vmem:[%s12] sm:$0xf]
  %v475 = vld [vmem:[%s12 + $0x4] sm:$0xf]
  %v476 = vld [vmem:[%s12 + $0x8] sm:$0xf]
  %v477 = vld [vmem:[%s12 + $0xc] sm:$0xf]
  %v478 = vld [vmem:[%s13] sm:$0x1]
  %v480 = vlaneseq
  %v481 = vshrl.u32 %v480, 7
  %v482 = vsub.s32 0, %v481
  %v483 = vrot.slane %v478, %v482
  %v489 = vunpack.c.l.b16 %v474
  %v490 = vunpack.c.l.b16 %v475
  %v491 = vunpack.c.l.b16 %v476
  %v492 = vunpack.c.l.b16 %v477
  %v493 = vpack.c.b16 %v490, %v489
  %v494 = vpack.c.b16 %v492, %v491
  %497 = vmatprep.subr.bf16.mxu0 0
  %498 = vmatpush1.bf16.msra.mxu0 %v493
  %499 = vmatprep.subr.bf16.mxu0 0
  %500 = vmatpush1.bf16.msra.mxu0 %v494
  %501 = vmatprep.subr.bf16.mxu0 0
  %502 = vmatpush1.bf16.msra.mxu0 0
  %503 = vmatprep.subr.bf16.mxu0 0
  %504 = vmatpush1.bf16.msra.mxu0 0
  %505 = vmatprep.subr.bf16.mxu0 0
  %506 = vmatpush1.bf16.msra.mxu0 0
  %507 = vmatprep.subr.bf16.mxu0 0
  %508 = vmatpush1.bf16.msra.mxu0 0
  %509 = vmatprep.subr.bf16.mxu0 0
  %510 = vmatpush1.bf16.msra.mxu0 0
  %511 = vmatprep.subr.bf16.mxu0 0
  %512 = vmatpush1.bf16.msra.mxu0 0
  %513 = vmatprep.subr.bf16.mxu0 0
  %514 = vmatpush1.bf16.msra.mxu0 0
  %515 = vmatprep.subr.bf16.mxu0 0
  %516 = vmatpush1.bf16.msra.mxu0 0
  %517 = vmatprep.subr.bf16.mxu0 0
  %518 = vmatpush1.bf16.msra.mxu0 0
  %519 = vmatprep.subr.bf16.mxu0 0
  %520 = vmatpush1.bf16.msra.mxu0 0
  %521 = vmatprep.subr.bf16.mxu0 0
  %522 = vmatpush1.bf16.msra.mxu0 0
  %523 = vmatprep.subr.bf16.mxu0 0
  %524 = vmatpush1.bf16.msra.mxu0 0
  %525 = vmatprep.subr.bf16.mxu0 0
  %526 = vmatpush1.bf16.msra.mxu0 0
  %527 = vmatprep.subr.bf16.mxu0 0
  %528 = vmatpush1.bf16.msra.mxu0 0
  %529 = vmatprep.mubr.bf16.mxu0 0
  %530 = vmatmul.mubr.bf16.gmra.mrb[0].mxu0 %v367
  %v531 = vpop.f32.mrb[0].mxu0
  %v532 = vadd.f32 %v483, %v531
  %v533 = vpop.f32.mrb[0].mxu0
  %v534 = vpop.f32.mrb[0].mxu0
  %v535 = vadd.f32 %v483, %v534
  %v536 = vpop.f32.mrb[0].mxu0
  %537 = vdwg.mxu0
  %v538 = vld [vmem:[%s14] sm:$0xf]
  %v539 = vld [vmem:[%s14 + $0x4] sm:$0xf]
  %v540 = vld [vmem:[%s14 + $0x8] sm:$0xf]
  %v541 = vld [vmem:[%s14 + $0xc] sm:$0xf]
  %v542 = vpack.c.bf16 %v404, %v404
  %v543 = vpack.c.bf16 %v468, %v468
  %v544 = vlaneseq
  %v545 = vshrl.u32 %v544, 7
  %v546 = vsub.s32 0, %v545
  %v547 = vrot.slane %v341, %v546
  %vm548 = vcmask 130048
  %v550 = vsel %vm548, %v542, 0
  %v553 = vsel %vm548, %v543, 0
  %555 = vmatprep.subr.bf16.mxu0 0
  %556 = vmatpush1.bf16.xpose.msra.mxu0 %v553
  %557 = vmatprep.subr.bf16.mxu0 0
  %558 = vmatpush1.bf16.xpose.msra.mxu0 0
  %559 = vmatprep.subr.bf16.mxu0 0
  %560 = vmatpush1.bf16.xpose.msra.mxu0 0
  %561 = vmatprep.subr.bf16.mxu0 0
  %562 = vmatpush1.bf16.xpose.msra.mxu0 0
  %563 = vmatprep.subr.bf16.mxu0 0
  %564 = vmatpush1.bf16.xpose.msra.mxu0 0
  %565 = vmatprep.subr.bf16.mxu0 0
  %566 = vmatpush1.bf16.xpose.msra.mxu0 0
  %567 = vmatprep.subr.bf16.mxu0 0
  %568 = vmatpush1.bf16.xpose.msra.mxu0 0
  %569 = vmatprep.subr.bf16.mxu0 0
  %570 = vmatpush1.bf16.xpose.msra.mxu0 0
  %571 = vmatprep.subr.bf16.mxu0 0
  %572 = vmatpush1.bf16.xpose.msra.mxu0 0
  %573 = vmatprep.subr.bf16.mxu0 0
  %574 = vmatpush1.bf16.xpose.msra.mxu0 0
  %575 = vmatprep.subr.bf16.mxu0 0
  %576 = vmatpush1.bf16.xpose.msra.mxu0 0
  %577 = vmatprep.subr.bf16.mxu0 0
  %578 = vmatpush1.bf16.xpose.msra.mxu0 0
  %579 = vmatprep.subr.bf16.mxu0 0
  %580 = vmatpush1.bf16.xpose.msra.mxu0 0
  %581 = vmatprep.subr.bf16.mxu0 0
  %582 = vmatpush1.bf16.xpose.msra.mxu0 0
  %583 = vmatprep.subr.bf16.mxu0 0
  %584 = vmatpush1.bf16.xpose.msra.mxu0 0
  %585 = vmatprep.subr.bf16.mxu0 0
  %586 = vmatpush1.bf16.xpose.msra.mxu0 0
  %587 = vmatprep.mubr.bf16.mxu0 0
  %588 = vmatmul.mubr.bf16.gmra.mrb[0].mxu0 %v550
  %v589 = vpop.f32.mrb[0].mxu0
  %v590 = vadd.f32 %v547, %v589
  %v591 = vpop.f32.mrb[0].mxu0
  %v592 = vpop.f32.mrb[0].mxu0
  %v593 = vpop.f32.mrb[0].mxu0
  %594 = vdwg.mxu0
  %v595 = vsel %vm131, %v590, -inf
  %596 = vmax.xlane.f32.xlu0 %v595
  %v597 = vpop.xlane.xlu0 %596
  %v598 = vsub.f32 %v590, %v597
  %v599 = vmul.f32 %v598, 1.442695
  %v600 = vpow.pop %v599
  %v601 = vsel %vm131, %v600, 0.0
  %602 = vadd.xlane.f32.xlu0 %v601
  %v603 = vpop.xlane.xlu0 %602
  %v604 = vrcp.pop %v603
  %v605 = vmul.f32 %v600, %v604
  %v606 = vpack.c.bf16 %v605, %v605
  %v607 = vpack.c.bf16 %v532, %v532
  %v609 = vsel %vm131, %v606, 0
  %vm611 = vcmask 1043456
  %v613 = vsel %vm611, %v607, 0
  %615 = vmatprep.subr.bf16.mxu0 0
  %616 = vmatpush1.bf16.msra.mxu0 %v613
  %617 = vmatprep.subr.bf16.mxu0 0
  %618 = vmatpush1.bf16.msra.mxu0 0
  %619 = vmatprep.subr.bf16.mxu0 0
  %620 = vmatpush1.bf16.msra.mxu0 0
  %621 = vmatprep.subr.bf16.mxu0 0
  %622 = vmatpush1.bf16.msra.mxu0 0
  %623 = vmatprep.subr.bf16.mxu0 0
  %624 = vmatpush1.bf16.msra.mxu0 0
  %625 = vmatprep.subr.bf16.mxu0 0
  %626 = vmatpush1.bf16.msra.mxu0 0
  %627 = vmatprep.subr.bf16.mxu0 0
  %628 = vmatpush1.bf16.msra.mxu0 0
  %629 = vmatprep.subr.bf16.mxu0 0
  %630 = vmatpush1.bf16.msra.mxu0 0
  %631 = vmatprep.subr.bf16.mxu0 0
  %632 = vmatpush1.bf16.msra.mxu0 0
  %633 = vmatprep.subr.bf16.mxu0 0
  %634 = vmatpush1.bf16.msra.mxu0 0
  %635 = vmatprep.subr.bf16.mxu0 0
  %636 = vmatpush1.bf16.msra.mxu0 0
  %637 = vmatprep.subr.bf16.mxu0 0
  %638 = vmatpush1.bf16.msra.mxu0 0
  %639 = vmatprep.subr.bf16.mxu0 0
  %640 = vmatpush1.bf16.msra.mxu0 0
  %641 = vmatprep.subr.bf16.mxu0 0
  %642 = vmatpush1.bf16.msra.mxu0 0
  %643 = vmatprep.subr.bf16.mxu0 0
  %644 = vmatpush1.bf16.msra.mxu0 0
  %645 = vmatprep.subr.bf16.mxu0 0
  %646 = vmatpush1.bf16.msra.mxu0 0
  %647 = vmatprep.mubr.bf16.mxu0 0
  %648 = vmatmul.mubr.bf16.gmra.mrb[0].mxu0 %v609
  %v649 = vpop.f32.mrb[0].mxu0
  %v650 = vadd.f32 0.0, %v649
  %v651 = vpop.f32.mrb[0].mxu0
  %v652 = vpop.f32.mrb[0].mxu0
  %v653 = vpop.f32.mrb[0].mxu0
  %654 = vdwg.mxu0
  %v655 = vpack.c.bf16 %v650, %v650
  %657 = vrot.lane.b32.xlu0 %v542, 112
  %v658 = vpop.permute.xlu0 %657
  %660 = vrot.lane.b32.xlu0 %v543, 112
  %v661 = vpop.permute.xlu0 %660
  %v663 = vsel %vm548, %v658, 0
  %v666 = vsel %vm548, %v661, 0
  %668 = vmatprep.subr.bf16.mxu0 0
  %669 = vmatpush1.bf16.xpose.msra.mxu0 %v666
  %670 = vmatprep.subr.bf16.mxu0 0
  %671 = vmatpush1.bf16.xpose.msra.mxu0 0
  %672 = vmatprep.subr.bf16.mxu0 0
  %673 = vmatpush1.bf16.xpose.msra.mxu0 0
  %674 = vmatprep.subr.bf16.mxu0 0
  %675 = vmatpush1.bf16.xpose.msra.mxu0 0
  %676 = vmatprep.subr.bf16.mxu0 0
  %677 = vmatpush1.bf16.xpose.msra.mxu0 0
  %678 = vmatprep.subr.bf16.mxu0 0
  %679 = vmatpush1.bf16.xpose.msra.mxu0 0
  %680 = vmatprep.subr.bf16.mxu0 0
  %681 = vmatpush1.bf16.xpose.msra.mxu0 0
  %682 = vmatprep.subr.bf16.mxu0 0
  %683 = vmatpush1.bf16.xpose.msra.mxu0 0
  %684 = vmatprep.subr.bf16.mxu0 0
  %685 = vmatpush1.bf16.xpose.msra.mxu0 0
  %686 = vmatprep.subr.bf16.mxu0 0
  %687 = vmatpush1.bf16.xpose.msra.mxu0 0
  %688 = vmatprep.subr.bf16.mxu0 0
  %689 = vmatpush1.bf16.xpose.msra.mxu0 0
  %690 = vmatprep.subr.bf16.mxu0 0
  %691 = vmatpush1.bf16.xpose.msra.mxu0 0
  %692 = vmatprep.subr.bf16.mxu0 0
  %693 = vmatpush1.bf16.xpose.msra.mxu0 0
  %694 = vmatprep.subr.bf16.mxu0 0
  %695 = vmatpush1.bf16.xpose.msra.mxu0 0
  %696 = vmatprep.subr.bf16.mxu0 0
  %697 = vmatpush1.bf16.xpose.msra.mxu0 0
  %698 = vmatprep.subr.bf16.mxu0 0
  %699 = vmatpush1.bf16.xpose.msra.mxu0 0
  %700 = vmatprep.mubr.bf16.mxu0 0
  %701 = vmatmul.mubr.bf16.gmra.mrb[0].mxu0 %v663
  %v702 = vpop.f32.mrb[0].mxu0
  %v703 = vadd.f32 %v547, %v702
  %v704 = vpop.f32.mrb[0].mxu0
  %v705 = vpop.f32.mrb[0].mxu0
  %v706 = vpop.f32.mrb[0].mxu0
  %707 = vdwg.mxu0
  %v708 = vsel %vm131, %v703, -inf
  %709 = vmax.xlane.f32.xlu0 %v708
  %v710 = vpop.xlane.xlu0 %709
  %v711 = vsub.f32 %v703, %v710
  %v712 = vmul.f32 %v711, 1.442695
  %v713 = vpow.pop %v712
  %v714 = vsel %vm131, %v713, 0.0
  %715 = vadd.xlane.f32.xlu0 %v714
  %v716 = vpop.xlane.xlu0 %715
  %v717 = vrcp.pop %v716
  %v718 = vmul.f32 %v713, %v717
  %v719 = vpack.c.bf16 %v718, %v718
  %721 = vrot.lane.b32.xlu0 %v607, 112
  %v722 = vpop.permute.xlu0 %721
  %v724 = vsel %vm131, %v719, 0
  %v727 = vsel %vm611, %v722, 0
  %729 = vmatprep.subr.bf16.mxu0 0
  %730 = vmatpush1.bf16.msra.mxu0 %v727
  %731 = vmatprep.subr.bf16.mxu0 0
  %732 = vmatpush1.bf16.msra.mxu0 0
  %733 = vmatprep.subr.bf16.mxu0 0
  %734 = vmatpush1.bf16.msra.mxu0 0
  %735 = vmatprep.subr.bf16.mxu0 0
  %736 = vmatpush1.bf16.msra.mxu0 0
  %737 = vmatprep.subr.bf16.mxu0 0
  %738 = vmatpush1.bf16.msra.mxu0 0
  %739 = vmatprep.subr.bf16.mxu0 0
  %740 = vmatpush1.bf16.msra.mxu0 0
  %741 = vmatprep.subr.bf16.mxu0 0
  %742 = vmatpush1.bf16.msra.mxu0 0
  %743 = vmatprep.subr.bf16.mxu0 0
  %744 = vmatpush1.bf16.msra.mxu0 0
  %745 = vmatprep.subr.bf16.mxu0 0
  %746 = vmatpush1.bf16.msra.mxu0 0
  %747 = vmatprep.subr.bf16.mxu0 0
  %748 = vmatpush1.bf16.msra.mxu0 0
  %749 = vmatprep.subr.bf16.mxu0 0
  %750 = vmatpush1.bf16.msra.mxu0 0
  %751 = vmatprep.subr.bf16.mxu0 0
  %752 = vmatpush1.bf16.msra.mxu0 0
  %753 = vmatprep.subr.bf16.mxu0 0
  %754 = vmatpush1.bf16.msra.mxu0 0
  %755 = vmatprep.subr.bf16.mxu0 0
  %756 = vmatpush1.bf16.msra.mxu0 0
  %757 = vmatprep.subr.bf16.mxu0 0
  %758 = vmatpush1.bf16.msra.mxu0 0
  %759 = vmatprep.subr.bf16.mxu0 0
  %760 = vmatpush1.bf16.msra.mxu0 0
  %761 = vmatprep.mubr.bf16.mxu0 0
  %762 = vmatmul.mubr.bf16.gmra.mrb[0].mxu0 %v724
  %v763 = vpop.f32.mrb[0].mxu0
  %v764 = vadd.f32 0.0, %v763
  %v765 = vpop.f32.mrb[0].mxu0
  %v766 = vpop.f32.mrb[0].mxu0
  %v767 = vpop.f32.mrb[0].mxu0
  %768 = vdwg.mxu0
  %v769 = vpack.c.bf16 %v764, %v764
  %v772 = vunpack.c.l.b16 %v540
  %v773 = vunpack.c.l.b16 %v541
  %v774 = vpack.c.b16 %v773, %v772
  %v777 = vsel %vm548, %v769, 0
  %779 = vmatprep.subr.bf16.mxu0 0
  %780 = vmatpush1.bf16.msra.mxu0 %v774
  %781 = vmatprep.subr.bf16.mxu0 0
  %782 = vmatpush1.bf16.msra.mxu0 0
  %783 = vmatprep.subr.bf16.mxu0 0
  %784 = vmatpush1.bf16.msra.mxu0 0
  %785 = vmatprep.subr.bf16.mxu0 0
  %786 = vmatpush1.bf16.msra.mxu0 0
  %787 = vmatprep.subr.bf16.mxu0 0
  %788 = vmatpush1.bf16.msra.mxu0 0
  %789 = vmatprep.subr.bf16.mxu0 0
  %790 = vmatpush1.bf16.msra.mxu0 0
  %791 = vmatprep.subr.bf16.mxu0 0
  %792 = vmatpush1.bf16.msra.mxu0 0
  %793 = vmatprep.subr.bf16.mxu0 0
  %794 = vmatpush1.bf16.msra.mxu0 0
  %795 = vmatprep.subr.bf16.mxu0 0
  %796 = vmatpush1.bf16.msra.mxu0 0
  %797 = vmatprep.subr.bf16.mxu0 0
  %798 = vmatpush1.bf16.msra.mxu0 0
  %799 = vmatprep.subr.bf16.mxu0 0
  %800 = vmatpush1.bf16.msra.mxu0 0
  %801 = vmatprep.subr.bf16.mxu0 0
  %802 = vmatpush1.bf16.msra.mxu0 0
  %803 = vmatprep.subr.bf16.mxu0 0
  %804 = vmatpush1.bf16.msra.mxu0 0
  %805 = vmatprep.subr.bf16.mxu0 0
  %806 = vmatpush1.bf16.msra.mxu0 0
  %807 = vmatprep.subr.bf16.mxu0 0
  %808 = vmatpush1.bf16.msra.mxu0 0
  %809 = vmatprep.subr.bf16.mxu0 0
  %810 = vmatpush1.bf16.msra.mxu0 0
  %811 = vmatprep.mubr.bf16.mxu0 0
  %812 = vmatmul.mubr.bf16.gmra.mrb[0].mxu0 %v777
  %v813 = vpop.f32.mrb[0].mxu0
  %v814 = vadd.f32 0.0, %v813
  %v815 = vpop.f32.mrb[0].mxu0
  %v816 = vpop.f32.mrb[0].mxu0
  %v817 = vpop.f32.mrb[0].mxu0
  %818 = vdwg.mxu0
  %v821 = vunpack.c.l.b16 %v538
  %v822 = vunpack.c.l.b16 %v539
  %v823 = vpack.c.b16 %v822, %v821
  %v826 = vsel %vm548, %v655, 0
  %828 = vmatprep.subr.bf16.mxu0 0
  %829 = vmatpush1.bf16.msra.mxu0 %v823
  %830 = vmatprep.subr.bf16.mxu0 0
  %831 = vmatpush1.bf16.msra.mxu0 0
  %832 = vmatprep.subr.bf16.mxu0 0
  %833 = vmatpush1.bf16.msra.mxu0 0
  %834 = vmatprep.subr.bf16.mxu0 0
  %835 = vmatpush1.bf16.msra.mxu0 0
  %836 = vmatprep.subr.bf16.mxu0 0
  %837 = vmatpush1.bf16.msra.mxu0 0
  %838 = vmatprep.subr.bf16.mxu0 0
  %839 = vmatpush1.bf16.msra.mxu0 0
  %840 = vmatprep.subr.bf16.mxu0 0
  %841 = vmatpush1.bf16.msra.mxu0 0
  %842 = vmatprep.subr.bf16.mxu0 0
  %843 = vmatpush1.bf16.msra.mxu0 0
  %844 = vmatprep.subr.bf16.mxu0 0
  %845 = vmatpush1.bf16.msra.mxu0 0
  %846 = vmatprep.subr.bf16.mxu0 0
  %847 = vmatpush1.bf16.msra.mxu0 0
  %848 = vmatprep.subr.bf16.mxu0 0
  %849 = vmatpush1.bf16.msra.mxu0 0
  %850 = vmatprep.subr.bf16.mxu0 0
  %851 = vmatpush1.bf16.msra.mxu0 0
  %852 = vmatprep.subr.bf16.mxu0 0
  %853 = vmatpush1.bf16.msra.mxu0 0
  %854 = vmatprep.subr.bf16.mxu0 0
  %855 = vmatpush1.bf16.msra.mxu0 0
  %856 = vmatprep.subr.bf16.mxu0 0
  %857 = vmatpush1.bf16.msra.mxu0 0
  %858 = vmatprep.subr.bf16.mxu0 0
  %859 = vmatpush1.bf16.msra.mxu0 0
  %860 = vmatprep.mubr.bf16.mxu0 0
  %861 = vmatmul.mubr.bf16.gmra.mrb[0].mxu0 %v826
  %v862 = vpop.f32.mrb[0].mxu0
  %v863 = vadd.f32 %v814, %v862
  %v864 = vpop.f32.mrb[0].mxu0
  %v865 = vpop.f32.mrb[0].mxu0
  %v866 = vpop.f32.mrb[0].mxu0
  %867 = vdwg.mxu0
  %v868 = vpack.c.bf16 %v407, %v407
  %v869 = vpack.c.bf16 %v471, %v471
  %v870 = vlaneseq
  %v871 = vshrl.u32 %v870, 7
  %v872 = vsub.s32 1, %v871
  %v873 = vrot.slane %v341, %v872
  %v875 = vsel %vm548, %v868, 0
  %v878 = vsel %vm548, %v869, 0
  %880 = vmatprep.subr.bf16.mxu0 0
  %881 = vmatpush1.bf16.xpose.msra.mxu0 %v878
  %882 = vmatprep.subr.bf16.mxu0 0
  %883 = vmatpush1.bf16.xpose.msra.mxu0 0
  %884 = vmatprep.subr.bf16.mxu0 0
  %885 = vmatpush1.bf16.xpose.msra.mxu0 0
  %886 = vmatprep.subr.bf16.mxu0 0
  %887 = vmatpush1.bf16.xpose.msra.mxu0 0
  %888 = vmatprep.subr.bf16.mxu0 0
  %889 = vmatpush1.bf16.xpose.msra.mxu0 0
  %890 = vmatprep.subr.bf16.mxu0 0
  %891 = vmatpush1.bf16.xpose.msra.mxu0 0
  %892 = vmatprep.subr.bf16.mxu0 0
  %893 = vmatpush1.bf16.xpose.msra.mxu0 0
  %894 = vmatprep.subr.bf16.mxu0 0
  %895 = vmatpush1.bf16.xpose.msra.mxu0 0
  %896 = vmatprep.subr.bf16.mxu0 0
  %897 = vmatpush1.bf16.xpose.msra.mxu0 0
  %898 = vmatprep.subr.bf16.mxu0 0
  %899 = vmatpush1.bf16.xpose.msra.mxu0 0
  %900 = vmatprep.subr.bf16.mxu0 0
  %901 = vmatpush1.bf16.xpose.msra.mxu0 0
  %902 = vmatprep.subr.bf16.mxu0 0
  %903 = vmatpush1.bf16.xpose.msra.mxu0 0
  %904 = vmatprep.subr.bf16.mxu0 0
  %905 = vmatpush1.bf16.xpose.msra.mxu0 0
  %906 = vmatprep.subr.bf16.mxu0 0
  %907 = vmatpush1.bf16.xpose.msra.mxu0 0
  %908 = vmatprep.subr.bf16.mxu0 0
  %909 = vmatpush1.bf16.xpose.msra.mxu0 0
  %910 = vmatprep.subr.bf16.mxu0 0
  %911 = vmatpush1.bf16.xpose.msra.mxu0 0
  %912 = vmatprep.mubr.bf16.mxu0 0
  %913 = vmatmul.mubr.bf16.gmra.mrb[0].mxu0 %v875
  %v914 = vpop.f32.mrb[0].mxu0
  %v915 = vadd.f32 %v873, %v914
  %v916 = vpop.f32.mrb[0].mxu0
  %v917 = vpop.f32.mrb[0].mxu0
  %v918 = vpop.f32.mrb[0].mxu0
  %919 = vdwg.mxu0
  %v920 = vsel %vm131, %v915, -inf
  %921 = vmax.xlane.f32.xlu0 %v920
  %v922 = vpop.xlane.xlu0 %921
  %v923 = vsub.f32 %v915, %v922
  %v924 = vmul.f32 %v923, 1.442695
  %v925 = vpow.pop %v924
  %v926 = vsel %vm131, %v925, 0.0
  %927 = vadd.xlane.f32.xlu0 %v926
  %v928 = vpop.xlane.xlu0 %927
  %v929 = vrcp.pop %v928
  %v930 = vmul.f32 %v925, %v929
  %v931 = vpack.c.bf16 %v930, %v930
  %v932 = vpack.c.bf16 %v535, %v535
  %v934 = vsel %vm131, %v931, 0
  %v937 = vsel %vm611, %v932, 0
  %939 = vmatprep.subr.bf16.mxu0 0
  %940 = vmatpush1.bf16.msra.mxu0 %v937
  %941 = vmatprep.subr.bf16.mxu0 0
  %942 = vmatpush1.bf16.msra.mxu0 0
  %943 = vmatprep.subr.bf16.mxu0 0
  %944 = vmatpush1.bf16.msra.mxu0 0
  %945 = vmatprep.subr.bf16.mxu0 0
  %946 = vmatpush1.bf16.msra.mxu0 0
  %947 = vmatprep.subr.bf16.mxu0 0
  %948 = vmatpush1.bf16.msra.mxu0 0
  %949 = vmatprep.subr.bf16.mxu0 0
  %950 = vmatpush1.bf16.msra.mxu0 0
  %951 = vmatprep.subr.bf16.mxu0 0
  %952 = vmatpush1.bf16.msra.mxu0 0
  %953 = vmatprep.subr.bf16.mxu0 0
  %954 = vmatpush1.bf16.msra.mxu0 0
  %955 = vmatprep.subr.bf16.mxu0 0
  %956 = vmatpush1.bf16.msra.mxu0 0
  %957 = vmatprep.subr.bf16.mxu0 0
  %958 = vmatpush1.bf16.msra.mxu0 0
  %959 = vmatprep.subr.bf16.mxu0 0
  %960 = vmatpush1.bf16.msra.mxu0 0
  %961 = vmatprep.subr.bf16.mxu0 0
  %962 = vmatpush1.bf16.msra.mxu0 0
  %963 = vmatprep.subr.bf16.mxu0 0
  %964 = vmatpush1.bf16.msra.mxu0 0
  %965 = vmatprep.subr.bf16.mxu0 0
  %966 = vmatpush1.bf16.msra.mxu0 0
  %967 = vmatprep.subr.bf16.mxu0 0
  %968 = vmatpush1.bf16.msra.mxu0 0
  %969 = vmatprep.subr.bf16.mxu0 0
  %970 = vmatpush1.bf16.msra.mxu0 0
  %971 = vmatprep.mubr.bf16.mxu0 0
  %972 = vmatmul.mubr.bf16.gmra.mrb[0].mxu0 %v934
  %v973 = vpop.f32.mrb[0].mxu0
  %v974 = vadd.f32 0.0, %v973
  %v975 = vpop.f32.mrb[0].mxu0
  %v976 = vpop.f32.mrb[0].mxu0
  %v977 = vpop.f32.mrb[0].mxu0
  %978 = vdwg.mxu0
  %v979 = vpack.c.bf16 %v974, %v974
  %981 = vrot.lane.b32.xlu0 %v868, 112
  %v982 = vpop.permute.xlu0 %981
  %984 = vrot.lane.b32.xlu0 %v869, 112
  %v985 = vpop.permute.xlu0 %984
  %v987 = vsel %vm548, %v982, 0
  %v990 = vsel %vm548, %v985, 0
  %992 = vmatprep.subr.bf16.mxu0 0
  %993 = vmatpush1.bf16.xpose.msra.mxu0 %v990
  %994 = vmatprep.subr.bf16.mxu0 0
  %995 = vmatpush1.bf16.xpose.msra.mxu0 0
  %996 = vmatprep.subr.bf16.mxu0 0
  %997 = vmatpush1.bf16.xpose.msra.mxu0 0
  %998 = vmatprep.subr.bf16.mxu0 0
  %999 = vmatpush1.bf16.xpose.msra.mxu0 0
  %1000 = vmatprep.subr.bf16.mxu0 0
  %1001 = vmatpush1.bf16.xpose.msra.mxu0 0
  %1002 = vmatprep.subr.bf16.mxu0 0
  %1003 = vmatpush1.bf16.xpose.msra.mxu0 0
  %1004 = vmatprep.subr.bf16.mxu0 0
  %1005 = vmatpush1.bf16.xpose.msra.mxu0 0
  %1006 = vmatprep.subr.bf16.mxu0 0
  %1007 = vmatpush1.bf16.xpose.msra.mxu0 0
  %1008 = vmatprep.subr.bf16.mxu0 0
  %1009 = vmatpush1.bf16.xpose.msra.mxu0 0
  %1010 = vmatprep.subr.bf16.mxu0 0
  %1011 = vmatpush1.bf16.xpose.msra.mxu0 0
  %1012 = vmatprep.subr.bf16.mxu0 0
  %1013 = vmatpush1.bf16.xpose.msra.mxu0 0
  %1014 = vmatprep.subr.bf16.mxu0 0
  %1015 = vmatpush1.bf16.xpose.msra.mxu0 0
  %1016 = vmatprep.subr.bf16.mxu0 0
  %1017 = vmatpush1.bf16.xpose.msra.mxu0 0
  %1018 = vmatprep.subr.bf16.mxu0 0
  %1019 = vmatpush1.bf16.xpose.msra.mxu0 0
  %1020 = vmatprep.subr.bf16.mxu0 0
  %1021 = vmatpush1.bf16.xpose.msra.mxu0 0
  %1022 = vmatprep.subr.bf16.mxu0 0
  %1023 = vmatpush1.bf16.xpose.msra.mxu0 0
  %1024 = vmatprep.mubr.bf16.mxu0 0
  %1025 = vmatmul.mubr.bf16.gmra.mrb[0].mxu0 %v987
  %v1026 = vpop.f32.mrb[0].mxu0
  %v1027 = vadd.f32 %v873, %v1026
  %v1028 = vpop.f32.mrb[0].mxu0
  %v1029 = vpop.f32.mrb[0].mxu0
  %v1030 = vpop.f32.mrb[0].mxu0
  %1031 = vdwg.mxu0
  %v1032 = vsel %vm131, %v1027, -inf
  %1033 = vmax.xlane.f32.xlu0 %v1032
  %v1034 = vpop.xlane.xlu0 %1033
  %v1035 = vsub.f32 %v1027, %v1034
  %v1036 = vmul.f32 %v1035, 1.442695
  %v1037 = vpow.pop %v1036
  %v1038 = vsel %vm131, %v1037, 0.0
  %1039 = vadd.xlane.f32.xlu0 %v1038
  %v1040 = vpop.xlane.xlu0 %1039
  %v1041 = vrcp.pop %v1040
  %v1042 = vmul.f32 %v1037, %v1041
  %v1043 = vpack.c.bf16 %v1042, %v1042
  %1045 = vrot.lane.b32.xlu0 %v932, 112
  %v1046 = vpop.permute.xlu0 %1045
  %v1048 = vsel %vm131, %v1043, 0
  %v1051 = vsel %vm611, %v1046, 0
  %1053 = vmatprep.subr.bf16.mxu0 0
  %1054 = vmatpush1.bf16.msra.mxu0 %v1051
  %1055 = vmatprep.subr.bf16.mxu0 0
  %1056 = vmatpush1.bf16.msra.mxu0 0
  %1057 = vmatprep.subr.bf16.mxu0 0
  %1058 = vmatpush1.bf16.msra.mxu0 0
  %1059 = vmatprep.subr.bf16.mxu0 0
  %1060 = vmatpush1.bf16.msra.mxu0 0
  %1061 = vmatprep.subr.bf16.mxu0 0
  %1062 = vmatpush1.bf16.msra.mxu0 0
  %1063 = vmatprep.subr.bf16.mxu0 0
  %1064 = vmatpush1.bf16.msra.mxu0 0
  %1065 = vmatprep.subr.bf16.mxu0 0
  %1066 = vmatpush1.bf16.msra.mxu0 0
  %1067 = vmatprep.subr.bf16.mxu0 0
  %1068 = vmatpush1.bf16.msra.mxu0 0
  %1069 = vmatprep.subr.bf16.mxu0 0
  %1070 = vmatpush1.bf16.msra.mxu0 0
  %1071 = vmatprep.subr.bf16.mxu0 0
  %1072 = vmatpush1.bf16.msra.mxu0 0
  %1073 = vmatprep.subr.bf16.mxu0 0
  %1074 = vmatpush1.bf16.msra.mxu0 0
  %1075 = vmatprep.subr.bf16.mxu0 0
  %1076 = vmatpush1.bf16.msra.mxu0 0
  %1077 = vmatprep.subr.bf16.mxu0 0
  %1078 = vmatpush1.bf16.msra.mxu0 0
  %1079 = vmatprep.subr.bf16.mxu0 0
  %1080 = vmatpush1.bf16.msra.mxu0 0
  %1081 = vmatprep.subr.bf16.mxu0 0
  %1082 = vmatpush1.bf16.msra.mxu0 0
  %1083 = vmatprep.subr.bf16.mxu0 0
  %1084 = vmatpush1.bf16.msra.mxu0 0
  %1085 = vmatprep.mubr.bf16.mxu0 0
  %1086 = vmatmul.mubr.bf16.gmra.mrb[0].mxu0 %v1048
  %v1087 = vpop.f32.mrb[0].mxu0
  %v1088 = vadd.f32 0.0, %v1087
  %v1089 = vpop.f32.mrb[0].mxu0
  %v1090 = vpop.f32.mrb[0].mxu0
  %v1091 = vpop.f32.mrb[0].mxu0
  %1092 = vdwg.mxu0
  %v1093 = vpack.c.bf16 %v1088, %v1088
  %v1095 = vsel %vm548, %v1093, 0
  %1097 = vmatprep.subr.bf16.mxu0 0
  %1098 = vmatpush1.bf16.msra.mxu0 %v774
  %1099 = vmatprep.subr.bf16.mxu0 0
  %1100 = vmatpush1.bf16.msra.mxu0 0
  %1101 = vmatprep.subr.bf16.mxu0 0
  %1102 = vmatpush1.bf16.msra.mxu0 0
  %1103 = vmatprep.subr.bf16.mxu0 0
  %1104 = vmatpush1.bf16.msra.mxu0 0
  %1105 = vmatprep.subr.bf16.mxu0 0
  %1106 = vmatpush1.bf16.msra.mxu0 0
  %1107 = vmatprep.subr.bf16.mxu0 0
  %1108 = vmatpush1.bf16.msra.mxu0 0
  %1109 = vmatprep.subr.bf16.mxu0 0
  %1110 = vmatpush1.bf16.msra.mxu0 0
  %1111 = vmatprep.subr.bf16.mxu0 0
  %1112 = vmatpush1.bf16.msra.mxu0 0
  %1113 = vmatprep.subr.bf16.mxu0 0
  %1114 = vmatpush1.bf16.msra.mxu0 0
  %1115 = vmatprep.subr.bf16.mxu0 0
  %1116 = vmatpush1.bf16.msra.mxu0 0
  %1117 = vmatprep.subr.bf16.mxu0 0
  %1118 = vmatpush1.bf16.msra.mxu0 0
  %1119 = vmatprep.subr.bf16.mxu0 0
  %1120 = vmatpush1.bf16.msra.mxu0 0
  %1121 = vmatprep.subr.bf16.mxu0 0
  %1122 = vmatpush1.bf16.msra.mxu0 0
  %1123 = vmatprep.subr.bf16.mxu0 0
  %1124 = vmatpush1.bf16.msra.mxu0 0
  %1125 = vmatprep.subr.bf16.mxu0 0
  %1126 = vmatpush1.bf16.msra.mxu0 0
  %1127 = vmatprep.subr.bf16.mxu0 0
  %1128 = vmatpush1.bf16.msra.mxu0 0
  %1129 = vmatprep.mubr.bf16.mxu0 0
  %1130 = vmatmul.mubr.bf16.gmra.mrb[0].mxu0 %v1095
  %v1131 = vpop.f32.mrb[0].mxu0
  %v1132 = vadd.f32 0.0, %v1131
  %v1133 = vpop.f32.mrb[0].mxu0
  %v1134 = vpop.f32.mrb[0].mxu0
  %v1135 = vpop.f32.mrb[0].mxu0
  %1136 = vdwg.mxu0
  %v1138 = vsel %vm548, %v979, 0
  %1140 = vmatprep.subr.bf16.mxu0 0
  %1141 = vmatpush1.bf16.msra.mxu0 %v823
  %1142 = vmatprep.subr.bf16.mxu0 0
  %1143 = vmatpush1.bf16.msra.mxu0 0
  %1144 = vmatprep.subr.bf16.mxu0 0
  %1145 = vmatpush1.bf16.msra.mxu0 0
  %1146 = vmatprep.subr.bf16.mxu0 0
  %1147 = vmatpush1.bf16.msra.mxu0 0
  %1148 = vmatprep.subr.bf16.mxu0 0
  %1149 = vmatpush1.bf16.msra.mxu0 0
  %1150 = vmatprep.subr.bf16.mxu0 0
  %1151 = vmatpush1.bf16.msra.mxu0 0
  %1152 = vmatprep.subr.bf16.mxu0 0
  %1153 = vmatpush1.bf16.msra.mxu0 0
  %1154 = vmatprep.subr.bf16.mxu0 0
  %1155 = vmatpush1.bf16.msra.mxu0 0
  %1156 = vmatprep.subr.bf16.mxu0 0
  %1157 = vmatpush1.bf16.msra.mxu0 0
  %1158 = vmatprep.subr.bf16.mxu0 0
  %1159 = vmatpush1.bf16.msra.mxu0 0
  %1160 = vmatprep.subr.bf16.mxu0 0
  %1161 = vmatpush1.bf16.msra.mxu0 0
  %1162 = vmatprep.subr.bf16.mxu0 0
  %1163 = vmatpush1.bf16.msra.mxu0 0
  %1164 = vmatprep.subr.bf16.mxu0 0
  %1165 = vmatpush1.bf16.msra.mxu0 0
  %1166 = vmatprep.subr.bf16.mxu0 0
  %1167 = vmatpush1.bf16.msra.mxu0 0
  %1168 = vmatprep.subr.bf16.mxu0 0
  %1169 = vmatpush1.bf16.msra.mxu0 0
  %1170 = vmatprep.subr.bf16.mxu0 0
  %1171 = vmatpush1.bf16.msra.mxu0 0
  %1172 = vmatprep.mubr.bf16.mxu0 0
  %1173 = vmatmul.mubr.bf16.gmra.mrb[0].mxu0 %v1138
  %v1174 = vpop.f32.mrb[0].mxu0
  %v1175 = vadd.f32 %v1132, %v1174
  %v1176 = vpop.f32.mrb[0].mxu0
  %v1177 = vpop.f32.mrb[0].mxu0
  %v1178 = vpop.f32.mrb[0].mxu0
  %1179 = vdwg.mxu0
  %v1180 = vld [vmem:[%s15] sm:$0x1]
  %v1182 = vlaneseq
  %v1183 = vshrl.u32 %v1182, 7
  %v1184 = vsub.s32 0, %v1183
  %v1185 = vrot.slane %v1180, %v1184
  %v1187 = vadd.f32 %v863, %v1185
  %v1188 = vadd.f32 %v1175, %v1185
  %v1189 = vadd.f32 %v336, %v1187
  %v1190 = vadd.f32 %v337, %v1188
  %v1191 = vld [vmem:[%s16] sm:$0x1]
  %v1192 = vld [vmem:[%s17] sm:$0x1]
  %v1193 = vsel %vm294, %v1189, 0.0
  %1194 = vadd.xlane.f32.xlu0 %v1193
  %v1195 = vpop.xlane.xlu0 %1194
  %v1196 = vsel %vm294, %v1190, 0.0
  %1197 = vadd.xlane.f32.xlu0 %v1196
  %v1198 = vpop.xlane.xlu0 %1197
  %v1199 = vmul.f32 %v1195, %v301
  %v1200 = vmul.f32 %v1198, %v301
  %v1201 = vsub.f32 %v1189, %v1199
  %v1202 = vsub.f32 %v1190, %v1200
  %v1203 = vmul.f32 %v1201, %v1201
  %v1204 = vmul.f32 %v1202, %v1202
  %v1205 = vsel %vm294, %v1203, 0.0
  %1206 = vadd.xlane.f32.xlu0 %v1205
  %v1207 = vpop.xlane.xlu0 %1206
  %v1208 = vsel %vm294, %v1204, 0.0
  %1209 = vadd.xlane.f32.xlu0 %v1208
  %v1210 = vpop.xlane.xlu0 %1209
  %v1211 = vmul.f32 %v1207, %v301
  %v1212 = vmul.f32 %v1210, %v301
  %v1213 = vadd.f32 %v1211, 1e-12
  %v1214 = vadd.f32 %v1212, 1e-12
  %v1215 = vrsqrt.pop %v1213
  %v1216 = vrsqrt.pop %v1214
  %v1217 = vmul.f32 %v1201, %v1215
  %v1218 = vmul.f32 %v1202, %v1216
  %v1220 = vlaneseq
  %v1221 = vshrl.u32 %v1220, 7
  %v1222 = vsub.s32 0, %v1221
  %v1223 = vrot.slane %v1191, %v1222
  %v1225 = vmul.f32 %v1217, %v1223
  %v1226 = vmul.f32 %v1218, %v1223
  %v1228 = vlaneseq
  %v1229 = vshrl.u32 %v1228, 7
  %v1230 = vsub.s32 0, %v1229
  %v1231 = vrot.slane %v1192, %v1230
  %v1233 = vadd.f32 %v1225, %v1231
  %v1234 = vadd.f32 %v1226, %v1231
  %v1235 = vld [vmem:[%s18] sm:$0xf]
  %v1236 = vld [vmem:[%s18 + $0x4] sm:$0xf]
  %v1237 = vld [vmem:[%s18 + $0x8] sm:$0xf]
  %v1238 = vld [vmem:[%s18 + $0xc] sm:$0xf]
  %v1239 = vpack.c.bf16 %v1234, %v1233
  %v1240 = vld [vmem:[%s19] sm:$0x1]
  %v1242 = vlaneseq
  %v1243 = vshrl.u32 %v1242, 7
  %v1244 = vsub.s32 0, %v1243
  %v1245 = vrot.slane %v1240, %v1244
  %v1251 = vunpack.c.l.b16 %v1235
  %v1252 = vunpack.c.l.b16 %v1236
  %v1253 = vunpack.c.l.b16 %v1237
  %v1254 = vunpack.c.l.b16 %v1238
  %v1255 = vpack.c.b16 %v1252, %v1251
  %v1256 = vpack.c.b16 %v1254, %v1253
  %v1260 = vsel %vm294, %v1239, 0
  %1262 = vmatprep.subr.bf16.mxu0 0
  %1263 = vmatpush1.bf16.msra.mxu0 %v1255
  %1264 = vmatprep.subr.bf16.mxu0 0
  %1265 = vmatpush1.bf16.msra.mxu0 %v1256
  %1266 = vmatprep.subr.bf16.mxu0 0
  %1267 = vmatpush1.bf16.msra.mxu0 0
  %1268 = vmatprep.subr.bf16.mxu0 0
  %1269 = vmatpush1.bf16.msra.mxu0 0
  %1270 = vmatprep.subr.bf16.mxu0 0
  %1271 = vmatpush1.bf16.msra.mxu0 0
  %1272 = vmatprep.subr.bf16.mxu0 0
  %1273 = vmatpush1.bf16.msra.mxu0 0
  %1274 = vmatprep.subr.bf16.mxu0 0
  %1275 = vmatpush1.bf16.msra.mxu0 0
  %1276 = vmatprep.subr.bf16.mxu0 0
  %1277 = vmatpush1.bf16.msra.mxu0 0
  %1278 = vmatprep.subr.bf16.mxu0 0
  %1279 = vmatpush1.bf16.msra.mxu0 0
  %1280 = vmatprep.subr.bf16.mxu0 0
  %1281 = vmatpush1.bf16.msra.mxu0 0
  %1282 = vmatprep.subr.bf16.mxu0 0
  %1283 = vmatpush1.bf16.msra.mxu0 0
  %1284 = vmatprep.subr.bf16.mxu0 0
  %1285 = vmatpush1.bf16.msra.mxu0 0
  %1286 = vmatprep.subr.bf16.mxu0 0
  %1287 = vmatpush1.bf16.msra.mxu0 0
  %1288 = vmatprep.subr.bf16.mxu0 0
  %1289 = vmatpush1.bf16.msra.mxu0 0
  %1290 = vmatprep.subr.bf16.mxu0 0
  %1291 = vmatpush1.bf16.msra.mxu0 0
  %1292 = vmatprep.subr.bf16.mxu0 0
  %1293 = vmatpush1.bf16.msra.mxu0 0
  %1294 = vmatprep.mubr.bf16.mxu0 0
  %1295 = vmatmul.mubr.bf16.gmra.mrb[0].mxu0 %v1260
  %v1296 = vpop.f32.mrb[0].mxu0
  %v1297 = vadd.f32 %v1245, %v1296
  %v1298 = vpop.f32.mrb[0].mxu0
  %v1299 = vpop.f32.mrb[0].mxu0
  %v1300 = vadd.f32 %v1245, %v1299
  %v1301 = vpop.f32.mrb[0].mxu0
  %1302 = vdwg.mxu0
  %v1303 = vmul.f32 %v1297, 0.5
  %v1304 = vmul.f32 %v1300, 0.5
  %v1305 = vmul.f32 %v1297, 0.044715
  %v1306 = vmul.f32 %v1300, 0.044715
  %v1307 = vmul.f32 %v1305, %v1297
  %v1308 = vmul.f32 %v1306, %v1300
  %v1309 = vmul.f32 %v1307, %v1297
  %v1310 = vmul.f32 %v1308, %v1300
  %v1311 = vadd.f32 %v1297, %v1309
  %v1312 = vadd.f32 %v1300, %v1310
  %v1313 = vmul.f32 %v1311, 0.7978846
  %v1314 = vmul.f32 %v1312, 0.7978846
  %v1315 = vtanh.pop %v1313
  %v1316 = vtanh.pop %v1314
  %v1317 = vadd.f32 %v1315, 1.0
  %v1318 = vadd.f32 %v1316, 1.0
  %v1319 = vmul.f32 %v1303, %v1317
  %v1320 = vmul.f32 %v1304, %v1318
  %v1321 = vld [vmem:[%s20] sm:$0xf]
  %v1322 = vld [vmem:[%s20 + $0x4] sm:$0xf]
  %v1323 = vld [vmem:[%s20 + $0x8] sm:$0xf]
  %v1324 = vld [vmem:[%s20 + $0xc] sm:$0xf]
  %v1325 = vld [vmem:[%s20 + $0x10] sm:$0xf]
  %v1326 = vld [vmem:[%s20 + $0x14] sm:$0xf]
  %v1327 = vld [vmem:[%s20 + $0x18] sm:$0xf]
  %v1328 = vld [vmem:[%s20 + $0x1c] sm:$0xf]
  %v1329 = vpack.c.bf16 %v1320, %v1319
  %v1330 = vld [vmem:[%s21] sm:$0x1]
  %v1332 = vlaneseq
  %v1333 = vshrl.u32 %v1332, 7
  %v1334 = vsub.s32 0, %v1333
  %v1335 = vrot.slane %v1330, %v1334
  %v1345 = vunpack.c.l.b16 %v1321
  %v1346 = vunpack.c.l.b16 %v1322
  %v1347 = vunpack.c.l.b16 %v1323
  %v1348 = vunpack.c.l.b16 %v1324
  %v1349 = vunpack.c.l.b16 %v1325
  %v1350 = vunpack.c.l.b16 %v1326
  %v1351 = vunpack.c.l.b16 %v1327
  %v1352 = vunpack.c.l.b16 %v1328
  %v1353 = vpack.c.b16 %v1346, %v1345
  %v1354 = vpack.c.b16 %v1348, %v1347
  %v1355 = vpack.c.b16 %v1350, %v1349
  %v1356 = vpack.c.b16 %v1352, %v1351
  %vm1361 = vcmask 523264
  %v1363 = vsel %vm1361, %v1329, 0
  %1365 = vmatprep.subr.bf16.mxu0 0
  %1366 = vmatpush1.bf16.msra.mxu0 %v1353
  %1367 = vmatprep.subr.bf16.mxu0 0
  %1368 = vmatpush1.bf16.msra.mxu0 %v1354
  %1369 = vmatprep.subr.bf16.mxu0 0
  %1370 = vmatpush1.bf16.msra.mxu0 %v1355
  %1371 = vmatprep.subr.bf16.mxu0 0
  %1372 = vmatpush1.bf16.msra.mxu0 %v1356
  %1373 = vmatprep.subr.bf16.mxu0 0
  %1374 = vmatpush1.bf16.msra.mxu0 0
  %1375 = vmatprep.subr.bf16.mxu0 0
  %1376 = vmatpush1.bf16.msra.mxu0 0
  %1377 = vmatprep.subr.bf16.mxu0 0
  %1378 = vmatpush1.bf16.msra.mxu0 0
  %1379 = vmatprep.subr.bf16.mxu0 0
  %1380 = vmatpush1.bf16.msra.mxu0 0
  %1381 = vmatprep.subr.bf16.mxu0 0
  %1382 = vmatpush1.bf16.msra.mxu0 0
  %1383 = vmatprep.subr.bf16.mxu0 0
  %1384 = vmatpush1.bf16.msra.mxu0 0
  %1385 = vmatprep.subr.bf16.mxu0 0
  %1386 = vmatpush1.bf16.msra.mxu0 0
  %1387 = vmatprep.subr.bf16.mxu0 0
  %1388 = vmatpush1.bf16.msra.mxu0 0
  %1389 = vmatprep.subr.bf16.mxu0 0
  %1390 = vmatpush1.bf16.msra.mxu0 0
  %1391 = vmatprep.subr.bf16.mxu0 0
  %1392 = vmatpush1.bf16.msra.mxu0 0
  %1393 = vmatprep.subr.bf16.mxu0 0
  %1394 = vmatpush1.bf16.msra.mxu0 0
  %1395 = vmatprep.subr.bf16.mxu0 0
  %1396 = vmatpush1.bf16.msra.mxu0 0
  %1397 = vmatprep.mubr.bf16.mxu0 0
  %1398 = vmatmul.mubr.bf16.gmra.mrb[0].mxu0 %v1363
  %v1399 = vpop.f32.mrb[0].mxu0
  %v1400 = vadd.f32 %v1335, %v1399
  %v1401 = vpop.f32.mrb[0].mxu0
  %v1402 = vpop.f32.mrb[0].mxu0
  %v1403 = vadd.f32 %v1335, %v1402
  %v1404 = vpop.f32.mrb[0].mxu0
  %1405 = vdwg.mxu0
  %v1406 = vadd.f32 %v1233, %v1400
  %v1407 = vadd.f32 %v1234, %v1403
  %v1408 = vld [vmem:[%s22] sm:$0x1]
  %v1409 = vld [vmem:[%s23] sm:$0x1]
  %v1410 = vsel %vm294, %v1406, 0.0
  %1411 = vadd.xlane.f32.xlu0 %v1410
  %v1412 = vpop.xlane.xlu0 %1411
  %v1413 = vsel %vm294, %v1407, 0.0
  %1414 = vadd.xlane.f32.xlu0 %v1413
  %v1415 = vpop.xlane.xlu0 %1414
  %v1416 = vmul.f32 %v1412, %v301
  %v1417 = vmul.f32 %v1415, %v301
  %v1418 = vsub.f32 %v1406, %v1416
  %v1419 = vsub.f32 %v1407, %v1417
  %v1420 = vmul.f32 %v1418, %v1418
  %v1421 = vmul.f32 %v1419, %v1419
  %v1422 = vsel %vm294, %v1420, 0.0
  %1423 = vadd.xlane.f32.xlu0 %v1422
  %v1424 = vpop.xlane.xlu0 %1423
  %v1425 = vsel %vm294, %v1421, 0.0
  %1426 = vadd.xlane.f32.xlu0 %v1425
  %v1427 = vpop.xlane.xlu0 %1426
  %v1428 = vmul.f32 %v1424, %v301
  %v1429 = vmul.f32 %v1427, %v301
  %v1430 = vadd.f32 %v1428, 1e-12
  %v1431 = vadd.f32 %v1429, 1e-12
  %v1432 = vrsqrt.pop %v1430
  %v1433 = vrsqrt.pop %v1431
  %v1434 = vmul.f32 %v1418, %v1432
  %v1435 = vmul.f32 %v1419, %v1433
  %v1437 = vlaneseq
  %v1438 = vshrl.u32 %v1437, 7
  %v1439 = vsub.s32 0, %v1438
  %v1440 = vrot.slane %v1408, %v1439
  %v1442 = vmul.f32 %v1434, %v1440
  %v1443 = vmul.f32 %v1435, %v1440
  %v1445 = vlaneseq
  %v1446 = vshrl.u32 %v1445, 7
  %v1447 = vsub.s32 0, %v1446
  %v1448 = vrot.slane %v1409, %v1447
  %v1450 = vadd.f32 %v1442, %v1448
  %v1451 = vadd.f32 %v1443, %v1448
  %s1452 = scalar_lea.vmem %s8, 16
  %v1453 = vld [vmem:[%s1452] sm:$0xf]
  %v1454 = vld [vmem:[%s1452 + $0x4] sm:$0xf]
  %v1455 = vld [vmem:[%s1452 + $0x8] sm:$0xf]
  %v1456 = vld [vmem:[%s1452 + $0xc] sm:$0xf]
  %v1457 = vpack.c.bf16 %v1451, %v1450
  %s1458 = scalar_lea.vmem %s9, 1
  %v1459 = vld [vmem:[%s1458] sm:$0x1]
  %v1461 = vlaneseq
  %v1462 = vshrl.u32 %v1461, 7
  %v1463 = vsub.s32 0, %v1462
  %v1464 = vrot.slane %v1459, %v1463
  %v1470 = vunpack.c.l.b16 %v1453
  %v1471 = vunpack.c.l.b16 %v1454
  %v1472 = vunpack.c.l.b16 %v1455
  %v1473 = vunpack.c.l.b16 %v1456
  %v1474 = vpack.c.b16 %v1471, %v1470
  %v1475 = vpack.c.b16 %v1473, %v1472
  %v1479 = vsel %vm294, %v1457, 0
  %1481 = vmatprep.subr.bf16.mxu0 0
  %1482 = vmatpush1.bf16.msra.mxu0 %v1474
  %1483 = vmatprep.subr.bf16.mxu0 0
  %1484 = vmatpush1.bf16.msra.mxu0 %v1475
  %1485 = vmatprep.subr.bf16.mxu0 0
  %1486 = vmatpush1.bf16.msra.mxu0 0
  %1487 = vmatprep.subr.bf16.mxu0 0
  %1488 = vmatpush1.bf16.msra.mxu0 0
  %1489 = vmatprep.subr.bf16.mxu0 0
  %1490 = vmatpush1.bf16.msra.mxu0 0
  %1491 = vmatprep.subr.bf16.mxu0 0
  %1492 = vmatpush1.bf16.msra.mxu0 0
  %1493 = vmatprep.subr.bf16.mxu0 0
  %1494 = vmatpush1.bf16.msra.mxu0 0
  %1495 = vmatprep.subr.bf16.mxu0 0
  %1496 = vmatpush1.bf16.msra.mxu0 0
  %1497 = vmatprep.subr.bf16.mxu0 0
  %1498 = vmatpush1.bf16.msra.mxu0 0
  %1499 = vmatprep.subr.bf16.mxu0 0
  %1500 = vmatpush1.bf16.msra.mxu0 0
  %1501 = vmatprep.subr.bf16.mxu0 0
  %1502 = vmatpush1.bf16.msra.mxu0 0
  %1503 = vmatprep.subr.bf16.mxu0 0
  %1504 = vmatpush1.bf16.msra.mxu0 0
  %1505 = vmatprep.subr.bf16.mxu0 0
  %1506 = vmatpush1.bf16.msra.mxu0 0
  %1507 = vmatprep.subr.bf16.mxu0 0
  %1508 = vmatpush1.bf16.msra.mxu0 0
  %1509 = vmatprep.subr.bf16.mxu0 0
  %1510 = vmatpush1.bf16.msra.mxu0 0
  %1511 = vmatprep.subr.bf16.mxu0 0
  %1512 = vmatpush1.bf16.msra.mxu0 0
  %1513 = vmatprep.mubr.bf16.mxu0 0
  %1514 = vmatmul.mubr.bf16.gmra.mrb[0].mxu0 %v1479
  %v1515 = vpop.f32.mrb[0].mxu0
  %v1516 = vadd.f32 %v1464, %v1515
  %v1517 = vpop.f32.mrb[0].mxu0
  %v1518 = vpop.f32.mrb[0].mxu0
  %v1519 = vadd.f32 %v1464, %v1518
  %v1520 = vpop.f32.mrb[0].mxu0
  %1521 = vdwg.mxu0
  %s1522 = scalar_lea.vmem %s10, 16
  %v1523 = vld [vmem:[%s1522] sm:$0xf]
  %v1524 = vld [vmem:[%s1522 + $0x4] sm:$0xf]
  %v1525 = vld [vmem:[%s1522 + $0x8] sm:$0xf]
  %v1526 = vld [vmem:[%s1522 + $0xc] sm:$0xf]
  %s1527 = scalar_lea.vmem %s11, 1
  %v1528 = vld [vmem:[%s1527] sm:$0x1]
  %v1530 = vlaneseq
  %v1531 = vshrl.u32 %v1530, 7
  %v1532 = vsub.s32 0, %v1531
  %v1533 = vrot.slane %v1528, %v1532
  %v1539 = vunpack.c.l.b16 %v1523
  %v1540 = vunpack.c.l.b16 %v1524
  %v1541 = vunpack.c.l.b16 %v1525
  %v1542 = vunpack.c.l.b16 %v1526
  %v1543 = vpack.c.b16 %v1540, %v1539
  %v1544 = vpack.c.b16 %v1542, %v1541
  %1547 = vmatprep.subr.bf16.mxu0 0
  %1548 = vmatpush1.bf16.msra.mxu0 %v1543
  %1549 = vmatprep.subr.bf16.mxu0 0
  %1550 = vmatpush1.bf16.msra.mxu0 %v1544
  %1551 = vmatprep.subr.bf16.mxu0 0
  %1552 = vmatpush1.bf16.msra.mxu0 0
  %1553 = vmatprep.subr.bf16.mxu0 0
  %1554 = vmatpush1.bf16.msra.mxu0 0
  %1555 = vmatprep.subr.bf16.mxu0 0
  %1556 = vmatpush1.bf16.msra.mxu0 0
  %1557 = vmatprep.subr.bf16.mxu0 0
  %1558 = vmatpush1.bf16.msra.mxu0 0
  %1559 = vmatprep.subr.bf16.mxu0 0
  %1560 = vmatpush1.bf16.msra.mxu0 0
  %1561 = vmatprep.subr.bf16.mxu0 0
  %1562 = vmatpush1.bf16.msra.mxu0 0
  %1563 = vmatprep.subr.bf16.mxu0 0
  %1564 = vmatpush1.bf16.msra.mxu0 0
  %1565 = vmatprep.subr.bf16.mxu0 0
  %1566 = vmatpush1.bf16.msra.mxu0 0
  %1567 = vmatprep.subr.bf16.mxu0 0
  %1568 = vmatpush1.bf16.msra.mxu0 0
  %1569 = vmatprep.subr.bf16.mxu0 0
  %1570 = vmatpush1.bf16.msra.mxu0 0
  %1571 = vmatprep.subr.bf16.mxu0 0
  %1572 = vmatpush1.bf16.msra.mxu0 0
  %1573 = vmatprep.subr.bf16.mxu0 0
  %1574 = vmatpush1.bf16.msra.mxu0 0
  %1575 = vmatprep.subr.bf16.mxu0 0
  %1576 = vmatpush1.bf16.msra.mxu0 0
  %1577 = vmatprep.subr.bf16.mxu0 0
  %1578 = vmatpush1.bf16.msra.mxu0 0
  %1579 = vmatprep.mubr.bf16.mxu0 0
  %1580 = vmatmul.mubr.bf16.gmra.mrb[0].mxu0 %v1479
  %v1581 = vpop.f32.mrb[0].mxu0
  %v1582 = vadd.f32 %v1533, %v1581
  %v1583 = vpop.f32.mrb[0].mxu0
  %v1584 = vpop.f32.mrb[0].mxu0
  %v1585 = vadd.f32 %v1533, %v1584
  %v1586 = vpop.f32.mrb[0].mxu0
  %1587 = vdwg.mxu0
  %s1588 = scalar_lea.vmem %s12, 16
  %v1589 = vld [vmem:[%s1588] sm:$0xf]
  %v1590 = vld [vmem:[%s1588 + $0x4] sm:$0xf]
  %v1591 = vld [vmem:[%s1588 + $0x8] sm:$0xf]
  %v1592 = vld [vmem:[%s1588 + $0xc] sm:$0xf]
  %s1593 = scalar_lea.vmem %s13, 1
  %v1594 = vld [vmem:[%s1593] sm:$0x1]
  %v1596 = vlaneseq
  %v1597 = vshrl.u32 %v1596, 7
  %v1598 = vsub.s32 0, %v1597
  %v1599 = vrot.slane %v1594, %v1598
  %v1605 = vunpack.c.l.b16 %v1589
  %v1606 = vunpack.c.l.b16 %v1590
  %v1607 = vunpack.c.l.b16 %v1591
  %v1608 = vunpack.c.l.b16 %v1592
  %v1609 = vpack.c.b16 %v1606, %v1605
  %v1610 = vpack.c.b16 %v1608, %v1607
  %1613 = vmatprep.subr.bf16.mxu0 0
  %1614 = vmatpush1.bf16.msra.mxu0 %v1609
  %1615 = vmatprep.subr.bf16.mxu0 0
  %1616 = vmatpush1.bf16.msra.mxu0 %v1610
  %1617 = vmatprep.subr.bf16.mxu0 0
  %1618 = vmatpush1.bf16.msra.mxu0 0
  %1619 = vmatprep.subr.bf16.mxu0 0
  %1620 = vmatpush1.bf16.msra.mxu0 0
  %1621 = vmatprep.subr.bf16.mxu0 0
  %1622 = vmatpush1.bf16.msra.mxu0 0
  %1623 = vmatprep.subr.bf16.mxu0 0
  %1624 = vmatpush1.bf16.msra.mxu0 0
  %1625 = vmatprep.subr.bf16.mxu0 0
  %1626 = vmatpush1.bf16.msra.mxu0 0
  %1627 = vmatprep.subr.bf16.mxu0 0
  %1628 = vmatpush1.bf16.msra.mxu0 0
  %1629 = vmatprep.subr.bf16.mxu0 0
  %1630 = vmatpush1.bf16.msra.mxu0 0
  %1631 = vmatprep.subr.bf16.mxu0 0
  %1632 = vmatpush1.bf16.msra.mxu0 0
  %1633 = vmatprep.subr.bf16.mxu0 0
  %1634 = vmatpush1.bf16.msra.mxu0 0
  %1635 = vmatprep.subr.bf16.mxu0 0
  %1636 = vmatpush1.bf16.msra.mxu0 0
  %1637 = vmatprep.subr.bf16.mxu0 0
  %1638 = vmatpush1.bf16.msra.mxu0 0
  %1639 = vmatprep.subr.bf16.mxu0 0
  %1640 = vmatpush1.bf16.msra.mxu0 0
  %1641 = vmatprep.subr.bf16.mxu0 0
  %1642 = vmatpush1.bf16.msra.mxu0 0
  %1643 = vmatprep.subr.bf16.mxu0 0
  %1644 = vmatpush1.bf16.msra.mxu0 0
  %1645 = vmatprep.mubr.bf16.mxu0 0
  %1646 = vmatmul.mubr.bf16.gmra.mrb[0].mxu0 %v1479
  %v1647 = vpop.f32.mrb[0].mxu0
  %v1648 = vadd.f32 %v1599, %v1647
  %v1649 = vpop.f32.mrb[0].mxu0
  %v1650 = vpop.f32.mrb[0].mxu0
  %v1651 = vadd.f32 %v1599, %v1650
  %v1652 = vpop.f32.mrb[0].mxu0
  %1653 = vdwg.mxu0
  %s1654 = scalar_lea.vmem %s14, 16
  %v1655 = vld [vmem:[%s1654] sm:$0xf]
  %v1656 = vld [vmem:[%s1654 + $0x4] sm:$0xf]
  %v1657 = vld [vmem:[%s1654 + $0x8] sm:$0xf]
  %v1658 = vld [vmem:[%s1654 + $0xc] sm:$0xf]
  %v1659 = vpack.c.bf16 %v1516, %v1516
  %v1660 = vpack.c.bf16 %v1582, %v1582
  %v1662 = vsel %vm548, %v1659, 0
  %v1665 = vsel %vm548, %v1660, 0
  %1667 = vmatprep.subr.bf16.mxu0 0
  %1668 = vmatpush1.bf16.xpose.msra.mxu0 %v1665
  %1669 = vmatprep.subr.bf16.mxu0 0
  %1670 = vmatpush1.bf16.xpose.msra.mxu0 0
  %1671 = vmatprep.subr.bf16.mxu0 0
  %1672 = vmatpush1.bf16.xpose.msra.mxu0 0
  %1673 = vmatprep.subr.bf16.mxu0 0
  %1674 = vmatpush1.bf16.xpose.msra.mxu0 0
  %1675 = vmatprep.subr.bf16.mxu0 0
  %1676 = vmatpush1.bf16.xpose.msra.mxu0 0
  %1677 = vmatprep.subr.bf16.mxu0 0
  %1678 = vmatpush1.bf16.xpose.msra.mxu0 0
  %1679 = vmatprep.subr.bf16.mxu0 0
  %1680 = vmatpush1.bf16.xpose.msra.mxu0 0
  %1681 = vmatprep.subr.bf16.mxu0 0
  %1682 = vmatpush1.bf16.xpose.msra.mxu0 0
  %1683 = vmatprep.subr.bf16.mxu0 0
  %1684 = vmatpush1.bf16.xpose.msra.mxu0 0
  %1685 = vmatprep.subr.bf16.mxu0 0
  %1686 = vmatpush1.bf16.xpose.msra.mxu0 0
  %1687 = vmatprep.subr.bf16.mxu0 0
  %1688 = vmatpush1.bf16.xpose.msra.mxu0 0
  %1689 = vmatprep.subr.bf16.mxu0 0
  %1690 = vmatpush1.bf16.xpose.msra.mxu0 0
  %1691 = vmatprep.subr.bf16.mxu0 0
  %1692 = vmatpush1.bf16.xpose.msra.mxu0 0
  %1693 = vmatprep.subr.bf16.mxu0 0
  %1694 = vmatpush1.bf16.xpose.msra.mxu0 0
  %1695 = vmatprep.subr.bf16.mxu0 0
  %1696 = vmatpush1.bf16.xpose.msra.mxu0 0
  %1697 = vmatprep.subr.bf16.mxu0 0
  %1698 = vmatpush1.bf16.xpose.msra.mxu0 0
  %1699 = vmatprep.mubr.bf16.mxu0 0
  %1700 = vmatmul.mubr.bf16.gmra.mrb[0].mxu0 %v1662
  %v1701 = vpop.f32.mrb[0].mxu0
  %v1702 = vadd.f32 %v547, %v1701
  %v1703 = vpop.f32.mrb[0].mxu0
  %v1704 = vpop.f32.mrb[0].mxu0
  %v1705 = vpop.f32.mrb[0].mxu0
  %1706 = vdwg.mxu0
  %v1707 = vsel %vm131, %v1702, -inf
  %1708 = vmax.xlane.f32.xlu0 %v1707
  %v1709 = vpop.xlane.xlu0 %1708
  %v1710 = vsub.f32 %v1702, %v1709
  %v1711 = vmul.f32 %v1710, 1.442695
  %v1712 = vpow.pop %v1711
  %v1713 = vsel %vm131, %v1712, 0.0
  %1714 = vadd.xlane.f32.xlu0 %v1713
  %v1715 = vpop.xlane.xlu0 %1714
  %v1716 = vrcp.pop %v1715
  %v1717 = vmul.f32 %v1712, %v1716
  %v1718 = vpack.c.bf16 %v1717, %v1717
  %v1719 = vpack.c.bf16 %v1648, %v1648
  %v1721 = vsel %vm131, %v1718, 0
  %v1724 = vsel %vm611, %v1719, 0
  %1726 = vmatprep.subr.bf16.mxu0 0
  %1727 = vmatpush1.bf16.msra.mxu0 %v1724
  %1728 = vmatprep.subr.bf16.mxu0 0
  %1729 = vmatpush1.bf16.msra.mxu0 0
  %1730 = vmatprep.subr.bf16.mxu0 0
  %1731 = vmatpush1.bf16.msra.mxu0 0
  %1732 = vmatprep.subr.bf16.mxu0 0
  %1733 = vmatpush1.bf16.msra.mxu0 0
  %1734 = vmatprep.subr.bf16.mxu0 0
  %1735 = vmatpush1.bf16.msra.mxu0 0
  %1736 = vmatprep.subr.bf16.mxu0 0
  %1737 = vmatpush1.bf16.msra.mxu0 0
  %1738 = vmatprep.subr.bf16.mxu0 0
  %1739 = vmatpush1.bf16.msra.mxu0 0
  %1740 = vmatprep.subr.bf16.mxu0 0
  %1741 = vmatpush1.bf16.msra.mxu0 0
  %1742 = vmatprep.subr.bf16.mxu0 0
  %1743 = vmatpush1.bf16.msra.mxu0 0
  %1744 = vmatprep.subr.bf16.mxu0 0
  %1745 = vmatpush1.bf16.msra.mxu0 0
  %1746 = vmatprep.subr.bf16.mxu0 0
  %1747 = vmatpush1.bf16.msra.mxu0 0
  %1748 = vmatprep.subr.bf16.mxu0 0
  %1749 = vmatpush1.bf16.msra.mxu0 0
  %1750 = vmatprep.subr.bf16.mxu0 0
  %1751 = vmatpush1.bf16.msra.mxu0 0
  %1752 = vmatprep.subr.bf16.mxu0 0
  %1753 = vmatpush1.bf16.msra.mxu0 0
  %1754 = vmatprep.subr.bf16.mxu0 0
  %1755 = vmatpush1.bf16.msra.mxu0 0
  %1756 = vmatprep.subr.bf16.mxu0 0
  %1757 = vmatpush1.bf16.msra.mxu0 0
  %1758 = vmatprep.mubr.bf16.mxu0 0
  %1759 = vmatmul.mubr.bf16.gmra.mrb[0].mxu0 %v1721
  %v1760 = vpop.f32.mrb[0].mxu0
  %v1761 = vadd.f32 0.0, %v1760
  %v1762 = vpop.f32.mrb[0].mxu0
  %v1763 = vpop.f32.mrb[0].mxu0
  %v1764 = vpop.f32.mrb[0].mxu0
  %1765 = vdwg.mxu0
  %v1766 = vpack.c.bf16 %v1761, %v1761
  %1768 = vrot.lane.b32.xlu0 %v1659, 112
  %v1769 = vpop.permute.xlu0 %1768
  %1771 = vrot.lane.b32.xlu0 %v1660, 112
  %v1772 = vpop.permute.xlu0 %1771
  %v1774 = vsel %vm548, %v1769, 0
  %v1777 = vsel %vm548, %v1772, 0
  %1779 = vmatprep.subr.bf16.mxu0 0
  %1780 = vmatpush1.bf16.xpose.msra.mxu0 %v1777
  %1781 = vmatprep.subr.bf16.mxu0 0
  %1782 = vmatpush1.bf16.xpose.msra.mxu0 0
  %1783 = vmatprep.subr.bf16.mxu0 0
  %1784 = vmatpush1.bf16.xpose.msra.mxu0 0
  %1785 = vmatprep.subr.bf16.mxu0 0
  %1786 = vmatpush1.bf16.xpose.msra.mxu0 0
  %1787 = vmatprep.subr.bf16.mxu0 0
  %1788 = vmatpush1.bf16.xpose.msra.mxu0 0
  %1789 = vmatprep.subr.bf16.mxu0 0
  %1790 = vmatpush1.bf16.xpose.msra.mxu0 0
  %1791 = vmatprep.subr.bf16.mxu0 0
  %1792 = vmatpush1.bf16.xpose.msra.mxu0 0
  %1793 = vmatprep.subr.bf16.mxu0 0
  %1794 = vmatpush1.bf16.xpose.msra.mxu0 0
  %1795 = vmatprep.subr.bf16.mxu0 0
  %1796 = vmatpush1.bf16.xpose.msra.mxu0 0
  %1797 = vmatprep.subr.bf16.mxu0 0
  %1798 = vmatpush1.bf16.xpose.msra.mxu0 0
  %1799 = vmatprep.subr.bf16.mxu0 0
  %1800 = vmatpush1.bf16.xpose.msra.mxu0 0
  %1801 = vmatprep.subr.bf16.mxu0 0
  %1802 = vmatpush1.bf16.xpose.msra.mxu0 0
  %1803 = vmatprep.subr.bf16.mxu0 0
  %1804 = vmatpush1.bf16.xpose.msra.mxu0 0
  %1805 = vmatprep.subr.bf16.mxu0 0
  %1806 = vmatpush1.bf16.xpose.msra.mxu0 0
  %1807 = vmatprep.subr.bf16.mxu0 0
  %1808 = vmatpush1.bf16.xpose.msra.mxu0 0
  %1809 = vmatprep.subr.bf16.mxu0 0
  %1810 = vmatpush1.bf16.xpose.msra.mxu0 0
  %1811 = vmatprep.mubr.bf16.mxu0 0
  %1812 = vmatmul.mubr.bf16.gmra.mrb[0].mxu0 %v1774
  %v1813 = vpop.f32.mrb[0].mxu0
  %v1814 = vadd.f32 %v547, %v1813
  %v1815 = vpop.f32.mrb[0].mxu0
  %v1816 = vpop.f32.mrb[0].mxu0
  %v1817 = vpop.f32.mrb[0].mxu0
  %1818 = vdwg.mxu0
  %v1819 = vsel %vm131, %v1814, -inf
  %1820 = vmax.xlane.f32.xlu0 %v1819
  %v1821 = vpop.xlane.xlu0 %1820
  %v1822 = vsub.f32 %v1814, %v1821
  %v1823 = vmul.f32 %v1822, 1.442695
  %v1824 = vpow.pop %v1823
  %v1825 = vsel %vm131, %v1824, 0.0
  %1826 = vadd.xlane.f32.xlu0 %v1825
  %v1827 = vpop.xlane.xlu0 %1826
  %v1828 = vrcp.pop %v1827
  %v1829 = vmul.f32 %v1824, %v1828
  %v1830 = vpack.c.bf16 %v1829, %v1829
  %1832 = vrot.lane.b32.xlu0 %v1719, 112
  %v1833 = vpop.permute.xlu0 %1832
  %v1835 = vsel %vm131, %v1830, 0
  %v1838 = vsel %vm611, %v1833, 0
  %1840 = vmatprep.subr.bf16.mxu0 0
  %1841 = vmatpush1.bf16.msra.mxu0 %v1838
  %1842 = vmatprep.subr.bf16.mxu0 0
  %1843 = vmatpush1.bf16.msra.mxu0 0
  %1844 = vmatprep.subr.bf16.mxu0 0
  %1845 = vmatpush1.bf16.msra.mxu0 0
  %1846 = vmatprep.subr.bf16.mxu0 0
  %1847 = vmatpush1.bf16.msra.mxu0 0
  %1848 = vmatprep.subr.bf16.mxu0 0
  %1849 = vmatpush1.bf16.msra.mxu0 0
  %1850 = vmatprep.subr.bf16.mxu0 0
  %1851 = vmatpush1.bf16.msra.mxu0 0
  %1852 = vmatprep.subr.bf16.mxu0 0
  %1853 = vmatpush1.bf16.msra.mxu0 0
  %1854 = vmatprep.subr.bf16.mxu0 0
  %1855 = vmatpush1.bf16.msra.mxu0 0
  %1856 = vmatprep.subr.bf16.mxu0 0
  %1857 = vmatpush1.bf16.msra.mxu0 0
  %1858 = vmatprep.subr.bf16.mxu0 0
  %1859 = vmatpush1.bf16.msra.mxu0 0
  %1860 = vmatprep.subr.bf16.mxu0 0
  %1861 = vmatpush1.bf16.msra.mxu0 0
  %1862 = vmatprep.subr.bf16.mxu0 0
  %1863 = vmatpush1.bf16.msra.mxu0 0
  %1864 = vmatprep.subr.bf16.mxu0 0
  %1865 = vmatpush1.bf16.msra.mxu0 0
  %1866 = vmatprep.subr.bf16.mxu0 0
  %1867 = vmatpush1.bf16.msra.mxu0 0
  %1868 = vmatprep.subr.bf16.mxu0 0
  %1869 = vmatpush1.bf16.msra.mxu0 0
  %1870 = vmatprep.subr.bf16.mxu0 0
  %1871 = vmatpush1.bf16.msra.mxu0 0
  %1872 = vmatprep.mubr.bf16.mxu0 0
  %1873 = vmatmul.mubr.bf16.gmra.mrb[0].mxu0 %v1835
  %v1874 = vpop.f32.mrb[0].mxu0
  %v1875 = vadd.f32 0.0, %v1874
  %v1876 = vpop.f32.mrb[0].mxu0
  %v1877 = vpop.f32.mrb[0].mxu0
  %v1878 = vpop.f32.mrb[0].mxu0
  %1879 = vdwg.mxu0
  %v1880 = vpack.c.bf16 %v1875, %v1875
  %v1883 = vunpack.c.l.b16 %v1657
  %v1884 = vunpack.c.l.b16 %v1658
  %v1885 = vpack.c.b16 %v1884, %v1883
  %v1888 = vsel %vm548, %v1880, 0
  %1890 = vmatprep.subr.bf16.mxu0 0
  %1891 = vmatpush1.bf16.msra.mxu0 %v1885
  %1892 = vmatprep.subr.bf16.mxu0 0
  %1893 = vmatpush1.bf16.msra.mxu0 0
  %1894 = vmatprep.subr.bf16.mxu0 0
  %1895 = vmatpush1.bf16.msra.mxu0 0
  %1896 = vmatprep.subr.bf16.mxu0 0
  %1897 = vmatpush1.bf16.msra.mxu0 0
  %1898 = vmatprep.subr.bf16.mxu0 0
  %1899 = vmatpush1.bf16.msra.mxu0 0
  %1900 = vmatprep.subr.bf16.mxu0 0
  %1901 = vmatpush1.bf16.msra.mxu0 0
  %1902 = vmatprep.subr.bf16.mxu0 0
  %1903 = vmatpush1.bf16.msra.mxu0 0
  %1904 = vmatprep.subr.bf16.mxu0 0
  %1905 = vmatpush1.bf16.msra.mxu0 0
  %1906 = vmatprep.subr.bf16.mxu0 0
  %1907 = vmatpush1.bf16.msra.mxu0 0
  %1908 = vmatprep.subr.bf16.mxu0 0
  %1909 = vmatpush1.bf16.msra.mxu0 0
  %1910 = vmatprep.subr.bf16.mxu0 0
  %1911 = vmatpush1.bf16.msra.mxu0 0
  %1912 = vmatprep.subr.bf16.mxu0 0
  %1913 = vmatpush1.bf16.msra.mxu0 0
  %1914 = vmatprep.subr.bf16.mxu0 0
  %1915 = vmatpush1.bf16.msra.mxu0 0
  %1916 = vmatprep.subr.bf16.mxu0 0
  %1917 = vmatpush1.bf16.msra.mxu0 0
  %1918 = vmatprep.subr.bf16.mxu0 0
  %1919 = vmatpush1.bf16.msra.mxu0 0
  %1920 = vmatprep.subr.bf16.mxu0 0
  %1921 = vmatpush1.bf16.msra.mxu0 0
  %1922 = vmatprep.mubr.bf16.mxu0 0
  %1923 = vmatmul.mubr.bf16.gmra.mrb[0].mxu0 %v1888
  %v1924 = vpop.f32.mrb[0].mxu0
  %v1925 = vadd.f32 0.0, %v1924
  %v1926 = vpop.f32.mrb[0].mxu0
  %v1927 = vpop.f32.mrb[0].mxu0
  %v1928 = vpop.f32.mrb[0].mxu0
  %1929 = vdwg.mxu0
  %v1932 = vunpack.c.l.b16 %v1655
  %v1933 = vunpack.c.l.b16 %v1656
  %v1934 = vpack.c.b16 %v1933, %v1932
  %v1937 = vsel %vm548, %v1766, 0
  %1939 = vmatprep.subr.bf16.mxu0 0
  %1940 = vmatpush1.bf16.msra.mxu0 %v1934
  %1941 = vmatprep.subr.bf16.mxu0 0
  %1942 = vmatpush1.bf16.msra.mxu0 0
  %1943 = vmatprep.subr.bf16.mxu0 0
  %1944 = vmatpush1.bf16.msra.mxu0 0
  %1945 = vmatprep.subr.bf16.mxu0 0
  %1946 = vmatpush1.bf16.msra.mxu0 0
  %1947 = vmatprep.subr.bf16.mxu0 0
  %1948 = vmatpush1.bf16.msra.mxu0 0
  %1949 = vmatprep.subr.bf16.mxu0 0
  %1950 = vmatpush1.bf16.msra.mxu0 0
  %1951 = vmatprep.subr.bf16.mxu0 0
  %1952 = vmatpush1.bf16.msra.mxu0 0
  %1953 = vmatprep.subr.bf16.mxu0 0
  %1954 = vmatpush1.bf16.msra.mxu0 0
  %1955 = vmatprep.subr.bf16.mxu0 0
  %1956 = vmatpush1.bf16.msra.mxu0 0
  %1957 = vmatprep.subr.bf16.mxu0 0
  %1958 = vmatpush1.bf16.msra.mxu0 0
  %1959 = vmatprep.subr.bf16.mxu0 0
  %1960 = vmatpush1.bf16.msra.mxu0 0
  %1961 = vmatprep.subr.bf16.mxu0 0
  %1962 = vmatpush1.bf16.msra.mxu0 0
  %1963 = vmatprep.subr.bf16.mxu0 0
  %1964 = vmatpush1.bf16.msra.mxu0 0
  %1965 = vmatprep.subr.bf16.mxu0 0
  %1966 = vmatpush1.bf16.msra.mxu0 0
  %1967 = vmatprep.subr.bf16.mxu0 0
  %1968 = vmatpush1.bf16.msra.mxu0 0
  %1969 = vmatprep.subr.bf16.mxu0 0
  %1970 = vmatpush1.bf16.msra.mxu0 0
  %1971 = vmatprep.mubr.bf16.mxu0 0
  %1972 = vmatmul.mubr.bf16.gmra.mrb[0].mxu0 %v1937
  %v1973 = vpop.f32.mrb[0].mxu0
  %v1974 = vadd.f32 %v1925, %v1973
  %v1975 = vpop.f32.mrb[0].mxu0
  %v1976 = vpop.f32.mrb[0].mxu0
  %v1977 = vpop.f32.mrb[0].mxu0
  %1978 = vdwg.mxu0
  %v1979 = vpack.c.bf16 %v1519, %v1519
  %v1980 = vpack.c.bf16 %v1585, %v1585
  %v1982 = vsel %vm548, %v1979, 0
  %v1985 = vsel %vm548, %v1980, 0
  %1987 = vmatprep.subr.bf16.mxu0 0
  %1988 = vmatpush1.bf16.xpose.msra.mxu0 %v1985
  %1989 = vmatprep.subr.bf16.mxu0 0
  %1990 = vmatpush1.bf16.xpose.msra.mxu0 0
  %1991 = vmatprep.subr.bf16.mxu0 0
  %1992 = vmatpush1.bf16.xpose.msra.mxu0 0
  %1993 = vmatprep.subr.bf16.mxu0 0
  %1994 = vmatpush1.bf16.xpose.msra.mxu0 0
  %1995 = vmatprep.subr.bf16.mxu0 0
  %1996 = vmatpush1.bf16.xpose.msra.mxu0 0
  %1997 = vmatprep.subr.bf16.mxu0 0
  %1998 = vmatpush1.bf16.xpose.msra.mxu0 0
  %1999 = vmatprep.subr.bf16.mxu0 0
  %2000 = vmatpush1.bf16.xpose.msra.mxu0 0
  %2001 = vmatprep.subr.bf16.mxu0 0
  %2002 = vmatpush1.bf16.xpose.msra.mxu0 0
  %2003 = vmatprep.subr.bf16.mxu0 0
  %2004 = vmatpush1.bf16.xpose.msra.mxu0 0
  %2005 = vmatprep.subr.bf16.mxu0 0
  %2006 = vmatpush1.bf16.xpose.msra.mxu0 0
  %2007 = vmatprep.subr.bf16.mxu0 0
  %2008 = vmatpush1.bf16.xpose.msra.mxu0 0
  %2009 = vmatprep.subr.bf16.mxu0 0
  %2010 = vmatpush1.bf16.xpose.msra.mxu0 0
  %2011 = vmatprep.subr.bf16.mxu0 0
  %2012 = vmatpush1.bf16.xpose.msra.mxu0 0
  %2013 = vmatprep.subr.bf16.mxu0 0
  %2014 = vmatpush1.bf16.xpose.msra.mxu0 0
  %2015 = vmatprep.subr.bf16.mxu0 0
  %2016 = vmatpush1.bf16.xpose.msra.mxu0 0
  %2017 = vmatprep.subr.bf16.mxu0 0
  %2018 = vmatpush1.bf16.xpose.msra.mxu0 0
  %2019 = vmatprep.mubr.bf16.mxu0 0
  %2020 = vmatmul.mubr.bf16.gmra.mrb[0].mxu0 %v1982
  %v2021 = vpop.f32.mrb[0].mxu0
  %v2022 = vadd.f32 %v873, %v2021
  %v2023 = vpop.f32.mrb[0].mxu0
  %v2024 = vpop.f32.mrb[0].mxu0
  %v2025 = vpop.f32.mrb[0].mxu0
  %2026 = vdwg.mxu0
  %v2027 = vsel %vm131, %v2022, -inf
  %2028 = vmax.xlane.f32.xlu0 %v2027
  %v2029 = vpop.xlane.xlu0 %2028
  %v2030 = vsub.f32 %v2022, %v2029
  %v2031 = vmul.f32 %v2030, 1.442695
  %v2032 = vpow.pop %v2031
  %v2033 = vsel %vm131, %v2032, 0.0
  %2034 = vadd.xlane.f32.xlu0 %v2033
  %v2035 = vpop.xlane.xlu0 %2034
  %v2036 = vrcp.pop %v2035
  %v2037 = vmul.f32 %v2032, %v2036
  %v2038 = vpack.c.bf16 %v2037, %v2037
  %v2039 = vpack.c.bf16 %v1651, %v1651
  %v2041 = vsel %vm131, %v2038, 0
  %v2044 = vsel %vm611, %v2039, 0
  %2046 = vmatprep.subr.bf16.mxu0 0
  %2047 = vmatpush1.bf16.msra.mxu0 %v2044
  %2048 = vmatprep.subr.bf16.mxu0 0
  %2049 = vmatpush1.bf16.msra.mxu0 0
  %2050 = vmatprep.subr.bf16.mxu0 0
  %2051 = vmatpush1.bf16.msra.mxu0 0
  %2052 = vmatprep.subr.bf16.mxu0 0
  %2053 = vmatpush1.bf16.msra.mxu0 0
  %2054 = vmatprep.subr.bf16.mxu0 0
  %2055 = vmatpush1.bf16.msra.mxu0 0
  %2056 = vmatprep.subr.bf16.mxu0 0
  %2057 = vmatpush1.bf16.msra.mxu0 0
  %2058 = vmatprep.subr.bf16.mxu0 0
  %2059 = vmatpush1.bf16.msra.mxu0 0
  %2060 = vmatprep.subr.bf16.mxu0 0
  %2061 = vmatpush1.bf16.msra.mxu0 0
  %2062 = vmatprep.subr.bf16.mxu0 0
  %2063 = vmatpush1.bf16.msra.mxu0 0
  %2064 = vmatprep.subr.bf16.mxu0 0
  %2065 = vmatpush1.bf16.msra.mxu0 0
  %2066 = vmatprep.subr.bf16.mxu0 0
  %2067 = vmatpush1.bf16.msra.mxu0 0
  %2068 = vmatprep.subr.bf16.mxu0 0
  %2069 = vmatpush1.bf16.msra.mxu0 0
  %2070 = vmatprep.subr.bf16.mxu0 0
  %2071 = vmatpush1.bf16.msra.mxu0 0
  %2072 = vmatprep.subr.bf16.mxu0 0
  %2073 = vmatpush1.bf16.msra.mxu0 0
  %2074 = vmatprep.subr.bf16.mxu0 0
  %2075 = vmatpush1.bf16.msra.mxu0 0
  %2076 = vmatprep.subr.bf16.mxu0 0
  %2077 = vmatpush1.bf16.msra.mxu0 0
  %2078 = vmatprep.mubr.bf16.mxu0 0
  %2079 = vmatmul.mubr.bf16.gmra.mrb[0].mxu0 %v2041
  %v2080 = vpop.f32.mrb[0].mxu0
  %v2081 = vadd.f32 0.0, %v2080
  %v2082 = vpop.f32.mrb[0].mxu0
  %v2083 = vpop.f32.mrb[0].mxu0
  %v2084 = vpop.f32.mrb[0].mxu0
  %2085 = vdwg.mxu0
  %v2086 = vpack.c.bf16 %v2081, %v2081
  %2088 = vrot.lane.b32.xlu0 %v1979, 112
  %v2089 = vpop.permute.xlu0 %2088
  %2091 = vrot.lane.b32.xlu0 %v1980, 112
  %v2092 = vpop.permute.xlu0 %2091
  %v2094 = vsel %vm548, %v2089, 0
  %v2097 = vsel %vm548, %v2092, 0
  %2099 = vmatprep.subr.bf16.mxu0 0
  %2100 = vmatpush1.bf16.xpose.msra.mxu0 %v2097
  %2101 = vmatprep.subr.bf16.mxu0 0
  %2102 = vmatpush1.bf16.xpose.msra.mxu0 0
  %2103 = vmatprep.subr.bf16.mxu0 0
  %2104 = vmatpush1.bf16.xpose.msra.mxu0 0
  %2105 = vmatprep.subr.bf16.mxu0 0
  %2106 = vmatpush1.bf16.xpose.msra.mxu0 0
  %2107 = vmatprep.subr.bf16.mxu0 0
  %2108 = vmatpush1.bf16.xpose.msra.mxu0 0
  %2109 = vmatprep.subr.bf16.mxu0 0
  %2110 = vmatpush1.bf16.xpose.msra.mxu0 0
  %2111 = vmatprep.subr.bf16.mxu0 0
  %2112 = vmatpush1.bf16.xpose.msra.mxu0 0
  %2113 = vmatprep.subr.bf16.mxu0 0
  %2114 = vmatpush1.bf16.xpose.msra.mxu0 0
  %2115 = vmatprep.subr.bf16.mxu0 0
  %2116 = vmatpush1.bf16.xpose.msra.mxu0 0
  %2117 = vmatprep.subr.bf16.mxu0 0
  %2118 = vmatpush1.bf16.xpose.msra.mxu0 0
  %2119 = vmatprep.subr.bf16.mxu0 0
  %2120 = vmatpush1.bf16.xpose.msra.mxu0 0
  %2121 = vmatprep.subr.bf16.mxu0 0
  %2122 = vmatpush1.bf16.xpose.msra.mxu0 0
  %2123 = vmatprep.subr.bf16.mxu0 0
  %2124 = vmatpush1.bf16.xpose.msra.mxu0 0
  %2125 = vmatprep.subr.bf16.mxu0 0
  %2126 = vmatpush1.bf16.xpose.msra.mxu0 0
  %2127 = vmatprep.subr.bf16.mxu0 0
  %2128 = vmatpush1.bf16.xpose.msra.mxu0 0
  %2129 = vmatprep.subr.bf16.mxu0 0
  %2130 = vmatpush1.bf16.xpose.msra.mxu0 0
  %2131 = vmatprep.mubr.bf16.mxu0 0
  %2132 = vmatmul.mubr.bf16.gmra.mrb[0].mxu0 %v2094
  %v2133 = vpop.f32.mrb[0].mxu0
  %v2134 = vadd.f32 %v873, %v2133
  %v2135 = vpop.f32.mrb[0].mxu0
  %v2136 = vpop.f32.mrb[0].mxu0
  %v2137 = vpop.f32.mrb[0].mxu0
  %2138 = vdwg.mxu0
  %v2139 = vsel %vm131, %v2134, -inf
  %2140 = vmax.xlane.f32.xlu0 %v2139
  %v2141 = vpop.xlane.xlu0 %2140
  %v2142 = vsub.f32 %v2134, %v2141
  %v2143 = vmul.f32 %v2142, 1.442695
  %v2144 = vpow.pop %v2143
  %v2145 = vsel %vm131, %v2144, 0.0
  %2146 = vadd.xlane.f32.xlu0 %v2145
  %v2147 = vpop.xlane.xlu0 %2146
  %v2148 = vrcp.pop %v2147
  %v2149 = vmul.f32 %v2144, %v2148
  %v2150 = vpack.c.bf16 %v2149, %v2149
  %2152 = vrot.lane.b32.xlu0 %v2039, 112
  %v2153 = vpop.permute.xlu0 %2152
  %v2155 = vsel %vm131, %v2150, 0
  %v2158 = vsel %vm611, %v2153, 0
  %2160 = vmatprep.subr.bf16.mxu0 0
  %2161 = vmatpush1.bf16.msra.mxu0 %v2158
  %2162 = vmatprep.subr.bf16.mxu0 0
  %2163 = vmatpush1.bf16.msra.mxu0 0
  %2164 = vmatprep.subr.bf16.mxu0 0
  %2165 = vmatpush1.bf16.msra.mxu0 0
  %2166 = vmatprep.subr.bf16.mxu0 0
  %2167 = vmatpush1.bf16.msra.mxu0 0
  %2168 = vmatprep.subr.bf16.mxu0 0
  %2169 = vmatpush1.bf16.msra.mxu0 0
  %2170 = vmatprep.subr.bf16.mxu0 0
  %2171 = vmatpush1.bf16.msra.mxu0 0
  %2172 = vmatprep.subr.bf16.mxu0 0
  %2173 = vmatpush1.bf16.msra.mxu0 0
  %2174 = vmatprep.subr.bf16.mxu0 0
  %2175 = vmatpush1.bf16.msra.mxu0 0
  %2176 = vmatprep.subr.bf16.mxu0 0
  %2177 = vmatpush1.bf16.msra.mxu0 0
  %2178 = vmatprep.subr.bf16.mxu0 0
  %2179 = vmatpush1.bf16.msra.mxu0 0
  %2180 = vmatprep.subr.bf16.mxu0 0
  %2181 = vmatpush1.bf16.msra.mxu0 0
  %2182 = vmatprep.subr.bf16.mxu0 0
  %2183 = vmatpush1.bf16.msra.mxu0 0
  %2184 = vmatprep.subr.bf16.mxu0 0
  %2185 = vmatpush1.bf16.msra.mxu0 0
  %2186 = vmatprep.subr.bf16.mxu0 0
  %2187 = vmatpush1.bf16.msra.mxu0 0
  %2188 = vmatprep.subr.bf16.mxu0 0
  %2189 = vmatpush1.bf16.msra.mxu0 0
  %2190 = vmatprep.subr.bf16.mxu0 0
  %2191 = vmatpush1.bf16.msra.mxu0 0
  %2192 = vmatprep.mubr.bf16.mxu0 0
  %2193 = vmatmul.mubr.bf16.gmra.mrb[0].mxu0 %v2155
  %v2194 = vpop.f32.mrb[0].mxu0
  %v2195 = vadd.f32 0.0, %v2194
  %v2196 = vpop.f32.mrb[0].mxu0
  %v2197 = vpop.f32.mrb[0].mxu0
  %v2198 = vpop.f32.mrb[0].mxu0
  %2199 = vdwg.mxu0
  %v2200 = vpack.c.bf16 %v2195, %v2195
  %v2202 = vsel %vm548, %v2200, 0
  %2204 = vmatprep.subr.bf16.mxu0 0
  %2205 = vmatpush1.bf16.msra.mxu0 %v1885
  %2206 = vmatprep.subr.bf16.mxu0 0
  %2207 = vmatpush1.bf16.msra.mxu0 0
  %2208 = vmatprep.subr.bf16.mxu0 0
  %2209 = vmatpush1.bf16.msra.mxu0 0
  %2210 = vmatprep.subr.bf16.mxu0 0
  %2211 = vmatpush1.bf16.msra.mxu0 0
  %2212 = vmatprep.subr.bf16.mxu0 0
  %2213 = vmatpush1.bf16.msra.mxu0 0
  %2214 = vmatprep.subr.bf16.mxu0 0
  %2215 = vmatpush1.bf16.msra.mxu0 0
  %2216 = vmatprep.subr.bf16.mxu0 0
  %2217 = vmatpush1.bf16.msra.mxu0 0
  %2218 = vmatprep.subr.bf16.mxu0 0
  %2219 = vmatpush1.bf16.msra.mxu0 0
  %2220 = vmatprep.subr.bf16.mxu0 0
  %2221 = vmatpush1.bf16.msra.mxu0 0
  %2222 = vmatprep.subr.bf16.mxu0 0
  %2223 = vmatpush1.bf16.msra.mxu0 0
  %2224 = vmatprep.subr.bf16.mxu0 0
  %2225 = vmatpush1.bf16.msra.mxu0 0
  %2226 = vmatprep.subr.bf16.mxu0 0
  %2227 = vmatpush1.bf16.msra.mxu0 0
  %2228 = vmatprep.subr.bf16.mxu0 0
  %2229 = vmatpush1.bf16.msra.mxu0 0
  %2230 = vmatprep.subr.bf16.mxu0 0
  %2231 = vmatpush1.bf16.msra.mxu0 0
  %2232 = vmatprep.subr.bf16.mxu0 0
  %2233 = vmatpush1.bf16.msra.mxu0 0
  %2234 = vmatprep.subr.bf16.mxu0 0
  %2235 = vmatpush1.bf16.msra.mxu0 0
  %2236 = vmatprep.mubr.bf16.mxu0 0
  %2237 = vmatmul.mubr.bf16.gmra.mrb[0].mxu0 %v2202
  %v2238 = vpop.f32.mrb[0].mxu0
  %v2239 = vadd.f32 0.0, %v2238
  %v2240 = vpop.f32.mrb[0].mxu0
  %v2241 = vpop.f32.mrb[0].mxu0
  %v2242 = vpop.f32.mrb[0].mxu0
  %2243 = vdwg.mxu0
  %v2245 = vsel %vm548, %v2086, 0
  %2247 = vmatprep.subr.bf16.mxu0 0
  %2248 = vmatpush1.bf16.msra.mxu0 %v1934
  %2249 = vmatprep.subr.bf16.mxu0 0
  %2250 = vmatpush1.bf16.msra.mxu0 0
  %2251 = vmatprep.subr.bf16.mxu0 0
  %2252 = vmatpush1.bf16.msra.mxu0 0
  %2253 = vmatprep.subr.bf16.mxu0 0
  %2254 = vmatpush1.bf16.msra.mxu0 0
  %2255 = vmatprep.subr.bf16.mxu0 0
  %2256 = vmatpush1.bf16.msra.mxu0 0
  %2257 = vmatprep.subr.bf16.mxu0 0
  %2258 = vmatpush1.bf16.msra.mxu0 0
  %2259 = vmatprep.subr.bf16.mxu0 0
  %2260 = vmatpush1.bf16.msra.mxu0 0
  %2261 = vmatprep.subr.bf16.mxu0 0
  %2262 = vmatpush1.bf16.msra.mxu0 0
  %2263 = vmatprep.subr.bf16.mxu0 0
  %2264 = vmatpush1.bf16.msra.mxu0 0
  %2265 = vmatprep.subr.bf16.mxu0 0
  %2266 = vmatpush1.bf16.msra.mxu0 0
  %2267 = vmatprep.subr.bf16.mxu0 0
  %2268 = vmatpush1.bf16.msra.mxu0 0
  %2269 = vmatprep.subr.bf16.mxu0 0
  %2270 = vmatpush1.bf16.msra.mxu0 0
  %2271 = vmatprep.subr.bf16.mxu0 0
  %2272 = vmatpush1.bf16.msra.mxu0 0
  %2273 = vmatprep.subr.bf16.mxu0 0
  %2274 = vmatpush1.bf16.msra.mxu0 0
  %2275 = vmatprep.subr.bf16.mxu0 0
  %2276 = vmatpush1.bf16.msra.mxu0 0
  %2277 = vmatprep.subr.bf16.mxu0 0
  %2278 = vmatpush1.bf16.msra.mxu0 0
  %2279 = vmatprep.mubr.bf16.mxu0 0
  %2280 = vmatmul.mubr.bf16.gmra.mrb[0].mxu0 %v2245
  %v2281 = vpop.f32.mrb[0].mxu0
  %v2282 = vadd.f32 %v2239, %v2281
  %v2283 = vpop.f32.mrb[0].mxu0
  %v2284 = vpop.f32.mrb[0].mxu0
  %v2285 = vpop.f32.mrb[0].mxu0
  %2286 = vdwg.mxu0
  %s2287 = scalar_lea.vmem %s15, 1
  %v2288 = vld [vmem:[%s2287] sm:$0x1]
  %v2290 = vlaneseq
  %v2291 = vshrl.u32 %v2290, 7
  %v2292 = vsub.s32 0, %v2291
  %v2293 = vrot.slane %v2288, %v2292
  %v2295 = vadd.f32 %v1974, %v2293
  %v2296 = vadd.f32 %v2282, %v2293
  %v2297 = vadd.f32 %v1450, %v2295
  %v2298 = vadd.f32 %v1451, %v2296
  %s2299 = scalar_lea.vmem %s16, 1
  %v2300 = vld [vmem:[%s2299] sm:$0x1]
  %s2301 = scalar_lea.vmem %s17, 1
  %v2302 = vld [vmem:[%s2301] sm:$0x1]
  %v2303 = vsel %vm294, %v2297, 0.0
  %2304 = vadd.xlane.f32.xlu0 %v2303
  %v2305 = vpop.xlane.xlu0 %2304
  %v2306 = vsel %vm294, %v2298, 0.0
  %2307 = vadd.xlane.f32.xlu0 %v2306
  %v2308 = vpop.xlane.xlu0 %2307
  %v2309 = vmul.f32 %v2305, %v301
  %v2310 = vmul.f32 %v2308, %v301
  %v2311 = vsub.f32 %v2297, %v2309
  %v2312 = vsub.f32 %v2298, %v2310
  %v2313 = vmul.f32 %v2311, %v2311
  %v2314 = vmul.f32 %v2312, %v2312
  %v2315 = vsel %vm294, %v2313, 0.0
  %2316 = vadd.xlane.f32.xlu0 %v2315
  %v2317 = vpop.xlane.xlu0 %2316
  %v2318 = vsel %vm294, %v2314, 0.0
  %2319 = vadd.xlane.f32.xlu0 %v2318
  %v2320 = vpop.xlane.xlu0 %2319
  %v2321 = vmul.f32 %v2317, %v301
  %v2322 = vmul.f32 %v2320, %v301
  %v2323 = vadd.f32 %v2321, 1e-12
  %v2324 = vadd.f32 %v2322, 1e-12
  %v2325 = vrsqrt.pop %v2323
  %v2326 = vrsqrt.pop %v2324
  %v2327 = vmul.f32 %v2311, %v2325
  %v2328 = vmul.f32 %v2312, %v2326
  %v2330 = vlaneseq
  %v2331 = vshrl.u32 %v2330, 7
  %v2332 = vsub.s32 0, %v2331
  %v2333 = vrot.slane %v2300, %v2332
  %v2335 = vmul.f32 %v2327, %v2333
  %v2336 = vmul.f32 %v2328, %v2333
  %v2338 = vlaneseq
  %v2339 = vshrl.u32 %v2338, 7
  %v2340 = vsub.s32 0, %v2339
  %v2341 = vrot.slane %v2302, %v2340
  %v2343 = vadd.f32 %v2335, %v2341
  %v2344 = vadd.f32 %v2336, %v2341
  %s2345 = scalar_lea.vmem %s18, 16
  %v2346 = vld [vmem:[%s2345] sm:$0xf]
  %v2347 = vld [vmem:[%s2345 + $0x4] sm:$0xf]
  %v2348 = vld [vmem:[%s2345 + $0x8] sm:$0xf]
  %v2349 = vld [vmem:[%s2345 + $0xc] sm:$0xf]
  %v2350 = vpack.c.bf16 %v2344, %v2343
  %s2351 = scalar_lea.vmem %s19, 1
  %v2352 = vld [vmem:[%s2351] sm:$0x1]
  %v2354 = vlaneseq
  %v2355 = vshrl.u32 %v2354, 7
  %v2356 = vsub.s32 0, %v2355
  %v2357 = vrot.slane %v2352, %v2356
  %v2363 = vunpack.c.l.b16 %v2346
  %v2364 = vunpack.c.l.b16 %v2347
  %v2365 = vunpack.c.l.b16 %v2348
  %v2366 = vunpack.c.l.b16 %v2349
  %v2367 = vpack.c.b16 %v2364, %v2363
  %v2368 = vpack.c.b16 %v2366, %v2365
  %v2372 = vsel %vm294, %v2350, 0
  %2374 = vmatprep.subr.bf16.mxu0 0
  %2375 = vmatpush1.bf16.msra.mxu0 %v2367
  %2376 = vmatprep.subr.bf16.mxu0 0
  %2377 = vmatpush1.bf16.msra.mxu0 %v2368
  %2378 = vmatprep.subr.bf16.mxu0 0
  %2379 = vmatpush1.bf16.msra.mxu0 0
  %2380 = vmatprep.subr.bf16.mxu0 0
  %2381 = vmatpush1.bf16.msra.mxu0 0
  %2382 = vmatprep.subr.bf16.mxu0 0
  %2383 = vmatpush1.bf16.msra.mxu0 0
  %2384 = vmatprep.subr.bf16.mxu0 0
  %2385 = vmatpush1.bf16.msra.mxu0 0
  %2386 = vmatprep.subr.bf16.mxu0 0
  %2387 = vmatpush1.bf16.msra.mxu0 0
  %2388 = vmatprep.subr.bf16.mxu0 0
  %2389 = vmatpush1.bf16.msra.mxu0 0
  %2390 = vmatprep.subr.bf16.mxu0 0
  %2391 = vmatpush1.bf16.msra.mxu0 0
  %2392 = vmatprep.subr.bf16.mxu0 0
  %2393 = vmatpush1.bf16.msra.mxu0 0
  %2394 = vmatprep.subr.bf16.mxu0 0
  %2395 = vmatpush1.bf16.msra.mxu0 0
  %2396 = vmatprep.subr.bf16.mxu0 0
  %2397 = vmatpush1.bf16.msra.mxu0 0
  %2398 = vmatprep.subr.bf16.mxu0 0
  %2399 = vmatpush1.bf16.msra.mxu0 0
  %2400 = vmatprep.subr.bf16.mxu0 0
  %2401 = vmatpush1.bf16.msra.mxu0 0
  %2402 = vmatprep.subr.bf16.mxu0 0
  %2403 = vmatpush1.bf16.msra.mxu0 0
  %2404 = vmatprep.subr.bf16.mxu0 0
  %2405 = vmatpush1.bf16.msra.mxu0 0
  %2406 = vmatprep.mubr.bf16.mxu0 0
  %2407 = vmatmul.mubr.bf16.gmra.mrb[0].mxu0 %v2372
  %v2408 = vpop.f32.mrb[0].mxu0
  %v2409 = vadd.f32 %v2357, %v2408
  %v2410 = vpop.f32.mrb[0].mxu0
  %v2411 = vpop.f32.mrb[0].mxu0
  %v2412 = vadd.f32 %v2357, %v2411
  %v2413 = vpop.f32.mrb[0].mxu0
  %2414 = vdwg.mxu0
  %v2415 = vmul.f32 %v2409, 0.5
  %v2416 = vmul.f32 %v2412, 0.5
  %v2417 = vmul.f32 %v2409, 0.044715
  %v2418 = vmul.f32 %v2412, 0.044715
  %v2419 = vmul.f32 %v2417, %v2409
  %v2420 = vmul.f32 %v2418, %v2412
  %v2421 = vmul.f32 %v2419, %v2409
  %v2422 = vmul.f32 %v2420, %v2412
  %v2423 = vadd.f32 %v2409, %v2421
  %v2424 = vadd.f32 %v2412, %v2422
  %v2425 = vmul.f32 %v2423, 0.7978846
  %v2426 = vmul.f32 %v2424, 0.7978846
  %v2427 = vtanh.pop %v2425
  %v2428 = vtanh.pop %v2426
  %v2429 = vadd.f32 %v2427, 1.0
  %v2430 = vadd.f32 %v2428, 1.0
  %v2431 = vmul.f32 %v2415, %v2429
  %v2432 = vmul.f32 %v2416, %v2430
  %s2433 = scalar_lea.vmem %s20, 32
  %v2434 = vld [vmem:[%s2433] sm:$0xf]
  %v2435 = vld [vmem:[%s2433 + $0x4] sm:$0xf]
  %v2436 = vld [vmem:[%s2433 + $0x8] sm:$0xf]
  %v2437 = vld [vmem:[%s2433 + $0xc] sm:$0xf]
  %v2438 = vld [vmem:[%s2433 + $0x10] sm:$0xf]
  %v2439 = vld [vmem:[%s2433 + $0x14] sm:$0xf]
  %v2440 = vld [vmem:[%s2433 + $0x18] sm:$0xf]
  %v2441 = vld [vmem:[%s2433 + $0x1c] sm:$0xf]
  %v2442 = vpack.c.bf16 %v2432, %v2431
  %s2443 = scalar_lea.vmem %s21, 1
  %v2444 = vld [vmem:[%s2443] sm:$0x1]
  %v2446 = vlaneseq
  %v2447 = vshrl.u32 %v2446, 7
  %v2448 = vsub.s32 0, %v2447
  %v2449 = vrot.slane %v2444, %v2448
  %v2459 = vunpack.c.l.b16 %v2434
  %v2460 = vunpack.c.l.b16 %v2435
  %v2461 = vunpack.c.l.b16 %v2436
  %v2462 = vunpack.c.l.b16 %v2437
  %v2463 = vunpack.c.l.b16 %v2438
  %v2464 = vunpack.c.l.b16 %v2439
  %v2465 = vunpack.c.l.b16 %v2440
  %v2466 = vunpack.c.l.b16 %v2441
  %v2467 = vpack.c.b16 %v2460, %v2459
  %v2468 = vpack.c.b16 %v2462, %v2461
  %v2469 = vpack.c.b16 %v2464, %v2463
  %v2470 = vpack.c.b16 %v2466, %v2465
  %v2476 = vsel %vm1361, %v2442, 0
  %2478 = vmatprep.subr.bf16.mxu0 0
  %2479 = vmatpush1.bf16.msra.mxu0 %v2467
  %2480 = vmatprep.subr.bf16.mxu0 0
  %2481 = vmatpush1.bf16.msra.mxu0 %v2468
  %2482 = vmatprep.subr.bf16.mxu0 0
  %2483 = vmatpush1.bf16.msra.mxu0 %v2469
  %2484 = vmatprep.subr.bf16.mxu0 0
  %2485 = vmatpush1.bf16.msra.mxu0 %v2470
  %2486 = vmatprep.subr.bf16.mxu0 0
  %2487 = vmatpush1.bf16.msra.mxu0 0
  %2488 = vmatprep.subr.bf16.mxu0 0
  %2489 = vmatpush1.bf16.msra.mxu0 0
  %2490 = vmatprep.subr.bf16.mxu0 0
  %2491 = vmatpush1.bf16.msra.mxu0 0
  %2492 = vmatprep.subr.bf16.mxu0 0
  %2493 = vmatpush1.bf16.msra.mxu0 0
  %2494 = vmatprep.subr.bf16.mxu0 0
  %2495 = vmatpush1.bf16.msra.mxu0 0
  %2496 = vmatprep.subr.bf16.mxu0 0
  %2497 = vmatpush1.bf16.msra.mxu0 0
  %2498 = vmatprep.subr.bf16.mxu0 0
  %2499 = vmatpush1.bf16.msra.mxu0 0
  %2500 = vmatprep.subr.bf16.mxu0 0
  %2501 = vmatpush1.bf16.msra.mxu0 0
  %2502 = vmatprep.subr.bf16.mxu0 0
  %2503 = vmatpush1.bf16.msra.mxu0 0
  %2504 = vmatprep.subr.bf16.mxu0 0
  %2505 = vmatpush1.bf16.msra.mxu0 0
  %2506 = vmatprep.subr.bf16.mxu0 0
  %2507 = vmatpush1.bf16.msra.mxu0 0
  %2508 = vmatprep.subr.bf16.mxu0 0
  %2509 = vmatpush1.bf16.msra.mxu0 0
  %2510 = vmatprep.mubr.bf16.mxu0 0
  %2511 = vmatmul.mubr.bf16.gmra.mrb[0].mxu0 %v2476
  %v2512 = vpop.f32.mrb[0].mxu0
  %v2513 = vadd.f32 %v2449, %v2512
  %v2514 = vpop.f32.mrb[0].mxu0
  %v2515 = vpop.f32.mrb[0].mxu0
  %v2516 = vadd.f32 %v2449, %v2515
  %v2517 = vpop.f32.mrb[0].mxu0
  %2518 = vdwg.mxu0
  %v2519 = vadd.f32 %v2343, %v2513
  %v2520 = vadd.f32 %v2344, %v2516
  %s2521 = scalar_lea.vmem %s22, 1
  %v2522 = vld [vmem:[%s2521] sm:$0x1]
  %s2523 = scalar_lea.vmem %s23, 1
  %v2524 = vld [vmem:[%s2523] sm:$0x1]
  %v2525 = vsel %vm294, %v2519, 0.0
  %2526 = vadd.xlane.f32.xlu0 %v2525
  %v2527 = vpop.xlane.xlu0 %2526
  %v2528 = vsel %vm294, %v2520, 0.0
  %2529 = vadd.xlane.f32.xlu0 %v2528
  %v2530 = vpop.xlane.xlu0 %2529
  %v2531 = vmul.f32 %v2527, %v301
  %v2532 = vmul.f32 %v2530, %v301
  %v2533 = vsub.f32 %v2519, %v2531
  %v2534 = vsub.f32 %v2520, %v2532
  %v2535 = vmul.f32 %v2533, %v2533
  %v2536 = vmul.f32 %v2534, %v2534
  %v2537 = vsel %vm294, %v2535, 0.0
  %2538 = vadd.xlane.f32.xlu0 %v2537
  %v2539 = vpop.xlane.xlu0 %2538
  %v2540 = vsel %vm294, %v2536, 0.0
  %2541 = vadd.xlane.f32.xlu0 %v2540
  %v2542 = vpop.xlane.xlu0 %2541
  %v2543 = vmul.f32 %v2539, %v301
  %v2544 = vmul.f32 %v2542, %v301
  %v2545 = vadd.f32 %v2543, 1e-12
  %v2546 = vadd.f32 %v2544, 1e-12
  %v2547 = vrsqrt.pop %v2545
  %v2548 = vrsqrt.pop %v2546
  %v2549 = vmul.f32 %v2533, %v2547
  %v2550 = vmul.f32 %v2534, %v2548
  %v2552 = vlaneseq
  %v2553 = vshrl.u32 %v2552, 7
  %v2554 = vsub.s32 0, %v2553
  %v2555 = vrot.slane %v2522, %v2554
  %v2557 = vmul.f32 %v2549, %v2555
  %v2558 = vmul.f32 %v2550, %v2555
  %v2560 = vlaneseq
  %v2561 = vshrl.u32 %v2560, 7
  %v2562 = vsub.s32 0, %v2561
  %v2563 = vrot.slane %v2524, %v2562
  %v2565 = vadd.f32 %v2557, %v2563
  %v2566 = vadd.f32 %v2558, %v2563
  %v2567 = vld [vmem:[%s24] sm:$0xf]
  %v2568 = vld [vmem:[%s24 + $0x4] sm:$0xf]
  %v2569 = vld [vmem:[%s24 + $0x8] sm:$0xf]
  %v2570 = vld [vmem:[%s24 + $0xc] sm:$0xf]
  %v2571 = vpack.c.bf16 %v2566, %v2565
  %v2572 = vld [vmem:[%s25] sm:$0x1]
  %v2574 = vlaneseq
  %v2575 = vshrl.u32 %v2574, 7
  %v2576 = vsub.s32 0, %v2575
  %v2577 = vrot.slane %v2572, %v2576
  %v2583 = vunpack.c.l.b16 %v2567
  %v2584 = vunpack.c.l.b16 %v2568
  %v2585 = vunpack.c.l.b16 %v2569
  %v2586 = vunpack.c.l.b16 %v2570
  %v2587 = vpack.c.b16 %v2584, %v2583
  %v2588 = vpack.c.b16 %v2586, %v2585
  %v2592 = vsel %vm294, %v2571, 0
  %2594 = vmatprep.subr.bf16.mxu0 0
  %2595 = vmatpush1.bf16.msra.mxu0 %v2587
  %2596 = vmatprep.subr.bf16.mxu0 0
  %2597 = vmatpush1.bf16.msra.mxu0 %v2588
  %2598 = vmatprep.subr.bf16.mxu0 0
  %2599 = vmatpush1.bf16.msra.mxu0 0
  %2600 = vmatprep.subr.bf16.mxu0 0
  %2601 = vmatpush1.bf16.msra.mxu0 0
  %2602 = vmatprep.subr.bf16.mxu0 0
  %2603 = vmatpush1.bf16.msra.mxu0 0
  %2604 = vmatprep.subr.bf16.mxu0 0
  %2605 = vmatpush1.bf16.msra.mxu0 0
  %2606 = vmatprep.subr.bf16.mxu0 0
  %2607 = vmatpush1.bf16.msra.mxu0 0
  %2608 = vmatprep.subr.bf16.mxu0 0
  %2609 = vmatpush1.bf16.msra.mxu0 0
  %2610 = vmatprep.subr.bf16.mxu0 0
  %2611 = vmatpush1.bf16.msra.mxu0 0
  %2612 = vmatprep.subr.bf16.mxu0 0
  %2613 = vmatpush1.bf16.msra.mxu0 0
  %2614 = vmatprep.subr.bf16.mxu0 0
  %2615 = vmatpush1.bf16.msra.mxu0 0
  %2616 = vmatprep.subr.bf16.mxu0 0
  %2617 = vmatpush1.bf16.msra.mxu0 0
  %2618 = vmatprep.subr.bf16.mxu0 0
  %2619 = vmatpush1.bf16.msra.mxu0 0
  %2620 = vmatprep.subr.bf16.mxu0 0
  %2621 = vmatpush1.bf16.msra.mxu0 0
  %2622 = vmatprep.subr.bf16.mxu0 0
  %2623 = vmatpush1.bf16.msra.mxu0 0
  %2624 = vmatprep.subr.bf16.mxu0 0
  %2625 = vmatpush1.bf16.msra.mxu0 0
  %2626 = vmatprep.mubr.bf16.mxu0 0
  %2627 = vmatmul.mubr.bf16.gmra.mrb[0].mxu0 %v2592
  %v2628 = vpop.f32.mrb[0].mxu0
  %v2629 = vadd.f32 %v2577, %v2628
  %v2630 = vpop.f32.mrb[0].mxu0
  %v2631 = vpop.f32.mrb[0].mxu0
  %v2632 = vadd.f32 %v2577, %v2631
  %v2633 = vpop.f32.mrb[0].mxu0
  %2634 = vdwg.mxu0
  %2635 = vst [vmem:[%s26] sm:$0xff] %v2629
  %2636 = vst [vmem:[%s26 + $0x8] sm:$0xff] %v2632
  // Predicated region
  $region106: #{bert_classifier_forward.1} parent=0 // pred_check
    _
  $region107: #{bert_classifier_forward.1} parent=0 // pred_check_branch
    %2638 = sbr.rel (0) target = $region109
  $region108: #{bert_classifier_forward.1} parent=0 // pred_region
    _
  $region109: #{bert_classifier_forward.1} parent=0 // pred_fallthru
    _
  // Predicated region
  $region110: #{bert_classifier_forward.1} parent=0 // pred_check
    _
  $region111: #{bert_classifier_forward.1} parent=0 // pred_check_branch
    %2640 = sbr.rel (0) target = $region113
  $region112: #{bert_classifier_forward.1} parent=0 // pred_region
    _
  $region113: #{bert_classifier_forward.1} parent=0 // pred_fallthru
    _

</llo_original>
